<compile_context>
chip_gen: v7x
topology: tpu7x:2x2x1
jax: 0.10.0
libtpu: 0.0.40
codegen_flags: <defaults>
</compile_context>

<pallas_src>
import jax
import jax.numpy as jnp
from jax.experimental import pallas as pl
from jax.experimental.pallas import tpu as pltpu

DIM = 3            # input point dimension
DIM_PAD = 128      # fc_p contraction dim zero-padded for a clean MXU matmul
Z_DIM = 128        # latent z dim (module default)
C_DIM = 128        # conditioning c dim (module default)
HID = 256          # hidden size (module default)
EPS = 1e-5         # BatchNorm1d eps
ACT_DTYPE = jnp.bfloat16
N_PASSES = 7       # fc_p/fc_z, fc_0..fc_4, fc_out


def decoder_kernel(p_ref, z_ref, c_ref,
                   wp_ref, bp_ref,          # fc_p  : (DIM_PAD,H), (1,H)
                   wz_ref, bz_ref,          # fc_z  : (z,H), (1,H)
                   wfc_ref, bfc_ref,        # fc_l window : (1,H,H) bf16, (1,1,H)
                   wgb_ref, bgb_ref,        # packed CBN gamma/beta convs
                   wout_ref, bout_ref,      # fc_out : (1,H) VMEM, (1,1) SMEM
                   out_ref,                 # (B, T_TILE)
                   act_ref, gb_ref, netz_ref,
                   sum_ref, ssq_ref, a_ref, b_ref):
    l = pl.program_id(0)      # layer pass
    t = pl.program_id(1)      # T tile
    f32 = jnp.float32

    n_tiles, B, T_TILE, H = act_ref.shape
    BT_TILE = B * T_TILE
    inv_count = 1.0 / float(B * T_TILE * n_tiles)   # BatchNorm count over full (B,T)
    _, _, dpad = p_ref.shape

    def store_and_accumulate(x):
        # x: (B, T_TILE, H) f32 -- fresh pre-CBN activation of this pass.
        act_ref[t] = x.astype(ACT_DTYPE)
        x2 = x.reshape(BT_TILE, H)
        sum_ref[...] += jnp.sum(x2, axis=0, keepdims=True)
        ssq_ref[...] += jnp.sum(x2 * x2, axis=0, keepdims=True)

    def apply_cbn_relu():
        # fused CBN affine + ReLU on the stored activation of the previous pass
        x = act_ref[t].astype(f32)                               # (B,T_TILE,H)
        return jnp.maximum(a_ref[...][:, None, :] * x + b_ref[...][:, None, :], 0.0)

    # ---- one-time setup: all 6 gamma/beta pairs (one packed matmul) + fc_z ----
    @pl.when(jnp.logical_and(l == 0, t == 0))
    def _setup():
        cvec = c_ref[...].astype(f32)                            # (B, c_dim)
        gb = jnp.dot(cvec, wgb_ref[...], preferred_element_type=f32) + bgb_ref[...]
        for i in range(2 * 6):                                   # [gamma_0..5 | beta_0..5]
            gb_ref[i] = gb[:, i * H:(i + 1) * H]
        zvec = z_ref[...].astype(f32)
        netz_ref[...] = jnp.dot(zvec, wz_ref[...], preferred_element_type=f32) + bz_ref[...]

    # ---- zero the running stats at the first tile of each stats pass ---------
    @pl.when(jnp.logical_and(t == 0, l < 6))
    def _zero_stats():
        sum_ref[...] = jnp.zeros_like(sum_ref)
        ssq_ref[...] = jnp.zeros_like(ssq_ref)

    # ---- pass 0 : net = fc_p(p) + fc_z(z) -------------------------------------
    @pl.when(l == 0)
    def _pass_in():
        pmat = p_ref[...].astype(f32).reshape(BT_TILE, dpad)
        x = jnp.dot(pmat, wp_ref[...], preferred_element_type=f32) + bp_ref[...]
        x = x.reshape(B, T_TILE, H) + netz_ref[...][:, None, :]
        store_and_accumulate(x)

    # ---- passes 1..5 : net = fc_{l-1}(relu(cbn_{l-1}(net))) -------------------
    @pl.when(jnp.logical_and(l >= 1, l <= 5))
    def _pass_mid():
        h = apply_cbn_relu().astype(ACT_DTYPE).reshape(BT_TILE, H)   # bf16 MXU input
        x = jnp.dot(h, wfc_ref[0], preferred_element_type=f32) + bfc_ref[0]
        store_and_accumulate(x.reshape(B, T_TILE, H))

    # ---- finalize batch stats -> per-(B,H) affine for the next pass -----------
    @pl.when(jnp.logical_and(t == n_tiles - 1, l < 6))
    def _finalize_stats():
        mean = sum_ref[...] * inv_count                          # (1,H)
        var = ssq_ref[...] * inv_count - mean * mean             # biased variance
        rstd = jax.lax.rsqrt(var + EPS)
        gamma = gb_ref[l]                                        # (B,H)
        beta = gb_ref[l + 6]
        a = gamma * rstd
        a_ref[...] = a
        b_ref[...] = beta - a * mean

    # ---- pass 6 : out = fc_out(relu(cbn_5(net))) ------------------------------
    @pl.when(l == 6)
    def _pass_out():
        h = apply_cbn_relu()                                     # (B,T_TILE,H) f32
        out = jnp.sum(h * wout_ref[...], axis=-1) + bout_ref[0, 0]
        out_ref[...] = out.astype(out_ref.dtype)                 # lane-dense (B,T_TILE)


@jax.jit
def decoder_forward(p, z, c, params):
    f32 = jnp.float32
    B, T, dim = p.shape
    H = params["wp"].shape[1]
    cd = params["wg"].shape[1]

    t_tile = min(T, 128)
    if T % t_tile != 0:
        # TODO(synk): pad ragged T to a tile multiple and mask the tail.
        raise ValueError("T must be a multiple of the tile size (128) or < 128")
    n_tiles = T // t_tile

    # ---- pack / pad weights into the kernel layout ----------------------------
    p_pad = jnp.zeros((B, T, DIM_PAD), f32).at[:, :, :dim].set(p.astype(f32))
    wp_pad = jnp.zeros((DIM_PAD, H), f32).at[:dim].set(params["wp"])
    wgb = jnp.concatenate(
        [jnp.transpose(params["wg"], (1, 0, 2)).reshape(cd, 6 * H),
         jnp.transpose(params["wb"], (1, 0, 2)).reshape(cd, 6 * H)], axis=1)
    bgb = jnp.concatenate([params["bg"].reshape(1, 6 * H),
                           params["bb"].reshape(1, 6 * H)], axis=1)
    wfc_bf16 = params["wfc"].astype(jnp.bfloat16)     # bf16 MXU weights, f32 acc
    bfc = params["bfc"].reshape(5, 1, H)

    vmem = pltpu.MemorySpace.VMEM
    smem = pltpu.MemorySpace.SMEM
    full_vmem = pl.BlockSpec(memory_space=vmem)

    def fc_idx(l, t):   # clamp pass index onto fc_0..fc_4 weight slots
        return (jnp.maximum(jnp.minimum(l - 1, 4), 0), 0, 0)

    in_specs = [
        pl.BlockSpec((B, t_tile, DIM_PAD),
                     lambda l, t: (0, jnp.where(l == 0, t, 0), 0)),  # p (read on pass 0)
        full_vmem,                                                   # z
        full_vmem,                                                   # c
        full_vmem,                                                   # wp (padded)
        full_vmem,                                                   # bp
        full_vmem,                                                   # wz
        full_vmem,                                                   # bz
        pl.BlockSpec((1, H, H), fc_idx),                             # wfc window (bf16)
        pl.BlockSpec((1, 1, H), fc_idx),                             # bfc window
        full_vmem,                                                   # packed gamma/beta W
        full_vmem,                                                   # packed gamma/beta b
        full_vmem,                                                   # wout
        pl.BlockSpec(memory_space=smem),                             # bout scalar
    ]
    out_specs = pl.BlockSpec((B, t_tile), lambda l, t: (0, t))

    scratch_shapes = [
        pltpu.VMEM((n_tiles, B, t_tile, H), ACT_DTYPE),  # resident activations (bf16)
        pltpu.VMEM((12, B, H), f32),                     # gamma_0..5 | beta_0..5
        pltpu.VMEM((B, H), f32),                         # fc_z(z)
        pltpu.VMEM((1, H), f32),                         # running sum
        pltpu.VMEM((1, H), f32),                         # running sum of squares
        pltpu.VMEM((B, H), f32),                         # CBN affine scale a
        pltpu.VMEM((B, H), f32),                         # CBN affine shift b
    ]

    act_bytes = n_tiles * B * t_tile * H * 2
    tile_f32 = B * t_tile * H * 4
    vmem_limit = int(min(100 * 2**20, max(32 * 2**20, act_bytes + 8 * tile_f32 + 8 * 2**20)))

    grid_spec = pltpu.PrefetchScalarGridSpec(
        num_scalar_prefetch=0,
        grid=(N_PASSES, n_tiles),
        in_specs=in_specs,
        out_specs=out_specs,
        scratch_shapes=scratch_shapes)

    return pl.pallas_call(
        decoder_kernel,
        out_shape=jax.ShapeDtypeStruct((B, T), f32),
        grid_spec=grid_spec,
        compiler_params=pltpu.CompilerParams(
            # both axes carry sequential state (layer chaining / stats accumulation)
            dimension_semantics=("arbitrary", "arbitrary"),
            vmem_limit_bytes=vmem_limit),
    )(p_pad, z.astype(f32), c.astype(f32),
      wp_pad, params["bp"], params["wz"], params["bz"],
      wfc_bf16, bfc, wgb, bgb, params["wout"], params["bout"])


def decoder_reference(p, z, c, params, match_kernel_precision=True):
    """Pure-JAX reference.  With match_kernel_precision=True it mirrors the
    kernel's bf16 storage / bf16 matmul-input casts (f32 accumulation) so the
    comparison validates the restructured algorithm (tiling, single-pass stats,
    fused affine, packed gamma/beta), not float formats."""
    f32 = jnp.float32
    q = ((lambda x: x.astype(jnp.bfloat16).astype(f32))
         if match_kernel_precision else (lambda x: x))

    def cbn_affine(x, i):
        gamma = c @ params["wg"][i] + params["bg"][i]             # (B,H)
        beta = c @ params["wb"][i] + params["bb"][i]
        mean = jnp.mean(x, axis=(0, 1), keepdims=True)
        var = jnp.mean(x * x, axis=(0, 1), keepdims=True) - mean * mean
        a = gamma[:, None, :] * jax.lax.rsqrt(var + EPS)
        return a, beta[:, None, :] - a * mean

    net = jnp.einsum("btd,dh->bth", p, params["wp"]) + params["bp"]
    net = net + (z @ params["wz"] + params["bz"])[:, None, :]
    out = None
    for i in range(6):
        a, b = cbn_affine(net, i)                # stats on the f32 activation
        h = jnp.maximum(a * q(net) + b, 0.0)     # affine applied to the stored (bf16) act
        if i < 5:
            net = jnp.einsum("bth,hk->btk", q(h), q(params["wfc"][i])) + params["bfc"][i]
        else:
            out = jnp.einsum("bth,h->bt", h, params["wout"][0]) + params["bout"][0, 0]
    return out


if __name__ == "__main__":
    B, T = 2, 256

    key = jax.random.PRNGKey(0)
    ks = jax.random.split(key, 16)

    def init(k, shape, scale=0.1):
        return scale * jax.random.normal(k, shape, jnp.float32)

    # Deterministic synthetic parameters (shapes follow the module's __init__).
    params = dict(
        wp=init(ks[0], (DIM, HID)),            # fc_p   Conv1d(dim, H, 1)
        bp=init(ks[1], (1, HID)),
        wz=init(ks[2], (Z_DIM, HID)),          # fc_z   Linear(z_dim, H)
        bz=init(ks[3], (1, HID)),
        wfc=init(ks[4], (5, HID, HID), 0.05),  # fc_0 .. fc_4
        bfc=init(ks[5], (5, HID)),
        wg=init(ks[6], (6, C_DIM, HID)),       # bn_0..bn_5 conv_gamma
        bg=1.0 + init(ks[7], (6, HID), 0.05),
        wb=init(ks[8], (6, C_DIM, HID)),       # bn_0..bn_5 conv_beta
        bb=init(ks[9], (6, HID)),
        wout=init(ks[10], (1, HID)),           # fc_out Conv1d(H, 1, 1)
        bout=init(ks[11], (1, 1)),
    )

    p = jax.random.normal(ks[12], (B, T, DIM), jnp.float32)
    z = jax.random.normal(ks[13], (B, Z_DIM), jnp.float32)
    c = jax.random.normal(ks[14], (B, C_DIM), jnp.float32)

    out = decoder_forward(p, z, c, params)
    jax.block_until_ready(out)
    assert out.shape == (B, T), out.shape

    ref = decoder_reference(p, z, c, params)
    if not bool(jnp.allclose(out, ref, rtol=2e-2, atol=2e-2)):
        raise AssertionError(
            f"kernel/reference mismatch, max abs err = {float(jnp.max(jnp.abs(out - ref)))}")

    print("KERNEL_OK")
</pallas_src>

<mosaic_0001>
module attributes {stable_mosaic.version = 11 : i64} {
  func.func @decoder_kernel(%arg0: i32, %arg1: i32, %arg2: memref<2x128x128xf32, #tpu.memory_space<vmem>>, %arg3: memref<2x128xf32, #tpu.memory_space<vmem>>, %arg4: memref<2x128xf32, #tpu.memory_space<vmem>>, %arg5: memref<128x256xf32, #tpu.memory_space<vmem>>, %arg6: memref<1x256xf32, #tpu.memory_space<vmem>>, %arg7: memref<128x256xf32, #tpu.memory_space<vmem>>, %arg8: memref<1x256xf32, #tpu.memory_space<vmem>>, %arg9: memref<1x256x256xbf16, #tpu.memory_space<vmem>>, %arg10: memref<1x1x256xf32, #tpu.memory_space<vmem>>, %arg11: memref<128x3072xf32, #tpu.memory_space<vmem>>, %arg12: memref<1x3072xf32, #tpu.memory_space<vmem>>, %arg13: memref<1x256xf32, #tpu.memory_space<vmem>>, %arg14: memref<1x1xf32, #tpu.memory_space<smem>>, %arg15: memref<2x128xf32, #tpu.memory_space<vmem>>, %arg16: memref<2x2x128x256xbf16, #tpu.memory_space<vmem>>, %arg17: memref<12x2x256xf32, #tpu.memory_space<vmem>>, %arg18: memref<2x256xf32, #tpu.memory_space<vmem>>, %arg19: memref<1x256xf32, #tpu.memory_space<vmem>>, %arg20: memref<1x256xf32, #tpu.memory_space<vmem>>, %arg21: memref<2x256xf32, #tpu.memory_space<vmem>>, %arg22: memref<2x256xf32, #tpu.memory_space<vmem>>) attributes {dimension_semantics = [#tpu.dimension_semantics<arbitrary>, #tpu.dimension_semantics<arbitrary>], iteration_bounds = array<i64: 7, 2>, scalar_prefetch = 0 : i64, scratch_operands = 7 : i64, tpu.core_type = #tpu.core_type<tc>, window_params = [{transform_indices = @transform_0, window_bounds = array<i64: 2, 128, 128>}, {pipeline_mode = #tpu.pipeline_mode<synchronous>, transform_indices = @transform_1, window_bounds = array<i64: 2, 128>}, {pipeline_mode = #tpu.pipeline_mode<synchronous>, transform_indices = @transform_2, window_bounds = array<i64: 2, 128>}, {pipeline_mode = #tpu.pipeline_mode<synchronous>, transform_indices = @transform_3, window_bounds = array<i64: 128, 256>}, {pipeline_mode = #tpu.pipeline_mode<synchronous>, transform_indices = @transform_4, window_bounds = array<i64: 1, 256>}, {pipeline_mode = #tpu.pipeline_mode<synchronous>, transform_indices = @transform_5, window_bounds = array<i64: 128, 256>}, {pipeline_mode = #tpu.pipeline_mode<synchronous>, transform_indices = @transform_6, window_bounds = array<i64: 1, 256>}, {transform_indices = @transform_7, window_bounds = array<i64: 1, 256, 256>}, {transform_indices = @transform_8, window_bounds = array<i64: 1, 1, 256>}, {pipeline_mode = #tpu.pipeline_mode<synchronous>, transform_indices = @transform_9, window_bounds = array<i64: 128, 3072>}, {pipeline_mode = #tpu.pipeline_mode<synchronous>, transform_indices = @transform_10, window_bounds = array<i64: 1, 3072>}, {pipeline_mode = #tpu.pipeline_mode<synchronous>, transform_indices = @transform_11, window_bounds = array<i64: 1, 256>}, {transform_indices = @transform_12, window_bounds = array<i64: 1, 1>}, {transform_indices = @transform_13, window_bounds = array<i64: 2, 128>}]} {
    %c0_i32 = arith.constant 0 : i32
    %0 = arith.cmpi eq, %arg0, %c0_i32 : i32
    %c0_i32_0 = arith.constant 0 : i32
    %1 = arith.cmpi eq, %arg1, %c0_i32_0 : i32
    %2 = arith.andi %0, %1 : i1
    %3 = arith.extui %2 : i1 to i32
    %c0_i32_1 = arith.constant 0 : i32
    %4 = arith.cmpi ne, %3, %c0_i32_1 : i32
    scf.if %4 {
      %c0 = arith.constant 0 : index
      %c0_12 = arith.constant 0 : index
      %26 = vector.load %arg4[%c0, %c0_12] : memref<2x128xf32, #tpu.memory_space<vmem>>, vector<2x128xf32>
      %c0_13 = arith.constant 0 : index
      %c0_14 = arith.constant 0 : index
      %27 = vector.load %arg11[%c0_13, %c0_14] : memref<128x3072xf32, #tpu.memory_space<vmem>>, vector<128x3072xf32>
      %cst = arith.constant dense<0.000000e+00> : vector<2x3072xf32>
      %28 = tpu.matmul %26, %27, %cst {dimension_numbers = #tpu.dot_dimension_numbers<[1], [0], [0], [1], [0, 0, 1, 1], [], []>} : vector<2x128xf32>, vector<128x3072xf32>, vector<2x3072xf32> -> vector<2x3072xf32>
      %c0_15 = arith.constant 0 : index
      %c0_16 = arith.constant 0 : index
      %29 = vector.load %arg12[%c0_15, %c0_16] : memref<1x3072xf32, #tpu.memory_space<vmem>>, vector<1x3072xf32>
      %30 = vector.broadcast %29 : vector<1x3072xf32> to vector<2x3072xf32>
      %31 = arith.addf %28, %30 : vector<2x3072xf32>
      %32 = vector.extract_strided_slice %31 {offsets = [0, 0], sizes = [2, 256], strides = [1, 1]} : vector<2x3072xf32> to vector<2x256xf32>
      %c0_17 = arith.constant 0 : index
      %c0_18 = arith.constant 0 : index
      %c0_19 = arith.constant 0 : index
      %33 = vector.load %arg17[%c0_17, %c0_18, %c0_19] : memref<12x2x256xf32, #tpu.memory_space<vmem>>, vector<1x2x256xf32>
      %34 = vector.shape_cast %33 : vector<1x2x256xf32> to vector<2x256xf32>
      %35 = vector.shape_cast %32 : vector<2x256xf32> to vector<1x2x256xf32>
      tpu.vector_store %arg17[%c0_17, %c0_18, %c0_19], %35 {strides = array<i32>} : memref<12x2x256xf32, #tpu.memory_space<vmem>>, vector<1x2x256xf32>,
      %36 = vector.extract_strided_slice %31 {offsets = [0, 256], sizes = [2, 256], strides = [1, 1]} : vector<2x3072xf32> to vector<2x256xf32>
      %c1 = arith.constant 1 : index
      %c0_20 = arith.constant 0 : index
      %c0_21 = arith.constant 0 : index
      %37 = vector.load %arg17[%c1, %c0_20, %c0_21] : memref<12x2x256xf32, #tpu.memory_space<vmem>>, vector<1x2x256xf32>
      %38 = vector.shape_cast %37 : vector<1x2x256xf32> to vector<2x256xf32>
      %39 = vector.shape_cast %36 : vector<2x256xf32> to vector<1x2x256xf32>
      tpu.vector_store %arg17[%c1, %c0_20, %c0_21], %39 {strides = array<i32>} : memref<12x2x256xf32, #tpu.memory_space<vmem>>, vector<1x2x256xf32>,
      %40 = vector.extract_strided_slice %31 {offsets = [0, 512], sizes = [2, 256], strides = [1, 1]} : vector<2x3072xf32> to vector<2x256xf32>
      %c2 = arith.constant 2 : index
      %c0_22 = arith.constant 0 : index
      %c0_23 = arith.constant 0 : index
      %41 = vector.load %arg17[%c2, %c0_22, %c0_23] : memref<12x2x256xf32, #tpu.memory_space<vmem>>, vector<1x2x256xf32>
      %42 = vector.shape_cast %41 : vector<1x2x256xf32> to vector<2x256xf32>
      %43 = vector.shape_cast %40 : vector<2x256xf32> to vector<1x2x256xf32>
      tpu.vector_store %arg17[%c2, %c0_22, %c0_23], %43 {strides = array<i32>} : memref<12x2x256xf32, #tpu.memory_space<vmem>>, vector<1x2x256xf32>,
      %44 = vector.extract_strided_slice %31 {offsets = [0, 768], sizes = [2, 256], strides = [1, 1]} : vector<2x3072xf32> to vector<2x256xf32>
      %c3 = arith.constant 3 : index
      %c0_24 = arith.constant 0 : index
      %c0_25 = arith.constant 0 : index
      %45 = vector.load %arg17[%c3, %c0_24, %c0_25] : memref<12x2x256xf32, #tpu.memory_space<vmem>>, vector<1x2x256xf32>
      %46 = vector.shape_cast %45 : vector<1x2x256xf32> to vector<2x256xf32>
      %47 = vector.shape_cast %44 : vector<2x256xf32> to vector<1x2x256xf32>
      tpu.vector_store %arg17[%c3, %c0_24, %c0_25], %47 {strides = array<i32>} : memref<12x2x256xf32, #tpu.memory_space<vmem>>, vector<1x2x256xf32>,
      %48 = vector.extract_strided_slice %31 {offsets = [0, 1024], sizes = [2, 256], strides = [1, 1]} : vector<2x3072xf32> to vector<2x256xf32>
      %c4 = arith.constant 4 : index
      %c0_26 = arith.constant 0 : index
      %c0_27 = arith.constant 0 : index
      %49 = vector.load %arg17[%c4, %c0_26, %c0_27] : memref<12x2x256xf32, #tpu.memory_space<vmem>>, vector<1x2x256xf32>
      %50 = vector.shape_cast %49 : vector<1x2x256xf32> to vector<2x256xf32>
      %51 = vector.shape_cast %48 : vector<2x256xf32> to vector<1x2x256xf32>
      tpu.vector_store %arg17[%c4, %c0_26, %c0_27], %51 {strides = array<i32>} : memref<12x2x256xf32, #tpu.memory_space<vmem>>, vector<1x2x256xf32>,
      %52 = vector.extract_strided_slice %31 {offsets = [0, 1280], sizes = [2, 256], strides = [1, 1]} : vector<2x3072xf32> to vector<2x256xf32>
      %c5 = arith.constant 5 : index
      %c0_28 = arith.constant 0 : index
      %c0_29 = arith.constant 0 : index
      %53 = vector.load %arg17[%c5, %c0_28, %c0_29] : memref<12x2x256xf32, #tpu.memory_space<vmem>>, vector<1x2x256xf32>
      %54 = vector.shape_cast %53 : vector<1x2x256xf32> to vector<2x256xf32>
      %55 = vector.shape_cast %52 : vector<2x256xf32> to vector<1x2x256xf32>
      tpu.vector_store %arg17[%c5, %c0_28, %c0_29], %55 {strides = array<i32>} : memref<12x2x256xf32, #tpu.memory_space<vmem>>, vector<1x2x256xf32>,
      %56 = vector.extract_strided_slice %31 {offsets = [0, 1536], sizes = [2, 256], strides = [1, 1]} : vector<2x3072xf32> to vector<2x256xf32>
      %c6 = arith.constant 6 : index
      %c0_30 = arith.constant 0 : index
      %c0_31 = arith.constant 0 : index
      %57 = vector.load %arg17[%c6, %c0_30, %c0_31] : memref<12x2x256xf32, #tpu.memory_space<vmem>>, vector<1x2x256xf32>
      %58 = vector.shape_cast %57 : vector<1x2x256xf32> to vector<2x256xf32>
      %59 = vector.shape_cast %56 : vector<2x256xf32> to vector<1x2x256xf32>
      tpu.vector_store %arg17[%c6, %c0_30, %c0_31], %59 {strides = array<i32>} : memref<12x2x256xf32, #tpu.memory_space<vmem>>, vector<1x2x256xf32>,
      %60 = vector.extract_strided_slice %31 {offsets = [0, 1792], sizes = [2, 256], strides = [1, 1]} : vector<2x3072xf32> to vector<2x256xf32>
      %c7 = arith.constant 7 : index
      %c0_32 = arith.constant 0 : index
      %c0_33 = arith.constant 0 : index
      %61 = vector.load %arg17[%c7, %c0_32, %c0_33] : memref<12x2x256xf32, #tpu.memory_space<vmem>>, vector<1x2x256xf32>
      %62 = vector.shape_cast %61 : vector<1x2x256xf32> to vector<2x256xf32>
      %63 = vector.shape_cast %60 : vector<2x256xf32> to vector<1x2x256xf32>
      tpu.vector_store %arg17[%c7, %c0_32, %c0_33], %63 {strides = array<i32>} : memref<12x2x256xf32, #tpu.memory_space<vmem>>, vector<1x2x256xf32>,
      %64 = vector.extract_strided_slice %31 {offsets = [0, 2048], sizes = [2, 256], strides = [1, 1]} : vector<2x3072xf32> to vector<2x256xf32>
      %c8 = arith.constant 8 : index
      %c0_34 = arith.constant 0 : index
      %c0_35 = arith.constant 0 : index
      %65 = vector.load %arg17[%c8, %c0_34, %c0_35] : memref<12x2x256xf32, #tpu.memory_space<vmem>>, vector<1x2x256xf32>
      %66 = vector.shape_cast %65 : vector<1x2x256xf32> to vector<2x256xf32>
      %67 = vector.shape_cast %64 : vector<2x256xf32> to vector<1x2x256xf32>
      tpu.vector_store %arg17[%c8, %c0_34, %c0_35], %67 {strides = array<i32>} : memref<12x2x256xf32, #tpu.memory_space<vmem>>, vector<1x2x256xf32>,
      %68 = vector.extract_strided_slice %31 {offsets = [0, 2304], sizes = [2, 256], strides = [1, 1]} : vector<2x3072xf32> to vector<2x256xf32>
      %c9 = arith.constant 9 : index
      %c0_36 = arith.constant 0 : index
      %c0_37 = arith.constant 0 : index
      %69 = vector.load %arg17[%c9, %c0_36, %c0_37] : memref<12x2x256xf32, #tpu.memory_space<vmem>>, vector<1x2x256xf32>
      %70 = vector.shape_cast %69 : vector<1x2x256xf32> to vector<2x256xf32>
      %71 = vector.shape_cast %68 : vector<2x256xf32> to vector<1x2x256xf32>
      tpu.vector_store %arg17[%c9, %c0_36, %c0_37], %71 {strides = array<i32>} : memref<12x2x256xf32, #tpu.memory_space<vmem>>, vector<1x2x256xf32>,
      %72 = vector.extract_strided_slice %31 {offsets = [0, 2560], sizes = [2, 256], strides = [1, 1]} : vector<2x3072xf32> to vector<2x256xf32>
      %c10 = arith.constant 10 : index
      %c0_38 = arith.constant 0 : index
      %c0_39 = arith.constant 0 : index
      %73 = vector.load %arg17[%c10, %c0_38, %c0_39] : memref<12x2x256xf32, #tpu.memory_space<vmem>>, vector<1x2x256xf32>
      %74 = vector.shape_cast %73 : vector<1x2x256xf32> to vector<2x256xf32>
      %75 = vector.shape_cast %72 : vector<2x256xf32> to vector<1x2x256xf32>
      tpu.vector_store %arg17[%c10, %c0_38, %c0_39], %75 {strides = array<i32>} : memref<12x2x256xf32, #tpu.memory_space<vmem>>, vector<1x2x256xf32>,
      %76 = vector.extract_strided_slice %31 {offsets = [0, 2816], sizes = [2, 256], strides = [1, 1]} : vector<2x3072xf32> to vector<2x256xf32>
      %c11 = arith.constant 11 : index
      %c0_40 = arith.constant 0 : index
      %c0_41 = arith.constant 0 : index
      %77 = vector.load %arg17[%c11, %c0_40, %c0_41] : memref<12x2x256xf32, #tpu.memory_space<vmem>>, vector<1x2x256xf32>
      %78 = vector.shape_cast %77 : vector<1x2x256xf32> to vector<2x256xf32>
      %79 = vector.shape_cast %76 : vector<2x256xf32> to vector<1x2x256xf32>
      tpu.vector_store %arg17[%c11, %c0_40, %c0_41], %79 {strides = array<i32>} : memref<12x2x256xf32, #tpu.memory_space<vmem>>, vector<1x2x256xf32>,
      %c0_42 = arith.constant 0 : index
      %c0_43 = arith.constant 0 : index
      %80 = vector.load %arg3[%c0_42, %c0_43] : memref<2x128xf32, #tpu.memory_space<vmem>>, vector<2x128xf32>
      %c0_44 = arith.constant 0 : index
      %c0_45 = arith.constant 0 : index
      %81 = vector.load %arg7[%c0_44, %c0_45] : memref<128x256xf32, #tpu.memory_space<vmem>>, vector<128x256xf32>
      %cst_46 = arith.constant dense<0.000000e+00> : vector<2x256xf32>
      %82 = tpu.matmul %80, %81, %cst_46 {dimension_numbers = #tpu.dot_dimension_numbers<[1], [0], [0], [1], [0, 0, 1, 1], [], []>} : vector<2x128xf32>, vector<128x256xf32>, vector<2x256xf32> -> vector<2x256xf32>
      %c0_47 = arith.constant 0 : index
      %c0_48 = arith.constant 0 : index
      %83 = vector.load %arg8[%c0_47, %c0_48] : memref<1x256xf32, #tpu.memory_space<vmem>>, vector<1x256xf32>
      %84 = vector.broadcast %83 : vector<1x256xf32> to vector<2x256xf32>
      %85 = arith.addf %82, %84 : vector<2x256xf32>
      %c0_49 = arith.constant 0 : index
      %c0_50 = arith.constant 0 : index
      %86 = vector.load %arg18[%c0_49, %c0_50] : memref<2x256xf32, #tpu.memory_space<vmem>>, vector<2x256xf32>
      tpu.vector_store %arg18[%c0_49, %c0_50], %85 {strides = array<i32>} : memref<2x256xf32, #tpu.memory_space<vmem>>, vector<2x256xf32>,
    } else {
    }
    %c0_i32_2 = arith.constant 0 : i32
    %5 = arith.cmpi eq, %arg1, %c0_i32_2 : i32
    %c6_i32 = arith.constant 6 : i32
    %6 = arith.cmpi slt, %arg0, %c6_i32 : i32
    %7 = arith.andi %5, %6 : i1
    %8 = arith.extui %7 : i1 to i32
    %c0_i32_3 = arith.constant 0 : i32
    %9 = arith.cmpi ne, %8, %c0_i32_3 : i32
    scf.if %9 {
      %cst = arith.constant 0.000000e+00 : f32
      %26 = vector.broadcast %cst : f32 to vector<1x256xf32>
      %c0 = arith.constant 0 : index
      %c0_12 = arith.constant 0 : index
      %27 = vector.load %arg19[%c0, %c0_12] : memref<1x256xf32, #tpu.memory_space<vmem>>, vector<1x256xf32>
      tpu.vector_store %arg19[%c0, %c0_12], %26 {strides = array<i32>} : memref<1x256xf32, #tpu.memory_space<vmem>>, vector<1x256xf32>,
      %cst_13 = arith.constant 0.000000e+00 : f32
      %28 = vector.broadcast %cst_13 : f32 to vector<1x256xf32>
      %c0_14 = arith.constant 0 : index
      %c0_15 = arith.constant 0 : index
      %29 = vector.load %arg20[%c0_14, %c0_15] : memref<1x256xf32, #tpu.memory_space<vmem>>, vector<1x256xf32>
      tpu.vector_store %arg20[%c0_14, %c0_15], %28 {strides = array<i32>} : memref<1x256xf32, #tpu.memory_space<vmem>>, vector<1x256xf32>,
    } else {
    }
    %c0_i32_4 = arith.constant 0 : i32
    %10 = arith.cmpi eq, %arg0, %c0_i32_4 : i32
    %11 = arith.extui %10 : i1 to i32
    %c0_i32_5 = arith.constant 0 : i32
    %12 = arith.cmpi ne, %11, %c0_i32_5 : i32
    scf.if %12 {
      %c0 = arith.constant 0 : index
      %c0_12 = arith.constant 0 : index
      %c0_13 = arith.constant 0 : index
      %26 = vector.load %arg2[%c0, %c0_12, %c0_13] : memref<2x128x128xf32, #tpu.memory_space<vmem>>, vector<2x128x128xf32>
      %27 = vector.shape_cast %26 : vector<2x128x128xf32> to vector<256x128xf32>
      %c0_14 = arith.constant 0 : index
      %c0_15 = arith.constant 0 : index
      %28 = vector.load %arg5[%c0_14, %c0_15] : memref<128x256xf32, #tpu.memory_space<vmem>>, vector<128x256xf32>
      %cst = arith.constant dense<0.000000e+00> : vector<256x256xf32>
      %29 = tpu.matmul %27, %28, %cst {dimension_numbers = #tpu.dot_dimension_numbers<[1], [0], [0], [1], [0, 0, 1, 1], [], []>} : vector<256x128xf32>, vector<128x256xf32>, vector<256x256xf32> -> vector<256x256xf32>
      %c0_16 = arith.constant 0 : index
      %c0_17 = arith.constant 0 : index
      %30 = vector.load %arg6[%c0_16, %c0_17] : memref<1x256xf32, #tpu.memory_space<vmem>>, vector<1x256xf32>
      %31 = vector.broadcast %30 : vector<1x256xf32> to vector<256x256xf32>
      %32 = arith.addf %29, %31 : vector<256x256xf32>
      %33 = vector.shape_cast %32 : vector<256x256xf32> to vector<2x128x256xf32>
      %c0_18 = arith.constant 0 : index
      %c0_19 = arith.constant 0 : index
      %34 = vector.load %arg18[%c0_18, %c0_19] : memref<2x256xf32, #tpu.memory_space<vmem>>, vector<2x256xf32>
      %35 = vector.shape_cast %34 : vector<2x256xf32> to vector<2x1x256xf32>
      %36 = vector.broadcast %35 : vector<2x1x256xf32> to vector<2x128x256xf32>
      %37 = arith.addf %33, %36 : vector<2x128x256xf32>
      %38 = arith.truncf %37 : vector<2x128x256xf32> to vector<2x128x256xbf16>
      %39 = arith.index_cast %arg1 : i32 to index
      %c0_20 = arith.constant 0 : index
      %c0_21 = arith.constant 0 : index
      %c0_22 = arith.constant 0 : index
      %40 = vector.load %arg16[%39, %c0_20, %c0_21, %c0_22] : memref<2x2x128x256xbf16, #tpu.memory_space<vmem>>, vector<1x2x128x256xbf16>
      %41 = vector.shape_cast %40 : vector<1x2x128x256xbf16> to vector<2x128x256xbf16>
      %42 = vector.shape_cast %38 : vector<2x128x256xbf16> to vector<1x2x128x256xbf16>
      tpu.vector_store %arg16[%39, %c0_20, %c0_21, %c0_22], %42 {strides = array<i32>} : memref<2x2x128x256xbf16, #tpu.memory_space<vmem>>, vector<1x2x128x256xbf16>,
      %43 = vector.shape_cast %37 : vector<2x128x256xf32> to vector<256x256xf32>
      %c0_23 = arith.constant 0 : index
      %c0_24 = arith.constant 0 : index
      %44 = vector.load %arg19[%c0_23, %c0_24] : memref<1x256xf32, #tpu.memory_space<vmem>>, vector<1x256xf32>
      %cst_25 = arith.constant dense<0.000000e+00> : vector<256xf32>
      %45 = vector.multi_reduction <add>, %43, %cst_25 [0] : vector<256x256xf32> to vector<256xf32>
      %46 = vector.shape_cast %45 : vector<256xf32> to vector<1x256xf32>
      %47 = arith.addf %44, %46 : vector<1x256xf32>
      %c0_26 = arith.constant 0 : index
      %c0_27 = arith.constant 0 : index
      %48 = vector.load %arg19[%c0_26, %c0_27] : memref<1x256xf32, #tpu.memory_space<vmem>>, vector<1x256xf32>
      tpu.vector_store %arg19[%c0_26, %c0_27], %47 {strides = array<i32>} : memref<1x256xf32, #tpu.memory_space<vmem>>, vector<1x256xf32>,
      %c0_28 = arith.constant 0 : index
      %c0_29 = arith.constant 0 : index
      %49 = vector.load %arg20[%c0_28, %c0_29] : memref<1x256xf32, #tpu.memory_space<vmem>>, vector<1x256xf32>
      %50 = arith.mulf %43, %43 : vector<256x256xf32>
      %cst_30 = arith.constant dense<0.000000e+00> : vector<256xf32>
      %51 = vector.multi_reduction <add>, %50, %cst_30 [0] : vector<256x256xf32> to vector<256xf32>
      %52 = vector.shape_cast %51 : vector<256xf32> to vector<1x256xf32>
      %53 = arith.addf %49, %52 : vector<1x256xf32>
      %c0_31 = arith.constant 0 : index
      %c0_32 = arith.constant 0 : index
      %54 = vector.load %arg20[%c0_31, %c0_32] : memref<1x256xf32, #tpu.memory_space<vmem>>, vector<1x256xf32>
      tpu.vector_store %arg20[%c0_31, %c0_32], %53 {strides = array<i32>} : memref<1x256xf32, #tpu.memory_space<vmem>>, vector<1x256xf32>,
    } else {
    }
    %c1_i32 = arith.constant 1 : i32
    %13 = arith.cmpi sge, %arg0, %c1_i32 : i32
    %c5_i32 = arith.constant 5 : i32
    %14 = arith.cmpi sle, %arg0, %c5_i32 : i32
    %15 = arith.andi %13, %14 : i1
    %16 = arith.extui %15 : i1 to i32
    %c0_i32_6 = arith.constant 0 : i32
    %17 = arith.cmpi ne, %16, %c0_i32_6 : i32
    scf.if %17 {
      %26 = arith.index_cast %arg1 : i32 to index
      %c0 = arith.constant 0 : index
      %c0_12 = arith.constant 0 : index
      %c0_13 = arith.constant 0 : index
      %27 = vector.load %arg16[%26, %c0, %c0_12, %c0_13] : memref<2x2x128x256xbf16, #tpu.memory_space<vmem>>, vector<1x2x128x256xbf16>
      %28 = vector.shape_cast %27 : vector<1x2x128x256xbf16> to vector<2x128x256xbf16>
      %29 = arith.extf %28 : vector<2x128x256xbf16> to vector<2x128x256xf32>
      %c0_14 = arith.constant 0 : index
      %c0_15 = arith.constant 0 : index
      %30 = vector.load %arg21[%c0_14, %c0_15] : memref<2x256xf32, #tpu.memory_space<vmem>>, vector<2x256xf32>
      %31 = vector.shape_cast %30 : vector<2x256xf32> to vector<2x1x256xf32>
      %32 = vector.broadcast %31 : vector<2x1x256xf32> to vector<2x128x256xf32>
      %33 = arith.mulf %32, %29 : vector<2x128x256xf32>
      %c0_16 = arith.constant 0 : index
      %c0_17 = arith.constant 0 : index
      %34 = vector.load %arg22[%c0_16, %c0_17] : memref<2x256xf32, #tpu.memory_space<vmem>>, vector<2x256xf32>
      %35 = vector.shape_cast %34 : vector<2x256xf32> to vector<2x1x256xf32>
      %36 = vector.broadcast %35 : vector<2x1x256xf32> to vector<2x128x256xf32>
      %37 = arith.addf %33, %36 : vector<2x128x256xf32>
      %cst = arith.constant 0.000000e+00 : f32
      %38 = vector.broadcast %cst : f32 to vector<2x128x256xf32>
      %39 = arith.maximumf %37, %38 : vector<2x128x256xf32>
      %40 = arith.truncf %39 : vector<2x128x256xf32> to vector<2x128x256xbf16>
      %41 = vector.shape_cast %40 : vector<2x128x256xbf16> to vector<256x256xbf16>
      %c0_18 = arith.constant 0 : index
      %c0_19 = arith.constant 0 : index
      %c0_20 = arith.constant 0 : index
      %42 = vector.load %arg9[%c0_18, %c0_19, %c0_20] : memref<1x256x256xbf16, #tpu.memory_space<vmem>>, vector<1x256x256xbf16>
      %43 = vector.shape_cast %42 : vector<1x256x256xbf16> to vector<256x256xbf16>
      %cst_21 = arith.constant dense<0.000000e+00> : vector<256x256xf32>
      %44 = tpu.matmul %41, %43, %cst_21 {dimension_numbers = #tpu.dot_dimension_numbers<[1], [0], [0], [1], [0, 0, 1, 1], [], []>} : vector<256x256xbf16>, vector<256x256xbf16>, vector<256x256xf32> -> vector<256x256xf32>
      %c0_22 = arith.constant 0 : index
      %c0_23 = arith.constant 0 : index
      %c0_24 = arith.constant 0 : index
      %45 = vector.load %arg10[%c0_22, %c0_23, %c0_24] : memref<1x1x256xf32, #tpu.memory_space<vmem>>, vector<1x1x256xf32>
      %46 = vector.shape_cast %45 : vector<1x1x256xf32> to vector<1x256xf32>
      %47 = vector.broadcast %46 : vector<1x256xf32> to vector<256x256xf32>
      %48 = arith.addf %44, %47 : vector<256x256xf32>
      %49 = vector.shape_cast %48 : vector<256x256xf32> to vector<2x128x256xf32>
      %50 = arith.truncf %49 : vector<2x128x256xf32> to vector<2x128x256xbf16>
      %51 = arith.index_cast %arg1 : i32 to index
      %c0_25 = arith.constant 0 : index
      %c0_26 = arith.constant 0 : index
      %c0_27 = arith.constant 0 : index
      %52 = vector.load %arg16[%51, %c0_25, %c0_26, %c0_27] : memref<2x2x128x256xbf16, #tpu.memory_space<vmem>>, vector<1x2x128x256xbf16>
      %53 = vector.shape_cast %52 : vector<1x2x128x256xbf16> to vector<2x128x256xbf16>
      %54 = vector.shape_cast %50 : vector<2x128x256xbf16> to vector<1x2x128x256xbf16>
      tpu.vector_store %arg16[%51, %c0_25, %c0_26, %c0_27], %54 {strides = array<i32>} : memref<2x2x128x256xbf16, #tpu.memory_space<vmem>>, vector<1x2x128x256xbf16>,
      %55 = vector.shape_cast %49 : vector<2x128x256xf32> to vector<256x256xf32>
      %c0_28 = arith.constant 0 : index
      %c0_29 = arith.constant 0 : index
      %56 = vector.load %arg19[%c0_28, %c0_29] : memref<1x256xf32, #tpu.memory_space<vmem>>, vector<1x256xf32>
      %cst_30 = arith.constant dense<0.000000e+00> : vector<256xf32>
      %57 = vector.multi_reduction <add>, %55, %cst_30 [0] : vector<256x256xf32> to vector<256xf32>
      %58 = vector.shape_cast %57 : vector<256xf32> to vector<1x256xf32>
      %59 = arith.addf %56, %58 : vector<1x256xf32>
      %c0_31 = arith.constant 0 : index
      %c0_32 = arith.constant 0 : index
      %60 = vector.load %arg19[%c0_31, %c0_32] : memref<1x256xf32, #tpu.memory_space<vmem>>, vector<1x256xf32>
      tpu.vector_store %arg19[%c0_31, %c0_32], %59 {strides = array<i32>} : memref<1x256xf32, #tpu.memory_space<vmem>>, vector<1x256xf32>,
      %c0_33 = arith.constant 0 : index
      %c0_34 = arith.constant 0 : index
      %61 = vector.load %arg20[%c0_33, %c0_34] : memref<1x256xf32, #tpu.memory_space<vmem>>, vector<1x256xf32>
      %62 = arith.mulf %55, %55 : vector<256x256xf32>
      %cst_35 = arith.constant dense<0.000000e+00> : vector<256xf32>
      %63 = vector.multi_reduction <add>, %62, %cst_35 [0] : vector<256x256xf32> to vector<256xf32>
      %64 = vector.shape_cast %63 : vector<256xf32> to vector<1x256xf32>
      %65 = arith.addf %61, %64 : vector<1x256xf32>
      %c0_36 = arith.constant 0 : index
      %c0_37 = arith.constant 0 : index
      %66 = vector.load %arg20[%c0_36, %c0_37] : memref<1x256xf32, #tpu.memory_space<vmem>>, vector<1x256xf32>
      tpu.vector_store %arg20[%c0_36, %c0_37], %65 {strides = array<i32>} : memref<1x256xf32, #tpu.memory_space<vmem>>, vector<1x256xf32>,
    } else {
    }
    %c1_i32_7 = arith.constant 1 : i32
    %18 = arith.cmpi eq, %arg1, %c1_i32_7 : i32
    %c6_i32_8 = arith.constant 6 : i32
    %19 = arith.cmpi slt, %arg0, %c6_i32_8 : i32
    %20 = arith.andi %18, %19 : i1
    %21 = arith.extui %20 : i1 to i32
    %c0_i32_9 = arith.constant 0 : i32
    %22 = arith.cmpi ne, %21, %c0_i32_9 : i32
    scf.if %22 {
      %c0 = arith.constant 0 : index
      %c0_12 = arith.constant 0 : index
      %26 = vector.load %arg19[%c0, %c0_12] : memref<1x256xf32, #tpu.memory_space<vmem>>, vector<1x256xf32>
      %cst = arith.constant 0.001953125 : f32
      %27 = vector.broadcast %cst : f32 to vector<1x256xf32>
      %28 = arith.mulf %26, %27 : vector<1x256xf32>
      %c0_13 = arith.constant 0 : index
      %c0_14 = arith.constant 0 : index
      %29 = vector.load %arg20[%c0_13, %c0_14] : memref<1x256xf32, #tpu.memory_space<vmem>>, vector<1x256xf32>
      %cst_15 = arith.constant 0.001953125 : f32
      %30 = vector.broadcast %cst_15 : f32 to vector<1x256xf32>
      %31 = arith.mulf %29, %30 : vector<1x256xf32>
      %32 = arith.mulf %28, %28 : vector<1x256xf32>
      %33 = arith.subf %31, %32 : vector<1x256xf32>
      %cst_16 = arith.constant 9.99999974E-6 : f32
      %34 = vector.broadcast %cst_16 : f32 to vector<1x256xf32>
      %35 = arith.addf %33, %34 : vector<1x256xf32>
      %36 = math.rsqrt %35 : vector<1x256xf32>
      %37 = arith.index_cast %arg0 : i32 to index
      %c0_17 = arith.constant 0 : index
      %c0_18 = arith.constant 0 : index
      %38 = vector.load %arg17[%37, %c0_17, %c0_18] : memref<12x2x256xf32, #tpu.memory_space<vmem>>, vector<1x2x256xf32>
      %39 = vector.shape_cast %38 : vector<1x2x256xf32> to vector<2x256xf32>
      %c6_i32_19 = arith.constant 6 : i32
      %40 = arith.addi %arg0, %c6_i32_19 : i32
      %41 = arith.index_cast %40 : i32 to index
      %c0_20 = arith.constant 0 : index
      %c0_21 = arith.constant 0 : index
      %42 = vector.load %arg17[%41, %c0_20, %c0_21] : memref<12x2x256xf32, #tpu.memory_space<vmem>>, vector<1x2x256xf32>
      %43 = vector.shape_cast %42 : vector<1x2x256xf32> to vector<2x256xf32>
      %44 = vector.broadcast %36 : vector<1x256xf32> to vector<2x256xf32>
      %45 = arith.mulf %39, %44 : vector<2x256xf32>
      %c0_22 = arith.constant 0 : index
      %c0_23 = arith.constant 0 : index
      %46 = vector.load %arg21[%c0_22, %c0_23] : memref<2x256xf32, #tpu.memory_space<vmem>>, vector<2x256xf32>
      tpu.vector_store %arg21[%c0_22, %c0_23], %45 {strides = array<i32>} : memref<2x256xf32, #tpu.memory_space<vmem>>, vector<2x256xf32>,
      %47 = vector.broadcast %28 : vector<1x256xf32> to vector<2x256xf32>
      %48 = arith.mulf %45, %47 : vector<2x256xf32>
      %49 = arith.subf %43, %48 : vector<2x256xf32>
      %c0_24 = arith.constant 0 : index
      %c0_25 = arith.constant 0 : index
      %50 = vector.load %arg22[%c0_24, %c0_25] : memref<2x256xf32, #tpu.memory_space<vmem>>, vector<2x256xf32>
      tpu.vector_store %arg22[%c0_24, %c0_25], %49 {strides = array<i32>} : memref<2x256xf32, #tpu.memory_space<vmem>>, vector<2x256xf32>,
    } else {
    }
    %c6_i32_10 = arith.constant 6 : i32
    %23 = arith.cmpi eq, %arg0, %c6_i32_10 : i32
    %24 = arith.extui %23 : i1 to i32
    %c0_i32_11 = arith.constant 0 : i32
    %25 = arith.cmpi ne, %24, %c0_i32_11 : i32
    scf.if %25 {
      %26 = arith.index_cast %arg1 : i32 to index
      %c0 = arith.constant 0 : index
      %c0_12 = arith.constant 0 : index
      %c0_13 = arith.constant 0 : index
      %27 = vector.load %arg16[%26, %c0, %c0_12, %c0_13] : memref<2x2x128x256xbf16, #tpu.memory_space<vmem>>, vector<1x2x128x256xbf16>
      %28 = vector.shape_cast %27 : vector<1x2x128x256xbf16> to vector<2x128x256xbf16>
      %29 = arith.extf %28 : vector<2x128x256xbf16> to vector<2x128x256xf32>
      %c0_14 = arith.constant 0 : index
      %c0_15 = arith.constant 0 : index
      %30 = vector.load %arg21[%c0_14, %c0_15] : memref<2x256xf32, #tpu.memory_space<vmem>>, vector<2x256xf32>
      %31 = vector.shape_cast %30 : vector<2x256xf32> to vector<2x1x256xf32>
      %32 = vector.broadcast %31 : vector<2x1x256xf32> to vector<2x128x256xf32>
      %33 = arith.mulf %32, %29 : vector<2x128x256xf32>
      %c0_16 = arith.constant 0 : index
      %c0_17 = arith.constant 0 : index
      %34 = vector.load %arg22[%c0_16, %c0_17] : memref<2x256xf32, #tpu.memory_space<vmem>>, vector<2x256xf32>
      %35 = vector.shape_cast %34 : vector<2x256xf32> to vector<2x1x256xf32>
      %36 = vector.broadcast %35 : vector<2x1x256xf32> to vector<2x128x256xf32>
      %37 = arith.addf %33, %36 : vector<2x128x256xf32>
      %cst = arith.constant 0.000000e+00 : f32
      %38 = vector.broadcast %cst : f32 to vector<2x128x256xf32>
      %39 = arith.maximumf %37, %38 : vector<2x128x256xf32>
      %c0_18 = arith.constant 0 : index
      %c0_19 = arith.constant 0 : index
      %40 = vector.load %arg13[%c0_18, %c0_19] : memref<1x256xf32, #tpu.memory_space<vmem>>, vector<1x256xf32>
      %41 = vector.shape_cast %40 : vector<1x256xf32> to vector<1x1x256xf32>
      %42 = vector.broadcast %41 : vector<1x1x256xf32> to vector<2x128x256xf32>
      %43 = arith.mulf %39, %42 : vector<2x128x256xf32>
      %cst_20 = arith.constant dense<0.000000e+00> : vector<2x128xf32>
      %44 = vector.multi_reduction <add>, %43, %cst_20 [2] : vector<2x128x256xf32> to vector<2x128xf32>
      %c0_21 = arith.constant 0 : index
      %c0_22 = arith.constant 0 : index
      %45 = memref.load %arg14[%c0_21, %c0_22] : memref<1x1xf32, #tpu.memory_space<smem>>
      %46 = vector.broadcast %45 : f32 to vector<2x128xf32>
      %47 = arith.addf %44, %46 : vector<2x128xf32>
      %c0_23 = arith.constant 0 : index
      %c0_24 = arith.constant 0 : index
      %48 = vector.load %arg15[%c0_23, %c0_24] : memref<2x128xf32, #tpu.memory_space<vmem>>, vector<2x128xf32>
      tpu.vector_store %arg15[%c0_23, %c0_24], %47 {strides = array<i32>} : memref<2x128xf32, #tpu.memory_space<vmem>>, vector<2x128xf32>,
    } else {
    }
    return
  }
  func.func @transform_0(%arg0: i32, %arg1: i32) -> (i32, i32, i32) {
    %c0_i32 = arith.constant 0 : i32
    %0 = arith.cmpi eq, %arg0, %c0_i32 : i32
    %c0_i32_0 = arith.constant 0 : i32
    %1 = arith.select %0, %arg1, %c0_i32_0 : i32
    %c0_i32_1 = arith.constant 0 : i32
    %c0_i32_2 = arith.constant 0 : i32
    %c0_i32_3 = arith.constant 0 : i32
    return %c0_i32_1, %1, %c0_i32_2 : i32, i32, i32
  }
  func.func @transform_1(%arg0: i32, %arg1: i32) -> (i32, i32) {
    %c0_i32 = arith.constant 0 : i32
    %c0_i32_0 = arith.constant 0 : i32
    %c0_i32_1 = arith.constant 0 : i32
    return %c0_i32, %c0_i32_0 : i32, i32
  }
  func.func @transform_2(%arg0: i32, %arg1: i32) -> (i32, i32) {
    %c0_i32 = arith.constant 0 : i32
    %c0_i32_0 = arith.constant 0 : i32
    %c0_i32_1 = arith.constant 0 : i32
    return %c0_i32, %c0_i32_0 : i32, i32
  }
  func.func @transform_3(%arg0: i32, %arg1: i32) -> (i32, i32) {
    %c0_i32 = arith.constant 0 : i32
    %c0_i32_0 = arith.constant 0 : i32
    %c0_i32_1 = arith.constant 0 : i32
    return %c0_i32, %c0_i32_0 : i32, i32
  }
  func.func @transform_4(%arg0: i32, %arg1: i32) -> (i32, i32) {
    %c0_i32 = arith.constant 0 : i32
    %c0_i32_0 = arith.constant 0 : i32
    %c0_i32_1 = arith.constant 0 : i32
    return %c0_i32, %c0_i32_0 : i32, i32
  }
  func.func @transform_5(%arg0: i32, %arg1: i32) -> (i32, i32) {
    %c0_i32 = arith.constant 0 : i32
    %c0_i32_0 = arith.constant 0 : i32
    %c0_i32_1 = arith.constant 0 : i32
    return %c0_i32, %c0_i32_0 : i32, i32
  }
  func.func @transform_6(%arg0: i32, %arg1: i32) -> (i32, i32) {
    %c0_i32 = arith.constant 0 : i32
    %c0_i32_0 = arith.constant 0 : i32
    %c0_i32_1 = arith.constant 0 : i32
    return %c0_i32, %c0_i32_0 : i32, i32
  }
  func.func @transform_7(%arg0: i32, %arg1: i32) -> (i32, i32, i32) {
    %c1_i32 = arith.constant 1 : i32
    %0 = arith.subi %arg0, %c1_i32 : i32
    %c4_i32 = arith.constant 4 : i32
    %1 = arith.minsi %0, %c4_i32 : i32
    %c0_i32 = arith.constant 0 : i32
    %2 = arith.maxsi %1, %c0_i32 : i32
    %c0_i32_0 = arith.constant 0 : i32
    %c0_i32_1 = arith.constant 0 : i32
    %c0_i32_2 = arith.constant 0 : i32
    return %2, %c0_i32_0, %c0_i32_1 : i32, i32, i32
  }
  func.func @transform_8(%arg0: i32, %arg1: i32) -> (i32, i32, i32) {
    %c1_i32 = arith.constant 1 : i32
    %0 = arith.subi %arg0, %c1_i32 : i32
    %c4_i32 = arith.constant 4 : i32
    %1 = arith.minsi %0, %c4_i32 : i32
    %c0_i32 = arith.constant 0 : i32
    %2 = arith.maxsi %1, %c0_i32 : i32
    %c0_i32_0 = arith.constant 0 : i32
    %c0_i32_1 = arith.constant 0 : i32
    %c0_i32_2 = arith.constant 0 : i32
    return %2, %c0_i32_0, %c0_i32_1 : i32, i32, i32
  }
  func.func @transform_9(%arg0: i32, %arg1: i32) -> (i32, i32) {
    %c0_i32 = arith.constant 0 : i32
    %c0_i32_0 = arith.constant 0 : i32
    %c0_i32_1 = arith.constant 0 : i32
    return %c0_i32, %c0_i32_0 : i32, i32
  }
  func.func @transform_10(%arg0: i32, %arg1: i32) -> (i32, i32) {
    %c0_i32 = arith.constant 0 : i32
    %c0_i32_0 = arith.constant 0 : i32
    %c0_i32_1 = arith.constant 0 : i32
    return %c0_i32, %c0_i32_0 : i32, i32
  }
  func.func @transform_11(%arg0: i32, %arg1: i32) -> (i32, i32) {
    %c0_i32 = arith.constant 0 : i32
    %c0_i32_0 = arith.constant 0 : i32
    %c0_i32_1 = arith.constant 0 : i32
    return %c0_i32, %c0_i32_0 : i32, i32
  }
  func.func @transform_12(%arg0: i32, %arg1: i32) -> (i32, i32) {
    %c0_i32 = arith.constant 0 : i32
    %c0_i32_0 = arith.constant 0 : i32
    %c0_i32_1 = arith.constant 0 : i32
    return %c0_i32, %c0_i32_0 : i32, i32
  }
  func.func @transform_13(%arg0: i32, %arg1: i32) -> (i32, i32) {
    %c0_i32 = arith.constant 0 : i32
    %c0_i32_0 = arith.constant 0 : i32
    return %c0_i32, %arg1 : i32, i32
  }
}

</mosaic_0001>

<llo_original>
// kernel: decoder_forward.1
$region0: #{decoder_forward.1}
  #allocation0 [shape = 'u32[]', space=smem, size = 0x4, offset = 0x4, fixed_abs, tag = 'smem constant byte address 0x4 - core index']
  #allocation1 [shape = 'u32[144,128]{1,0:T(1,128)}', space=vmem, size = 0x12000, scoped, tag = 'internal scratch']
  #allocation2 [shape = 'bf16[2,2,128,256]{3,2,1,0:T(16,128)(2,1)}', space=vmem, size = 0x40000, scoped, tag = 'scratch operand']
  #allocation3 [shape = 'f32[12,2,256]{2,1,0:T(2,128)}', space=vmem, size = 0x6000, scoped, tag = 'scratch operand']
  #allocation4 [shape = 'f32[2,256]{1,0:T(2,128)}', space=vmem, size = 0x800, scoped, tag = 'scratch operand']
  #allocation5 [shape = 'f32[1,256]{1,0:T(1,128)}', space=vmem, size = 0x400, scoped, tag = 'scratch operand']
  #allocation6 [shape = 'f32[1,256]{1,0:T(1,128)}', space=vmem, size = 0x400, scoped, tag = 'scratch operand']
  #allocation7 [shape = 'f32[2,256]{1,0:T(2,128)}', space=vmem, size = 0x800, scoped, tag = 'scratch operand']
  #allocation8 [shape = 'f32[2,256]{1,0:T(2,128)}', space=vmem, size = 0x800, scoped, tag = 'scratch operand']
  #allocation9 [shape = 'f32[1,1]{1,0:T(1,128)S(6)}', space=smem, size = 0x200, scoped, tag = 'scoped memory for decoder_forward.1']
  %s0 = inlined_call_operand.vmem [shape: f32[2,256,128], index: 0, kind: input, shape index: {}]
  %s1 = inlined_call_operand.vmem [shape: f32[2,128], index: 1, kind: input, shape index: {}]
  %s2 = inlined_call_operand.vmem [shape: f32[2,128], index: 2, kind: input, shape index: {}]
  %s3 = inlined_call_operand.vmem [shape: f32[128,256], index: 3, kind: input, shape index: {}]
  %s4 = inlined_call_operand.vmem [shape: f32[1,256], index: 4, kind: input, shape index: {}]
  %s5 = inlined_call_operand.vmem [shape: f32[128,256], index: 5, kind: input, shape index: {}]
  %s6 = inlined_call_operand.vmem [shape: f32[1,256], index: 6, kind: input, shape index: {}]
  %s7 = inlined_call_operand.vmem [shape: bf16[5,256,256], index: 7, kind: input, shape index: {}]
  %s8 = inlined_call_operand.vmem [shape: f32[5,1,256], index: 8, kind: input, shape index: {}]
  %s9 = inlined_call_operand.vmem [shape: f32[128,3072], index: 9, kind: input, shape index: {}]
  %s10 = inlined_call_operand.vmem [shape: f32[1,3072], index: 10, kind: input, shape index: {}]
  %s11 = inlined_call_operand.vmem [shape: f32[1,256], index: 11, kind: input, shape index: {}]
  %s12 = inlined_call_operand.<no memory space> [shape: f32[1,1], index: 12, kind: input, shape index: {}]
  %s13 = inlined_call_operand.hbm [shape: f32[2,256], index: 13, kind: output, shape index: {}]
  %s14 = sld [smem:[#allocation0]]
  $region147: #{decoder_forward.1} parent=0
    _
  %s16 = ssub.s32 1, %s14
  %s17 = scalar_select 0, %s16, %s14
  %18 = sst [smem:[#allocation9]] %s12
  $region1: #{decoder_forward.1} parent=0
    #allocation10 [shape = 'u8[262144]{0}', space=vmem, size = 0x40000, scoped, tag = 'input window, operand 0']
    #allocation11 [shape = 'u8[2048]{0}', space=vmem, size = 0x800, scoped, tag = 'output window, operand 0']
    #allocation12 [shape = 's32[2]{0}', space=sflag, size = 0x8, scoped, tag = 'scoped memory for decoder_forward.1']
    %19 = vsyncpa [#allocation12], 0
    %s20 = scalar_lea.sflag [#allocation12], 1
    %21 = vsyncpa %s20, 0
    loop: start=0, step=1, limit=16
    $region2: #{decoder_forward.1} parent=1 // loop_pre_header
      _
    $region3: #{decoder_forward.1} parent=1 // loop_header
      %s23 = sphi 0, %s27
      %p24 = scmp.ge.s32.totalorder %s23, 16
      %s30 = sphi 0, %s42
      %s31 = sphi 0, %s38
      %s32 = sphi 0, %s30
      %s33 = sphi 0, %s31
      %s34 = sphi 0, %s32
      %s35 = sphi 0, %s33
      %s49 = sphi 0, %s51
      %s52 = sphi 0, %s49
      %s53 = sphi 0, %s52
      %s69 = sphi 0, %s53
      %s73 = sphi 0, %s73
      %s75 = sphi 0, %s73
      %s76 = sphi 0, %s75
      %s90 = sphi 0, %s76
      %s94 = sphi 0, %s94
      %s96 = sphi 0, %s94
      %s97 = sphi 0, %s96
      %s111 = sphi 0, %s97
      %s115 = sphi 0, %s115
      %s117 = sphi 0, %s115
      %s118 = sphi 0, %s117
      %s132 = sphi 0, %s118
      %s136 = sphi 0, %s136
      %s138 = sphi 0, %s136
      %s139 = sphi 0, %s138
      %s153 = sphi 0, %s139
      %s157 = sphi 0, %s157
      %s159 = sphi 0, %s157
      %s160 = sphi 0, %s159
      %s174 = sphi 0, %s160
      %s178 = sphi 0, %s178
      %s180 = sphi 0, %s178
      %s181 = sphi 0, %s180
      %s195 = sphi 0, %s181
      %s211 = sphi 0, %s213
      %s214 = sphi 0, %s211
      %s215 = sphi 0, %s214
      %s231 = sphi 0, %s215
      %s247 = sphi 0, %s249
      %s250 = sphi 0, %s247
      %s251 = sphi 0, %s250
      %s267 = sphi 0, %s251
      %s271 = sphi 0, %s271
      %s273 = sphi 0, %s271
      %s274 = sphi 0, %s273
      %s288 = sphi 0, %s274
      %s292 = sphi 0, %s292
      %s294 = sphi 0, %s292
      %s295 = sphi 0, %s294
      %s309 = sphi 0, %s295
      %s313 = sphi 0, %s313
      %s315 = sphi 0, %s313
      %s316 = sphi 0, %s315
      %s330 = sphi 0, %s316
      %s334 = sphi 0, %s334
      %s336 = sphi 0, %s334
      %s337 = sphi 0, %s336
      %s351 = sphi 0, %s337
      %s357 = sphi 0, %s359
      %s360 = sphi 0, %s357
      %s361 = sphi 0, %s360
      %s377 = sphi 0, %s361
    $region4: #{decoder_forward.1} parent=1 // loop_header_branch
      %26 = sbr.rel (%p24) target = $region8
    $region5: #{decoder_forward.1} parent=1 // loop_body
      %s28 = ssub.s32 %s23, 1
      %s29 = ssub.s32 %s23, 2
      %s36 = sadd.s32 1, %s31
      %p37 = scmp.ge.s32.totalorder %s36, 2
      %s38 = scalar_select %p37, 0, %s36
      %s39 = sadd.s32 1, %s30
      %s40 = scalar_select %p37, %s39, %s30
      %p41 = scmp.ge.s32.totalorder %s40, 7
      %s42 = scalar_select %p41, 0, %s40
      %p43 = scmp.eq.s32.totalorder %s30, 0
      %s44 = scalar_select %p43, %s31, 0
      %p45 = scmp.eq.s32.totalorder %s42, 0
      %s46 = scalar_select %p45, %s38, 0
      %s47 = ssub.s32 %s44, %s46
      %p48 = scmp.eq.s32.totalorder %s47, 0
      %s50 = sadd.s32 %s49, 1
      %s51 = scalar_select %p48, %s49, %s50
      %p54 = pneg %p48
      %p55 = scmp.eq.s32.totalorder %s23, 13
      %p56 = por %p54, %p55
      %p57 = scmp.ne.s32.totalorder %s49, %s52
      %p58 = scmp.eq.s32.totalorder %s23, 0
      %p59 = por %p57, %p58
      %p60 = scmp.ne.s32.totalorder %s49, %s52
      %p61 = scmp.eq.s32.totalorder %s28, 13
      %p62 = por %p60, %p61
      %p63 = scmp.ne.s32.totalorder %s52, %s53
      %p64 = scmp.eq.s32.totalorder %s28, 0
      %p65 = por %p63, %p64
      %p66 = scmp.ne.s32.totalorder %s52, %s53
      %p67 = scmp.eq.s32.totalorder %s29, 13
      %p68 = por %p66, %p67
      %p70 = scmp.ne.s32.totalorder %s53, %s69
      %p71 = scmp.eq.s32.totalorder %s29, 0
      %p72 = por %p70, %p71
      %s74 = sadd.s32 %s73, 1
      %p77 = scmp.eq.s32.totalorder %s23, 13
      %p78 = scmp.ne.s32.totalorder %s73, %s75
      %p79 = scmp.eq.s32.totalorder %s23, 0
      %p80 = por %p78, %p79
      %p81 = scmp.ne.s32.totalorder %s73, %s75
      %p82 = scmp.eq.s32.totalorder %s28, 13
      %p83 = por %p81, %p82
      %p84 = scmp.ne.s32.totalorder %s75, %s76
      %p85 = scmp.eq.s32.totalorder %s28, 0
      %p86 = por %p84, %p85
      %p87 = scmp.ne.s32.totalorder %s75, %s76
      %p88 = scmp.eq.s32.totalorder %s29, 13
      %p89 = por %p87, %p88
      %p91 = scmp.ne.s32.totalorder %s76, %s90
      %p92 = scmp.eq.s32.totalorder %s29, 0
      %p93 = por %p91, %p92
      %s95 = sadd.s32 %s94, 1
      %p98 = scmp.eq.s32.totalorder %s23, 13
      %p99 = scmp.ne.s32.totalorder %s94, %s96
      %p100 = scmp.eq.s32.totalorder %s23, 0
      %p101 = por %p99, %p100
      %p102 = scmp.ne.s32.totalorder %s94, %s96
      %p103 = scmp.eq.s32.totalorder %s28, 13
      %p104 = por %p102, %p103
      %p105 = scmp.ne.s32.totalorder %s96, %s97
      %p106 = scmp.eq.s32.totalorder %s28, 0
      %p107 = por %p105, %p106
      %p108 = scmp.ne.s32.totalorder %s96, %s97
      %p109 = scmp.eq.s32.totalorder %s29, 13
      %p110 = por %p108, %p109
      %p112 = scmp.ne.s32.totalorder %s97, %s111
      %p113 = scmp.eq.s32.totalorder %s29, 0
      %p114 = por %p112, %p113
      %s116 = sadd.s32 %s115, 1
      %p119 = scmp.eq.s32.totalorder %s23, 13
      %p120 = scmp.ne.s32.totalorder %s115, %s117
      %p121 = scmp.eq.s32.totalorder %s23, 0
      %p122 = por %p120, %p121
      %p123 = scmp.ne.s32.totalorder %s115, %s117
      %p124 = scmp.eq.s32.totalorder %s28, 13
      %p125 = por %p123, %p124
      %p126 = scmp.ne.s32.totalorder %s117, %s118
      %p127 = scmp.eq.s32.totalorder %s28, 0
      %p128 = por %p126, %p127
      %p129 = scmp.ne.s32.totalorder %s117, %s118
      %p130 = scmp.eq.s32.totalorder %s29, 13
      %p131 = por %p129, %p130
      %p133 = scmp.ne.s32.totalorder %s118, %s132
      %p134 = scmp.eq.s32.totalorder %s29, 0
      %p135 = por %p133, %p134
      %s137 = sadd.s32 %s136, 1
      %p140 = scmp.eq.s32.totalorder %s23, 13
      %p141 = scmp.ne.s32.totalorder %s136, %s138
      %p142 = scmp.eq.s32.totalorder %s23, 0
      %p143 = por %p141, %p142
      %p144 = scmp.ne.s32.totalorder %s136, %s138
      %p145 = scmp.eq.s32.totalorder %s28, 13
      %p146 = por %p144, %p145
      %p147 = scmp.ne.s32.totalorder %s138, %s139
      %p148 = scmp.eq.s32.totalorder %s28, 0
      %p149 = por %p147, %p148
      %p150 = scmp.ne.s32.totalorder %s138, %s139
      %p151 = scmp.eq.s32.totalorder %s29, 13
      %p152 = por %p150, %p151
      %p154 = scmp.ne.s32.totalorder %s139, %s153
      %p155 = scmp.eq.s32.totalorder %s29, 0
      %p156 = por %p154, %p155
      %s158 = sadd.s32 %s157, 1
      %p161 = scmp.eq.s32.totalorder %s23, 13
      %p162 = scmp.ne.s32.totalorder %s157, %s159
      %p163 = scmp.eq.s32.totalorder %s23, 0
      %p164 = por %p162, %p163
      %p165 = scmp.ne.s32.totalorder %s157, %s159
      %p166 = scmp.eq.s32.totalorder %s28, 13
      %p167 = por %p165, %p166
      %p168 = scmp.ne.s32.totalorder %s159, %s160
      %p169 = scmp.eq.s32.totalorder %s28, 0
      %p170 = por %p168, %p169
      %p171 = scmp.ne.s32.totalorder %s159, %s160
      %p172 = scmp.eq.s32.totalorder %s29, 13
      %p173 = por %p171, %p172
      %p175 = scmp.ne.s32.totalorder %s160, %s174
      %p176 = scmp.eq.s32.totalorder %s29, 0
      %p177 = por %p175, %p176
      %s179 = sadd.s32 %s178, 1
      %p182 = scmp.eq.s32.totalorder %s23, 13
      %p183 = scmp.ne.s32.totalorder %s178, %s180
      %p184 = scmp.eq.s32.totalorder %s23, 0
      %p185 = por %p183, %p184
      %p186 = scmp.ne.s32.totalorder %s178, %s180
      %p187 = scmp.eq.s32.totalorder %s28, 13
      %p188 = por %p186, %p187
      %p189 = scmp.ne.s32.totalorder %s180, %s181
      %p190 = scmp.eq.s32.totalorder %s28, 0
      %p191 = por %p189, %p190
      %p192 = scmp.ne.s32.totalorder %s180, %s181
      %p193 = scmp.eq.s32.totalorder %s29, 13
      %p194 = por %p192, %p193
      %p196 = scmp.ne.s32.totalorder %s181, %s195
      %p197 = scmp.eq.s32.totalorder %s29, 0
      %p198 = por %p196, %p197
      %s199 = ssub.s32 %s30, 1
      %p200 = scmp.lt.s32.totalorder %s199, 4
      %s201 = scalar_select %p200, %s199, 4
      %p202 = scmp.gt.s32.totalorder %s201, 0
      %s203 = scalar_select %p202, %s201, 0
      %s204 = ssub.s32 %s42, 1
      %p205 = scmp.lt.s32.totalorder %s204, 4
      %s206 = scalar_select %p205, %s204, 4
      %p207 = scmp.gt.s32.totalorder %s206, 0
      %s208 = scalar_select %p207, %s206, 0
      %s209 = ssub.s32 %s203, %s208
      %p210 = scmp.eq.s32.totalorder %s209, 0
      %s212 = sadd.s32 %s211, 1
      %s213 = scalar_select %p210, %s211, %s212
      %p216 = pneg %p210
      %p217 = scmp.eq.s32.totalorder %s23, 13
      %p218 = por %p216, %p217
      %p219 = scmp.ne.s32.totalorder %s211, %s214
      %p220 = scmp.eq.s32.totalorder %s23, 0
      %p221 = por %p219, %p220
      %p222 = scmp.ne.s32.totalorder %s211, %s214
      %p223 = scmp.eq.s32.totalorder %s28, 13
      %p224 = por %p222, %p223
      %p225 = scmp.ne.s32.totalorder %s214, %s215
      %p226 = scmp.eq.s32.totalorder %s28, 0
      %p227 = por %p225, %p226
      %p228 = scmp.ne.s32.totalorder %s214, %s215
      %p229 = scmp.eq.s32.totalorder %s29, 13
      %p230 = por %p228, %p229
      %p232 = scmp.ne.s32.totalorder %s215, %s231
      %p233 = scmp.eq.s32.totalorder %s29, 0
      %p234 = por %p232, %p233
      %s235 = ssub.s32 %s30, 1
      %p236 = scmp.lt.s32.totalorder %s235, 4
      %s237 = scalar_select %p236, %s235, 4
      %p238 = scmp.gt.s32.totalorder %s237, 0
      %s239 = scalar_select %p238, %s237, 0
      %s240 = ssub.s32 %s42, 1
      %p241 = scmp.lt.s32.totalorder %s240, 4
      %s242 = scalar_select %p241, %s240, 4
      %p243 = scmp.gt.s32.totalorder %s242, 0
      %s244 = scalar_select %p243, %s242, 0
      %s245 = ssub.s32 %s239, %s244
      %p246 = scmp.eq.s32.totalorder %s245, 0
      %s248 = sadd.s32 %s247, 1
      %s249 = scalar_select %p246, %s247, %s248
      %p252 = pneg %p246
      %p253 = scmp.eq.s32.totalorder %s23, 13
      %p254 = por %p252, %p253
      %p255 = scmp.ne.s32.totalorder %s247, %s250
      %p256 = scmp.eq.s32.totalorder %s23, 0
      %p257 = por %p255, %p256
      %p258 = scmp.ne.s32.totalorder %s247, %s250
      %p259 = scmp.eq.s32.totalorder %s28, 13
      %p260 = por %p258, %p259
      %p261 = scmp.ne.s32.totalorder %s250, %s251
      %p262 = scmp.eq.s32.totalorder %s28, 0
      %p263 = por %p261, %p262
      %p264 = scmp.ne.s32.totalorder %s250, %s251
      %p265 = scmp.eq.s32.totalorder %s29, 13
      %p266 = por %p264, %p265
      %p268 = scmp.ne.s32.totalorder %s251, %s267
      %p269 = scmp.eq.s32.totalorder %s29, 0
      %p270 = por %p268, %p269
      %s272 = sadd.s32 %s271, 1
      %p275 = scmp.eq.s32.totalorder %s23, 13
      %p276 = scmp.ne.s32.totalorder %s271, %s273
      %p277 = scmp.eq.s32.totalorder %s23, 0
      %p278 = por %p276, %p277
      %p279 = scmp.ne.s32.totalorder %s271, %s273
      %p280 = scmp.eq.s32.totalorder %s28, 13
      %p281 = por %p279, %p280
      %p282 = scmp.ne.s32.totalorder %s273, %s274
      %p283 = scmp.eq.s32.totalorder %s28, 0
      %p284 = por %p282, %p283
      %p285 = scmp.ne.s32.totalorder %s273, %s274
      %p286 = scmp.eq.s32.totalorder %s29, 13
      %p287 = por %p285, %p286
      %p289 = scmp.ne.s32.totalorder %s274, %s288
      %p290 = scmp.eq.s32.totalorder %s29, 0
      %p291 = por %p289, %p290
      %s293 = sadd.s32 %s292, 1
      %p296 = scmp.eq.s32.totalorder %s23, 13
      %p297 = scmp.ne.s32.totalorder %s292, %s294
      %p298 = scmp.eq.s32.totalorder %s23, 0
      %p299 = por %p297, %p298
      %p300 = scmp.ne.s32.totalorder %s292, %s294
      %p301 = scmp.eq.s32.totalorder %s28, 13
      %p302 = por %p300, %p301
      %p303 = scmp.ne.s32.totalorder %s294, %s295
      %p304 = scmp.eq.s32.totalorder %s28, 0
      %p305 = por %p303, %p304
      %p306 = scmp.ne.s32.totalorder %s294, %s295
      %p307 = scmp.eq.s32.totalorder %s29, 13
      %p308 = por %p306, %p307
      %p310 = scmp.ne.s32.totalorder %s295, %s309
      %p311 = scmp.eq.s32.totalorder %s29, 0
      %p312 = por %p310, %p311
      %s314 = sadd.s32 %s313, 1
      %p317 = scmp.eq.s32.totalorder %s23, 13
      %p318 = scmp.ne.s32.totalorder %s313, %s315
      %p319 = scmp.eq.s32.totalorder %s23, 0
      %p320 = por %p318, %p319
      %p321 = scmp.ne.s32.totalorder %s313, %s315
      %p322 = scmp.eq.s32.totalorder %s28, 13
      %p323 = por %p321, %p322
      %p324 = scmp.ne.s32.totalorder %s315, %s316
      %p325 = scmp.eq.s32.totalorder %s28, 0
      %p326 = por %p324, %p325
      %p327 = scmp.ne.s32.totalorder %s315, %s316
      %p328 = scmp.eq.s32.totalorder %s29, 13
      %p329 = por %p327, %p328
      %p331 = scmp.ne.s32.totalorder %s316, %s330
      %p332 = scmp.eq.s32.totalorder %s29, 0
      %p333 = por %p331, %p332
      %s335 = sadd.s32 %s334, 1
      %p338 = scmp.eq.s32.totalorder %s23, 13
      %p339 = scmp.ne.s32.totalorder %s334, %s336
      %p340 = scmp.eq.s32.totalorder %s23, 0
      %p341 = por %p339, %p340
      %p342 = scmp.ne.s32.totalorder %s334, %s336
      %p343 = scmp.eq.s32.totalorder %s28, 13
      %p344 = por %p342, %p343
      %p345 = scmp.ne.s32.totalorder %s336, %s337
      %p346 = scmp.eq.s32.totalorder %s28, 0
      %p347 = por %p345, %p346
      %p348 = scmp.ne.s32.totalorder %s336, %s337
      %p349 = scmp.eq.s32.totalorder %s29, 13
      %p350 = por %p348, %p349
      %p352 = scmp.ne.s32.totalorder %s337, %s351
      %p353 = scmp.eq.s32.totalorder %s29, 0
      %p354 = por %p352, %p353
      %s355 = ssub.s32 %s31, %s38
      %p356 = scmp.eq.s32.totalorder %s355, 0
      %s358 = sadd.s32 %s357, 1
      %s359 = scalar_select %p356, %s357, %s358
      %p362 = pneg %p356
      %p363 = scmp.eq.s32.totalorder %s23, 13
      %p364 = por %p362, %p363
      %p365 = scmp.ne.s32.totalorder %s357, %s360
      %p366 = scmp.eq.s32.totalorder %s23, 0
      %p367 = por %p365, %p366
      %p368 = scmp.ne.s32.totalorder %s357, %s360
      %p369 = scmp.eq.s32.totalorder %s28, 13
      %p370 = por %p368, %p369
      %p371 = scmp.ne.s32.totalorder %s360, %s361
      %p372 = scmp.eq.s32.totalorder %s28, 0
      %p373 = por %p371, %p372
      %p374 = scmp.ne.s32.totalorder %s360, %s361
      %p375 = scmp.eq.s32.totalorder %s29, 13
      %p376 = por %p374, %p375
      %p378 = scmp.ne.s32.totalorder %s361, %s377
      %p379 = scmp.eq.s32.totalorder %s29, 0
      %p380 = por %p378, %p379
      %p381 = scmp.le.s32.totalorder 1, %s23
      %p382 = scmp.lt.s32.totalorder %s23, 15
      %p383 = pnand %p381, %p382
      %p384 = pneg %p383
      // Predicated region
      $region9: #{decoder_forward.1} parent=5 // pred_check
        _
      $region10: #{decoder_forward.1} parent=5 // pred_check_branch
        %386 = sbr.rel (%p383) target = $region12
      $region11: #{decoder_forward.1} parent=5 // pred_region
        %s387 = ssub.s32 %s23, 1
        // Predicated region
        $region13: #{decoder_forward.1} parent=11 // pred_check
          %p388 = pneg %p86
        $region14: #{decoder_forward.1} parent=11 // pred_check_branch
          %390 = sbr.rel (%p388) target = $region16
        $region15: #{decoder_forward.1} parent=11 // pred_region
          _
        $region16: #{decoder_forward.1} parent=11 // pred_fallthru
          _
        // Predicated region
        $region17: #{decoder_forward.1} parent=11 // pred_check
          %p391 = pneg %p107
        $region18: #{decoder_forward.1} parent=11 // pred_check_branch
          %393 = sbr.rel (%p391) target = $region20
        $region19: #{decoder_forward.1} parent=11 // pred_region
          _
        $region20: #{decoder_forward.1} parent=11 // pred_fallthru
          _
        // Predicated region
        $region21: #{decoder_forward.1} parent=11 // pred_check
          %p394 = pneg %p128
        $region22: #{decoder_forward.1} parent=11 // pred_check_branch
          %396 = sbr.rel (%p394) target = $region24
        $region23: #{decoder_forward.1} parent=11 // pred_region
          _
        $region24: #{decoder_forward.1} parent=11 // pred_fallthru
          _
        // Predicated region
        $region25: #{decoder_forward.1} parent=11 // pred_check
          %p397 = pneg %p149
        $region26: #{decoder_forward.1} parent=11 // pred_check_branch
          %399 = sbr.rel (%p397) target = $region28
        $region27: #{decoder_forward.1} parent=11 // pred_region
          _
        $region28: #{decoder_forward.1} parent=11 // pred_fallthru
          _
        // Predicated region
        $region29: #{decoder_forward.1} parent=11 // pred_check
          %p400 = pneg %p170
        $region30: #{decoder_forward.1} parent=11 // pred_check_branch
          %402 = sbr.rel (%p400) target = $region32
        $region31: #{decoder_forward.1} parent=11 // pred_region
          _
        $region32: #{decoder_forward.1} parent=11 // pred_fallthru
          _
        // Predicated region
        $region33: #{decoder_forward.1} parent=11 // pred_check
          %p403 = pneg %p191
        $region34: #{decoder_forward.1} parent=11 // pred_check_branch
          %405 = sbr.rel (%p403) target = $region36
        $region35: #{decoder_forward.1} parent=11 // pred_region
          _
        $region36: #{decoder_forward.1} parent=11 // pred_fallthru
          _
        // Predicated region
        $region37: #{decoder_forward.1} parent=11 // pred_check
          %p406 = pneg %p284
        $region38: #{decoder_forward.1} parent=11 // pred_check_branch
          %408 = sbr.rel (%p406) target = $region40
        $region39: #{decoder_forward.1} parent=11 // pred_region
          _
        $region40: #{decoder_forward.1} parent=11 // pred_fallthru
          _
        // Predicated region
        $region41: #{decoder_forward.1} parent=11 // pred_check
          %p409 = pneg %p305
        $region42: #{decoder_forward.1} parent=11 // pred_check_branch
          %411 = sbr.rel (%p409) target = $region44
        $region43: #{decoder_forward.1} parent=11 // pred_region
          _
        $region44: #{decoder_forward.1} parent=11 // pred_fallthru
          _
        // Predicated region
        $region45: #{decoder_forward.1} parent=11 // pred_check
          %p412 = pneg %p326
        $region46: #{decoder_forward.1} parent=11 // pred_check_branch
          %414 = sbr.rel (%p412) target = $region48
        $region47: #{decoder_forward.1} parent=11 // pred_region
          _
        $region48: #{decoder_forward.1} parent=11 // pred_fallthru
          _
        // Predicated region
        $region49: #{decoder_forward.1} parent=11 // pred_check
          %p415 = pneg %p347
        $region50: #{decoder_forward.1} parent=11 // pred_check_branch
          %417 = sbr.rel (%p415) target = $region52
        $region51: #{decoder_forward.1} parent=11 // pred_region
          _
        $region52: #{decoder_forward.1} parent=11 // pred_fallthru
          _
      $region12: #{decoder_forward.1} parent=5 // pred_fallthru
        _
      %p418 = scmp.lt.s32.totalorder %s23, 14
      // Predicated region
      $region53: #{decoder_forward.1} parent=5 // pred_check
        %p419 = pneg %p418
      $region54: #{decoder_forward.1} parent=5 // pred_check_branch
        %421 = sbr.rel (%p419) target = $region56
      $region55: #{decoder_forward.1} parent=5 // pred_region
        // Predicated region
        $region57: #{decoder_forward.1} parent=55 // pred_check
          %p422 = pneg %p59
        $region58: #{decoder_forward.1} parent=55 // pred_check_branch
          %424 = sbr.rel (%p422) target = $region60
        $region59: #{decoder_forward.1} parent=55 // pred_region
          %s425 = sand.u32 %s49, 1
          %s426 = sand.u32 %s49, 1
          %s427 = smul.addr %s426, 256
          %s428 = scalar_lea.vmem [#allocation10], %s427
          %p429 = scmp.eq.s32.totalorder %s30, 0
          %s430 = scalar_select %p429, %s31, 0
          %s431 = smul.u32 16, %s430
          %s432 = smul.addr %s431, 8
          %s433 = scalar_lea.vmem %s0, %s432
          // Predicated region
          $region61: #{decoder_forward.1} parent=59 // pred_check
            _
          $region62: #{decoder_forward.1} parent=59 // pred_check_branch
            %435 = sbr.rel (0) target = $region64
          $region63: #{decoder_forward.1} parent=59 // pred_region
            // Predicated region
            $region65: #{decoder_forward.1} parent=63 // pred_check
              _
            $region66: #{decoder_forward.1} parent=63 // pred_check_branch
              %437 = sbr.rel (0) target = $region68
            $region67: #{decoder_forward.1} parent=63 // pred_region
              // Predicated region
              $region80: #{decoder_forward.1} parent=67 // pred_check
                _
              $region81: #{decoder_forward.1} parent=67 // pred_check_branch
                %514 = sbr.rel (0) target = $region83
              $region82: #{decoder_forward.1} parent=67 // pred_region
                loop: start=0, step=1, limit=1
                $region84: #{decoder_forward.1} parent=82 // loop_pre_header
                  _
                $region85: #{decoder_forward.1} parent=82 // loop_header
                  %s516 = sphi 0, %s520
                  %p517 = scmp.ge.s32.totalorder %s516, 1
                  %s521 = sphi %s433, %s433
                  %s522 = sphi %s428, %s428
                $region86: #{decoder_forward.1} parent=82 // loop_header_branch
                  %519 = sbr.rel (%p517) target = $region90
                $region87: #{decoder_forward.1} parent=82 // loop_body
                  %v523 = vld [vmem:[%s521] sm:$0xff]
                  %524 = vst [vmem:[%s522] sm:$0xff] %v523
                  %v525 = vld [vmem:[%s521 + $0x8] sm:$0xff]
                  %526 = vst [vmem:[%s522 + $0x8] sm:$0xff] %v525
                  %v527 = vld [vmem:[%s521 + $0x10] sm:$0xff]
                  %528 = vst [vmem:[%s522 + $0x10] sm:$0xff] %v527
                  %v529 = vld [vmem:[%s521 + $0x18] sm:$0xff]
                  %530 = vst [vmem:[%s522 + $0x18] sm:$0xff] %v529
                  %v531 = vld [vmem:[%s521 + $0x20] sm:$0xff]
                  %532 = vst [vmem:[%s522 + $0x20] sm:$0xff] %v531
                  %v533 = vld [vmem:[%s521 + $0x28] sm:$0xff]
                  %534 = vst [vmem:[%s522 + $0x28] sm:$0xff] %v533
                  %v535 = vld [vmem:[%s521 + $0x30] sm:$0xff]
                  %536 = vst [vmem:[%s522 + $0x30] sm:$0xff] %v535
                  %v537 = vld [vmem:[%s521 + $0x38] sm:$0xff]
                  %538 = vst [vmem:[%s522 + $0x38] sm:$0xff] %v537
                  %v539 = vld [vmem:[%s521 + $0x40] sm:$0xff]
                  %540 = vst [vmem:[%s522 + $0x40] sm:$0xff] %v539
                  %v541 = vld [vmem:[%s521 + $0x48] sm:$0xff]
                  %542 = vst [vmem:[%s522 + $0x48] sm:$0xff] %v541
                  %v543 = vld [vmem:[%s521 + $0x50] sm:$0xff]
                  %544 = vst [vmem:[%s522 + $0x50] sm:$0xff] %v543
                  %v545 = vld [vmem:[%s521 + $0x58] sm:$0xff]
                  %546 = vst [vmem:[%s522 + $0x58] sm:$0xff] %v545
                  %v547 = vld [vmem:[%s521 + $0x60] sm:$0xff]
                  %548 = vst [vmem:[%s522 + $0x60] sm:$0xff] %v547
                  %v549 = vld [vmem:[%s521 + $0x68] sm:$0xff]
                  %550 = vst [vmem:[%s522 + $0x68] sm:$0xff] %v549
                  %v551 = vld [vmem:[%s521 + $0x70] sm:$0xff]
                  %552 = vst [vmem:[%s522 + $0x70] sm:$0xff] %v551
                  %v553 = vld [vmem:[%s521 + $0x78] sm:$0xff]
                  %554 = vst [vmem:[%s522 + $0x78] sm:$0xff] %v553
                  %v555 = vld [vmem:[%s521 + $0x100] sm:$0xff]
                  %556 = vst [vmem:[%s522 + $0x80] sm:$0xff] %v555
                  %v557 = vld [vmem:[%s521 + $0x108] sm:$0xff]
                  %558 = vst [vmem:[%s522 + $0x88] sm:$0xff] %v557
                  %v559 = vld [vmem:[%s521 + $0x110] sm:$0xff]
                  %560 = vst [vmem:[%s522 + $0x90] sm:$0xff] %v559
                  %v561 = vld [vmem:[%s521 + $0x118] sm:$0xff]
                  %562 = vst [vmem:[%s522 + $0x98] sm:$0xff] %v561
                  %v563 = vld [vmem:[%s521 + $0x120] sm:$0xff]
                  %564 = vst [vmem:[%s522 + $0xa0] sm:$0xff] %v563
                  %v565 = vld [vmem:[%s521 + $0x128] sm:$0xff]
                  %566 = vst [vmem:[%s522 + $0xa8] sm:$0xff] %v565
                  %v567 = vld [vmem:[%s521 + $0x130] sm:$0xff]
                  %568 = vst [vmem:[%s522 + $0xb0] sm:$0xff] %v567
                  %v569 = vld [vmem:[%s521 + $0x138] sm:$0xff]
                  %570 = vst [vmem:[%s522 + $0xb8] sm:$0xff] %v569
                  %v571 = vld [vmem:[%s521 + $0x140] sm:$0xff]
                  %572 = vst [vmem:[%s522 + $0xc0] sm:$0xff] %v571
                  %v573 = vld [vmem:[%s521 + $0x148] sm:$0xff]
                  %574 = vst [vmem:[%s522 + $0xc8] sm:$0xff] %v573
                  %v575 = vld [vmem:[%s521 + $0x150] sm:$0xff]
                  %576 = vst [vmem:[%s522 + $0xd0] sm:$0xff] %v575
                  %v577 = vld [vmem:[%s521 + $0x158] sm:$0xff]
                  %578 = vst [vmem:[%s522 + $0xd8] sm:$0xff] %v577
                  %v579 = vld [vmem:[%s521 + $0x160] sm:$0xff]
                  %580 = vst [vmem:[%s522 + $0xe0] sm:$0xff] %v579
                  %v581 = vld [vmem:[%s521 + $0x168] sm:$0xff]
                  %582 = vst [vmem:[%s522 + $0xe8] sm:$0xff] %v581
                  %v583 = vld [vmem:[%s521 + $0x170] sm:$0xff]
                  %584 = vst [vmem:[%s522 + $0xf0] sm:$0xff] %v583
                  %v585 = vld [vmem:[%s521 + $0x178] sm:$0xff]
                  %586 = vst [vmem:[%s522 + $0xf8] sm:$0xff] %v585
                $region88: #{decoder_forward.1} parent=82 // loop_footer
                  %s520 = sadd.s32 1, %s516
                $region89: #{decoder_forward.1} parent=82 // loop_footer_branch
                  %515 = sbr.rel target = $region85
                $region90: #{decoder_forward.1} parent=82 // loop_exit
                  _
              $region83: #{decoder_forward.1} parent=67 // pred_fallthru
                _
              // Predicated region
              $region91: #{decoder_forward.1} parent=67 // pred_check
                _
              $region92: #{decoder_forward.1} parent=67 // pred_check_branch
                %588 = sbr.rel target = $region94
              $region93: #{decoder_forward.1} parent=67 // pred_region
                _
              $region94: #{decoder_forward.1} parent=67 // pred_fallthru
                _
            $region68: #{decoder_forward.1} parent=63 // pred_fallthru
              _
            // Predicated region
            $region69: #{decoder_forward.1} parent=63 // pred_check
              _
            $region70: #{decoder_forward.1} parent=63 // pred_check_branch
              %439 = sbr.rel target = $region72
            $region71: #{decoder_forward.1} parent=63 // pred_region
              loop: start=0, step=1, limit=1
              $region73: #{decoder_forward.1} parent=71 // loop_pre_header
                _
              $region74: #{decoder_forward.1} parent=71 // loop_header
                %s442 = sphi 0, %s446
                %p443 = scmp.ge.s32.totalorder %s442, 1
                %s447 = sphi %s433, %s433
                %s448 = sphi %s428, %s428
              $region75: #{decoder_forward.1} parent=71 // loop_header_branch
                %445 = sbr.rel (%p443) target = $region79
              $region76: #{decoder_forward.1} parent=71 // loop_body
                %v449 = vld [vmem:[%s447] sm:$0xff]
                %450 = vst [vmem:[%s448] sm:$0xff] %v449
                %v451 = vld [vmem:[%s447 + $0x8] sm:$0xff]
                %452 = vst [vmem:[%s448 + $0x8] sm:$0xff] %v451
                %v453 = vld [vmem:[%s447 + $0x10] sm:$0xff]
                %454 = vst [vmem:[%s448 + $0x10] sm:$0xff] %v453
                %v455 = vld [vmem:[%s447 + $0x18] sm:$0xff]
                %456 = vst [vmem:[%s448 + $0x18] sm:$0xff] %v455
                %v457 = vld [vmem:[%s447 + $0x20] sm:$0xff]
                %458 = vst [vmem:[%s448 + $0x20] sm:$0xff] %v457
                %v459 = vld [vmem:[%s447 + $0x28] sm:$0xff]
                %460 = vst [vmem:[%s448 + $0x28] sm:$0xff] %v459
                %v461 = vld [vmem:[%s447 + $0x30] sm:$0xff]
                %462 = vst [vmem:[%s448 + $0x30] sm:$0xff] %v461
                %v463 = vld [vmem:[%s447 + $0x38] sm:$0xff]
                %464 = vst [vmem:[%s448 + $0x38] sm:$0xff] %v463
                %v465 = vld [vmem:[%s447 + $0x40] sm:$0xff]
                %466 = vst [vmem:[%s448 + $0x40] sm:$0xff] %v465
                %v467 = vld [vmem:[%s447 + $0x48] sm:$0xff]
                %468 = vst [vmem:[%s448 + $0x48] sm:$0xff] %v467
                %v469 = vld [vmem:[%s447 + $0x50] sm:$0xff]
                %470 = vst [vmem:[%s448 + $0x50] sm:$0xff] %v469
                %v471 = vld [vmem:[%s447 + $0x58] sm:$0xff]
                %472 = vst [vmem:[%s448 + $0x58] sm:$0xff] %v471
                %v473 = vld [vmem:[%s447 + $0x60] sm:$0xff]
                %474 = vst [vmem:[%s448 + $0x60] sm:$0xff] %v473
                %v475 = vld [vmem:[%s447 + $0x68] sm:$0xff]
                %476 = vst [vmem:[%s448 + $0x68] sm:$0xff] %v475
                %v477 = vld [vmem:[%s447 + $0x70] sm:$0xff]
                %478 = vst [vmem:[%s448 + $0x70] sm:$0xff] %v477
                %v479 = vld [vmem:[%s447 + $0x78] sm:$0xff]
                %480 = vst [vmem:[%s448 + $0x78] sm:$0xff] %v479
                %v481 = vld [vmem:[%s447 + $0x100] sm:$0xff]
                %482 = vst [vmem:[%s448 + $0x80] sm:$0xff] %v481
                %v483 = vld [vmem:[%s447 + $0x108] sm:$0xff]
                %484 = vst [vmem:[%s448 + $0x88] sm:$0xff] %v483
                %v485 = vld [vmem:[%s447 + $0x110] sm:$0xff]
                %486 = vst [vmem:[%s448 + $0x90] sm:$0xff] %v485
                %v487 = vld [vmem:[%s447 + $0x118] sm:$0xff]
                %488 = vst [vmem:[%s448 + $0x98] sm:$0xff] %v487
                %v489 = vld [vmem:[%s447 + $0x120] sm:$0xff]
                %490 = vst [vmem:[%s448 + $0xa0] sm:$0xff] %v489
                %v491 = vld [vmem:[%s447 + $0x128] sm:$0xff]
                %492 = vst [vmem:[%s448 + $0xa8] sm:$0xff] %v491
                %v493 = vld [vmem:[%s447 + $0x130] sm:$0xff]
                %494 = vst [vmem:[%s448 + $0xb0] sm:$0xff] %v493
                %v495 = vld [vmem:[%s447 + $0x138] sm:$0xff]
                %496 = vst [vmem:[%s448 + $0xb8] sm:$0xff] %v495
                %v497 = vld [vmem:[%s447 + $0x140] sm:$0xff]
                %498 = vst [vmem:[%s448 + $0xc0] sm:$0xff] %v497
                %v499 = vld [vmem:[%s447 + $0x148] sm:$0xff]
                %500 = vst [vmem:[%s448 + $0xc8] sm:$0xff] %v499
                %v501 = vld [vmem:[%s447 + $0x150] sm:$0xff]
                %502 = vst [vmem:[%s448 + $0xd0] sm:$0xff] %v501
                %v503 = vld [vmem:[%s447 + $0x158] sm:$0xff]
                %504 = vst [vmem:[%s448 + $0xd8] sm:$0xff] %v503
                %v505 = vld [vmem:[%s447 + $0x160] sm:$0xff]
                %506 = vst [vmem:[%s448 + $0xe0] sm:$0xff] %v505
                %v507 = vld [vmem:[%s447 + $0x168] sm:$0xff]
                %508 = vst [vmem:[%s448 + $0xe8] sm:$0xff] %v507
                %v509 = vld [vmem:[%s447 + $0x170] sm:$0xff]
                %510 = vst [vmem:[%s448 + $0xf0] sm:$0xff] %v509
                %v511 = vld [vmem:[%s447 + $0x178] sm:$0xff]
                %512 = vst [vmem:[%s448 + $0xf8] sm:$0xff] %v511
              $region77: #{decoder_forward.1} parent=71 // loop_footer
                %s446 = sadd.s32 1, %s442
              $region78: #{decoder_forward.1} parent=71 // loop_footer_branch
                %441 = sbr.rel target = $region74
              $region79: #{decoder_forward.1} parent=71 // loop_exit
                _
            $region72: #{decoder_forward.1} parent=63 // pred_fallthru
              _
          $region64: #{decoder_forward.1} parent=59 // pred_fallthru
            _
          %589 = vnop
        $region60: #{decoder_forward.1} parent=55 // pred_fallthru
          _
        // Predicated region
        $region95: #{decoder_forward.1} parent=55 // pred_check
          %p590 = pneg %p221
        $region96: #{decoder_forward.1} parent=55 // pred_check_branch
          %592 = sbr.rel (%p590) target = $region98
        $region97: #{decoder_forward.1} parent=55 // pred_region
          %s593 = ssub.s32 %s30, 1
          %p594 = scmp.lt.s32.totalorder %s593, 4
          %s595 = scalar_select %p594, %s593, 4
          %p596 = scmp.gt.s32.totalorder %s595, 0
          %s597 = scalar_select %p596, %s595, 0
          %p598 = scmp.lt.s32.totalorder %s597, 4
          %s599 = scalar_select %p598, %s597, 4
          %s600 = smul.addr %s599, 64
          %s601 = smul.addr %s600, 4
          %s602 = scalar_lea.vmem %s7, %s601
          %s603 = ssub.s32 %s30, 1
          %p604 = scmp.lt.s32.totalorder %s603, 4
          %s605 = scalar_select %p604, %s603, 4
          %p606 = scmp.gt.s32.totalorder %s605, 0
          %s607 = scalar_select %p606, %s605, 0
        $region98: #{decoder_forward.1} parent=55 // pred_fallthru
          _
        // Predicated region
        $region99: #{decoder_forward.1} parent=55 // pred_check
          %p608 = pneg %p257
        $region100: #{decoder_forward.1} parent=55 // pred_check_branch
          %610 = sbr.rel (%p608) target = $region102
        $region101: #{decoder_forward.1} parent=55 // pred_region
          %s611 = ssub.s32 %s30, 1
          %p612 = scmp.lt.s32.totalorder %s611, 4
          %s613 = scalar_select %p612, %s611, 4
          %p614 = scmp.gt.s32.totalorder %s613, 0
          %s615 = scalar_select %p614, %s613, 0
          %p616 = scmp.lt.s32.totalorder %s615, 4
          %s617 = scalar_select %p616, %s615, 4
          %s618 = smul.addr %s617, 2
          %s619 = scalar_lea.vmem %s8, %s618
          %s620 = ssub.s32 %s30, 1
          %p621 = scmp.lt.s32.totalorder %s620, 4
          %s622 = scalar_select %p621, %s620, 4
          %p623 = scmp.gt.s32.totalorder %s622, 0
          %s624 = scalar_select %p623, %s622, 0
        $region102: #{decoder_forward.1} parent=55 // pred_fallthru
          _
      $region56: #{decoder_forward.1} parent=5 // pred_fallthru
        _
      %p625 = scmp.le.s32.totalorder 1, %s23
      %p626 = scmp.lt.s32.totalorder %s23, 15
      %p627 = pnand %p625, %p626
      %p628 = pneg %p627
      // Predicated region
      $region103: #{decoder_forward.1} parent=5 // pred_check
        _
      $region104: #{decoder_forward.1} parent=5 // pred_check_branch
        %630 = sbr.rel (%p627) target = $region106
      $region105: #{decoder_forward.1} parent=5 // pred_region
        %s631 = ssub.s32 %s23, 1
        %s632 = sand.u32 %s52, 1
        %s633 = sand.u32 %s52, 1
        %s634 = smul.addr %s633, 256
        %s635 = scalar_lea.vmem [#allocation10], %s634
        // Predicated region
        $region107: #{decoder_forward.1} parent=105 // pred_check
          %p636 = pneg %p65
        $region108: #{decoder_forward.1} parent=105 // pred_check_branch
          %638 = sbr.rel (%p636) target = $region110
        $region109: #{decoder_forward.1} parent=105 // pred_region
          _
        $region110: #{decoder_forward.1} parent=105 // pred_fallthru
          _
        %s639 = sand.u32 %s52, 1
        %s640 = sand.u32 %s52, 1
        %s641 = smul.addr %s640, 256
        %s642 = scalar_lea.vmem [#allocation10], %s641
        %p643 = pneg %p65
        %p644 = pneg %p62
        %p645 = pneg %p86
        %p646 = pneg %p83
        %p647 = pneg %p107
        %p648 = pneg %p104
        %p649 = pneg %p128
        %p650 = pneg %p125
        %p651 = pneg %p149
        %p652 = pneg %p146
        %p653 = pneg %p170
        %p654 = pneg %p167
        %p655 = pneg %p191
        %p656 = pneg %p188
        %s657 = ssub.s32 %s32, 1
        %p658 = scmp.lt.s32.totalorder %s657, 4
        %s659 = scalar_select %p658, %s657, 4
        %p660 = scmp.gt.s32.totalorder %s659, 0
        %s661 = scalar_select %p660, %s659, 0
        %p662 = scmp.lt.s32.totalorder %s661, 4
        %s663 = scalar_select %p662, %s661, 4
        %s664 = smul.addr %s663, 64
        %s665 = smul.addr %s664, 4
        %s666 = scalar_lea.vmem %s7, %s665
        %p667 = pneg %p227
        %p668 = pneg %p224
        %s669 = ssub.s32 %s32, 1
        %p670 = scmp.lt.s32.totalorder %s669, 4
        %s671 = scalar_select %p670, %s669, 4
        %p672 = scmp.gt.s32.totalorder %s671, 0
        %s673 = scalar_select %p672, %s671, 0
        %p674 = scmp.lt.s32.totalorder %s673, 4
        %s675 = scalar_select %p674, %s673, 4
        %s676 = smul.addr %s675, 2
        %s677 = scalar_lea.vmem %s8, %s676
        %p678 = pneg %p263
        %p679 = pneg %p260
        %p680 = pneg %p284
        %p681 = pneg %p281
        %p682 = pneg %p305
        %p683 = pneg %p302
        %p684 = pneg %p326
        %p685 = pneg %p323
        %p686 = pneg %p347
        %p687 = pneg %p344
        %p688 = pneg %p373
        %p689 = pneg %p370
        %s690 = sand.u32 %s360, 1
        %s691 = scalar_lea.sflag [#allocation12], %s690
        %s692 = sand.u32 %s360, 1
        %s693 = smul.addr %s692, 2
        %s694 = scalar_lea.vmem [#allocation11], %s693
        %p695 = scmp.eq.s32.totalorder %s32, 0
        %s696 = scalar_select %p695, %s33, 0
        %s697 = smul.u32 16, %s696
        %s698 = ssub.s32 %s32, 1
        %p699 = scmp.lt.s32.totalorder %s698, 4
        %s700 = scalar_select %p699, %s698, 4
        %p701 = scmp.gt.s32.totalorder %s700, 0
        %s702 = scalar_select %p701, %s700, 0
        %p703 = scmp.lt.s32.totalorder %s702, 4
        %s704 = scalar_select %p703, %s702, 4
        %s705 = smul.addr %s704, 64
        %s706 = smul.addr %s705, 4
        %s707 = scalar_lea.vmem %s7, %s706
        %s708 = ssub.s32 %s32, 1
        %p709 = scmp.lt.s32.totalorder %s708, 4
        %s710 = scalar_select %p709, %s708, 4
        %p711 = scmp.gt.s32.totalorder %s710, 0
        %s712 = scalar_select %p711, %s710, 0
        %s713 = ssub.s32 %s32, 1
        %p714 = scmp.lt.s32.totalorder %s713, 4
        %s715 = scalar_select %p714, %s713, 4
        %p716 = scmp.gt.s32.totalorder %s715, 0
        %s717 = scalar_select %p716, %s715, 0
        %p718 = scmp.lt.s32.totalorder %s717, 4
        %s719 = scalar_select %p718, %s717, 4
        %s720 = smul.addr %s719, 2
        %s721 = scalar_lea.vmem %s8, %s720
        %s722 = ssub.s32 %s32, 1
        %p723 = scmp.lt.s32.totalorder %s722, 4
        %s724 = scalar_select %p723, %s722, 4
        %p725 = scmp.gt.s32.totalorder %s724, 0
        %s726 = scalar_select %p725, %s724, 0
        %p727 = scmp.eq.s32.totalorder %s32, 0
        %p728 = scmp.eq.s32.totalorder %s33, 0
        %p729 = pnand %p727, %p728
        %p730 = pneg %p729
        // Predicated region
        $region111: #{decoder_forward.1} parent=105 // pred_check
          _
        $region112: #{decoder_forward.1} parent=105 // pred_check_branch
          %732 = sbr.rel (%p729) target = $region114
        $region113: #{decoder_forward.1} parent=105 // pred_region
          %v733 = vld [vmem:[%s2] sm:$0x3]
          %v734 = vld [vmem:[%s9] sm:$0xff]
          %v735 = vld [vmem:[%s9 + $0x8] sm:$0xff]
          %v736 = vld [vmem:[%s9 + $0x10] sm:$0xff]
          %v737 = vld [vmem:[%s9 + $0x18] sm:$0xff]
          %v738 = vld [vmem:[%s9 + $0x20] sm:$0xff]
          %v739 = vld [vmem:[%s9 + $0x28] sm:$0xff]
          %v740 = vld [vmem:[%s9 + $0x30] sm:$0xff]
          %v741 = vld [vmem:[%s9 + $0x38] sm:$0xff]
          %v742 = vld [vmem:[%s9 + $0x40] sm:$0xff]
          %v743 = vld [vmem:[%s9 + $0x48] sm:$0xff]
          %v744 = vld [vmem:[%s9 + $0x50] sm:$0xff]
          %v745 = vld [vmem:[%s9 + $0x58] sm:$0xff]
          %v746 = vld [vmem:[%s9 + $0x60] sm:$0xff]
          %v747 = vld [vmem:[%s9 + $0x68] sm:$0xff]
          %v748 = vld [vmem:[%s9 + $0x70] sm:$0xff]
          %v749 = vld [vmem:[%s9 + $0x78] sm:$0xff]
          %v750 = vld [vmem:[%s9 + $0x80] sm:$0xff]
          %v751 = vld [vmem:[%s9 + $0x88] sm:$0xff]
          %v752 = vld [vmem:[%s9 + $0x90] sm:$0xff]
          %v753 = vld [vmem:[%s9 + $0x98] sm:$0xff]
          %v754 = vld [vmem:[%s9 + $0xa0] sm:$0xff]
          %v755 = vld [vmem:[%s9 + $0xa8] sm:$0xff]
          %v756 = vld [vmem:[%s9 + $0xb0] sm:$0xff]
          %v757 = vld [vmem:[%s9 + $0xb8] sm:$0xff]
          %v758 = vld [vmem:[%s9 + $0xc0] sm:$0xff]
          %v759 = vld [vmem:[%s9 + $0xc8] sm:$0xff]
          %v760 = vld [vmem:[%s9 + $0xd0] sm:$0xff]
          %v761 = vld [vmem:[%s9 + $0xd8] sm:$0xff]
          %v762 = vld [vmem:[%s9 + $0xe0] sm:$0xff]
          %v763 = vld [vmem:[%s9 + $0xe8] sm:$0xff]
          %v764 = vld [vmem:[%s9 + $0xf0] sm:$0xff]
          %v765 = vld [vmem:[%s9 + $0xf8] sm:$0xff]
          %v766 = vld [vmem:[%s9 + $0x100] sm:$0xff]
          %v767 = vld [vmem:[%s9 + $0x108] sm:$0xff]
          %v768 = vld [vmem:[%s9 + $0x110] sm:$0xff]
          %v769 = vld [vmem:[%s9 + $0x118] sm:$0xff]
          %v770 = vld [vmem:[%s9 + $0x120] sm:$0xff]
          %v771 = vld [vmem:[%s9 + $0x128] sm:$0xff]
          %v772 = vld [vmem:[%s9 + $0x130] sm:$0xff]
          %v773 = vld [vmem:[%s9 + $0x138] sm:$0xff]
          %v774 = vld [vmem:[%s9 + $0x140] sm:$0xff]
          %v775 = vld [vmem:[%s9 + $0x148] sm:$0xff]
          %v776 = vld [vmem:[%s9 + $0x150] sm:$0xff]
          %v777 = vld [vmem:[%s9 + $0x158] sm:$0xff]
          %v778 = vld [vmem:[%s9 + $0x160] sm:$0xff]
          %v779 = vld [vmem:[%s9 + $0x168] sm:$0xff]
          %v780 = vld [vmem:[%s9 + $0x170] sm:$0xff]
          %v781 = vld [vmem:[%s9 + $0x178] sm:$0xff]
          %v782 = vld [vmem:[%s9 + $0x180] sm:$0xff]
          %v783 = vld [vmem:[%s9 + $0x188] sm:$0xff]
          %v784 = vld [vmem:[%s9 + $0x190] sm:$0xff]
          %v785 = vld [vmem:[%s9 + $0x198] sm:$0xff]
          %v786 = vld [vmem:[%s9 + $0x1a0] sm:$0xff]
          %v787 = vld [vmem:[%s9 + $0x1a8] sm:$0xff]
          %v788 = vld [vmem:[%s9 + $0x1b0] sm:$0xff]
          %v789 = vld [vmem:[%s9 + $0x1b8] sm:$0xff]
          %v790 = vld [vmem:[%s9 + $0x1c0] sm:$0xff]
          %v791 = vld [vmem:[%s9 + $0x1c8] sm:$0xff]
          %v792 = vld [vmem:[%s9 + $0x1d0] sm:$0xff]
          %v793 = vld [vmem:[%s9 + $0x1d8] sm:$0xff]
          %v794 = vld [vmem:[%s9 + $0x1e0] sm:$0xff]
          %v795 = vld [vmem:[%s9 + $0x1e8] sm:$0xff]
          %v796 = vld [vmem:[%s9 + $0x1f0] sm:$0xff]
          %v797 = vld [vmem:[%s9 + $0x1f8] sm:$0xff]
          %v798 = vld [vmem:[%s9 + $0x200] sm:$0xff]
          %v799 = vld [vmem:[%s9 + $0x208] sm:$0xff]
          %v800 = vld [vmem:[%s9 + $0x210] sm:$0xff]
          %v801 = vld [vmem:[%s9 + $0x218] sm:$0xff]
          %v802 = vld [vmem:[%s9 + $0x220] sm:$0xff]
          %v803 = vld [vmem:[%s9 + $0x228] sm:$0xff]
          %v804 = vld [vmem:[%s9 + $0x230] sm:$0xff]
          %v805 = vld [vmem:[%s9 + $0x238] sm:$0xff]
          %v806 = vld [vmem:[%s9 + $0x240] sm:$0xff]
          %v807 = vld [vmem:[%s9 + $0x248] sm:$0xff]
          %v808 = vld [vmem:[%s9 + $0x250] sm:$0xff]
          %v809 = vld [vmem:[%s9 + $0x258] sm:$0xff]
          %v810 = vld [vmem:[%s9 + $0x260] sm:$0xff]
          %v811 = vld [vmem:[%s9 + $0x268] sm:$0xff]
          %v812 = vld [vmem:[%s9 + $0x270] sm:$0xff]
          %v813 = vld [vmem:[%s9 + $0x278] sm:$0xff]
          %v814 = vld [vmem:[%s9 + $0x280] sm:$0xff]
          %v815 = vld [vmem:[%s9 + $0x288] sm:$0xff]
          %v816 = vld [vmem:[%s9 + $0x290] sm:$0xff]
          %v817 = vld [vmem:[%s9 + $0x298] sm:$0xff]
          %v818 = vld [vmem:[%s9 + $0x2a0] sm:$0xff]
          %v819 = vld [vmem:[%s9 + $0x2a8] sm:$0xff]
          %v820 = vld [vmem:[%s9 + $0x2b0] sm:$0xff]
          %v821 = vld [vmem:[%s9 + $0x2b8] sm:$0xff]
          %v822 = vld [vmem:[%s9 + $0x2c0] sm:$0xff]
          %v823 = vld [vmem:[%s9 + $0x2c8] sm:$0xff]
          %v824 = vld [vmem:[%s9 + $0x2d0] sm:$0xff]
          %v825 = vld [vmem:[%s9 + $0x2d8] sm:$0xff]
          %v826 = vld [vmem:[%s9 + $0x2e0] sm:$0xff]
          %v827 = vld [vmem:[%s9 + $0x2e8] sm:$0xff]
          %v828 = vld [vmem:[%s9 + $0x2f0] sm:$0xff]
          %v829 = vld [vmem:[%s9 + $0x2f8] sm:$0xff]
          %v830 = vld [vmem:[%s9 + $0x300] sm:$0xff]
          %v831 = vld [vmem:[%s9 + $0x308] sm:$0xff]
          %v832 = vld [vmem:[%s9 + $0x310] sm:$0xff]
          %v833 = vld [vmem:[%s9 + $0x318] sm:$0xff]
          %v834 = vld [vmem:[%s9 + $0x320] sm:$0xff]
          %v835 = vld [vmem:[%s9 + $0x328] sm:$0xff]
          %v836 = vld [vmem:[%s9 + $0x330] sm:$0xff]
          %v837 = vld [vmem:[%s9 + $0x338] sm:$0xff]
          %v838 = vld [vmem:[%s9 + $0x340] sm:$0xff]
          %v839 = vld [vmem:[%s9 + $0x348] sm:$0xff]
          %v840 = vld [vmem:[%s9 + $0x350] sm:$0xff]
          %v841 = vld [vmem:[%s9 + $0x358] sm:$0xff]
          %v842 = vld [vmem:[%s9 + $0x360] sm:$0xff]
          %v843 = vld [vmem:[%s9 + $0x368] sm:$0xff]
          %v844 = vld [vmem:[%s9 + $0x370] sm:$0xff]
          %v845 = vld [vmem:[%s9 + $0x378] sm:$0xff]
          %v846 = vld [vmem:[%s9 + $0x380] sm:$0xff]
          %v847 = vld [vmem:[%s9 + $0x388] sm:$0xff]
          %v848 = vld [vmem:[%s9 + $0x390] sm:$0xff]
          %v849 = vld [vmem:[%s9 + $0x398] sm:$0xff]
          %v850 = vld [vmem:[%s9 + $0x3a0] sm:$0xff]
          %v851 = vld [vmem:[%s9 + $0x3a8] sm:$0xff]
          %v852 = vld [vmem:[%s9 + $0x3b0] sm:$0xff]
          %v853 = vld [vmem:[%s9 + $0x3b8] sm:$0xff]
          %v854 = vld [vmem:[%s9 + $0x3c0] sm:$0xff]
          %v855 = vld [vmem:[%s9 + $0x3c8] sm:$0xff]
          %v856 = vld [vmem:[%s9 + $0x3d0] sm:$0xff]
          %v857 = vld [vmem:[%s9 + $0x3d8] sm:$0xff]
          %v858 = vld [vmem:[%s9 + $0x3e0] sm:$0xff]
          %v859 = vld [vmem:[%s9 + $0x3e8] sm:$0xff]
          %v860 = vld [vmem:[%s9 + $0x3f0] sm:$0xff]
          %v861 = vld [vmem:[%s9 + $0x3f8] sm:$0xff]
          %v862 = vld [vmem:[%s9 + $0x400] sm:$0xff]
          %v863 = vld [vmem:[%s9 + $0x408] sm:$0xff]
          %v864 = vld [vmem:[%s9 + $0x410] sm:$0xff]
          %v865 = vld [vmem:[%s9 + $0x418] sm:$0xff]
          %v866 = vld [vmem:[%s9 + $0x420] sm:$0xff]
          %v867 = vld [vmem:[%s9 + $0x428] sm:$0xff]
          %v868 = vld [vmem:[%s9 + $0x430] sm:$0xff]
          %v869 = vld [vmem:[%s9 + $0x438] sm:$0xff]
          %v870 = vld [vmem:[%s9 + $0x440] sm:$0xff]
          %v871 = vld [vmem:[%s9 + $0x448] sm:$0xff]
          %v872 = vld [vmem:[%s9 + $0x450] sm:$0xff]
          %v873 = vld [vmem:[%s9 + $0x458] sm:$0xff]
          %v874 = vld [vmem:[%s9 + $0x460] sm:$0xff]
          %v875 = vld [vmem:[%s9 + $0x468] sm:$0xff]
          %v876 = vld [vmem:[%s9 + $0x470] sm:$0xff]
          %v877 = vld [vmem:[%s9 + $0x478] sm:$0xff]
          %v878 = vld [vmem:[%s9 + $0x480] sm:$0xff]
          %v879 = vld [vmem:[%s9 + $0x488] sm:$0xff]
          %v880 = vld [vmem:[%s9 + $0x490] sm:$0xff]
          %v881 = vld [vmem:[%s9 + $0x498] sm:$0xff]
          %v882 = vld [vmem:[%s9 + $0x4a0] sm:$0xff]
          %v883 = vld [vmem:[%s9 + $0x4a8] sm:$0xff]
          %v884 = vld [vmem:[%s9 + $0x4b0] sm:$0xff]
          %v885 = vld [vmem:[%s9 + $0x4b8] sm:$0xff]
          %v886 = vld [vmem:[%s9 + $0x4c0] sm:$0xff]
          %v887 = vld [vmem:[%s9 + $0x4c8] sm:$0xff]
          %v888 = vld [vmem:[%s9 + $0x4d0] sm:$0xff]
          %v889 = vld [vmem:[%s9 + $0x4d8] sm:$0xff]
          %v890 = vld [vmem:[%s9 + $0x4e0] sm:$0xff]
          %v891 = vld [vmem:[%s9 + $0x4e8] sm:$0xff]
          %v892 = vld [vmem:[%s9 + $0x4f0] sm:$0xff]
          %v893 = vld [vmem:[%s9 + $0x4f8] sm:$0xff]
          %v894 = vld [vmem:[%s9 + $0x500] sm:$0xff]
          %v895 = vld [vmem:[%s9 + $0x508] sm:$0xff]
          %v896 = vld [vmem:[%s9 + $0x510] sm:$0xff]
          %v897 = vld [vmem:[%s9 + $0x518] sm:$0xff]
          %v898 = vld [vmem:[%s9 + $0x520] sm:$0xff]
          %v899 = vld [vmem:[%s9 + $0x528] sm:$0xff]
          %v900 = vld [vmem:[%s9 + $0x530] sm:$0xff]
          %v901 = vld [vmem:[%s9 + $0x538] sm:$0xff]
          %v902 = vld [vmem:[%s9 + $0x540] sm:$0xff]
          %v903 = vld [vmem:[%s9 + $0x548] sm:$0xff]
          %v904 = vld [vmem:[%s9 + $0x550] sm:$0xff]
          %v905 = vld [vmem:[%s9 + $0x558] sm:$0xff]
          %v906 = vld [vmem:[%s9 + $0x560] sm:$0xff]
          %v907 = vld [vmem:[%s9 + $0x568] sm:$0xff]
          %v908 = vld [vmem:[%s9 + $0x570] sm:$0xff]
          %v909 = vld [vmem:[%s9 + $0x578] sm:$0xff]
          %v910 = vld [vmem:[%s9 + $0x580] sm:$0xff]
          %v911 = vld [vmem:[%s9 + $0x588] sm:$0xff]
          %v912 = vld [vmem:[%s9 + $0x590] sm:$0xff]
          %v913 = vld [vmem:[%s9 + $0x598] sm:$0xff]
          %v914 = vld [vmem:[%s9 + $0x5a0] sm:$0xff]
          %v915 = vld [vmem:[%s9 + $0x5a8] sm:$0xff]
          %v916 = vld [vmem:[%s9 + $0x5b0] sm:$0xff]
          %v917 = vld [vmem:[%s9 + $0x5b8] sm:$0xff]
          %v918 = vld [vmem:[%s9 + $0x5c0] sm:$0xff]
          %v919 = vld [vmem:[%s9 + $0x5c8] sm:$0xff]
          %v920 = vld [vmem:[%s9 + $0x5d0] sm:$0xff]
          %v921 = vld [vmem:[%s9 + $0x5d8] sm:$0xff]
          %v922 = vld [vmem:[%s9 + $0x5e0] sm:$0xff]
          %v923 = vld [vmem:[%s9 + $0x5e8] sm:$0xff]
          %v924 = vld [vmem:[%s9 + $0x5f0] sm:$0xff]
          %v925 = vld [vmem:[%s9 + $0x5f8] sm:$0xff]
          %v926 = vld [vmem:[%s9 + $0x600] sm:$0xff]
          %v927 = vld [vmem:[%s9 + $0x608] sm:$0xff]
          %v928 = vld [vmem:[%s9 + $0x610] sm:$0xff]
          %v929 = vld [vmem:[%s9 + $0x618] sm:$0xff]
          %v930 = vld [vmem:[%s9 + $0x620] sm:$0xff]
          %v931 = vld [vmem:[%s9 + $0x628] sm:$0xff]
          %v932 = vld [vmem:[%s9 + $0x630] sm:$0xff]
          %v933 = vld [vmem:[%s9 + $0x638] sm:$0xff]
          %v934 = vld [vmem:[%s9 + $0x640] sm:$0xff]
          %v935 = vld [vmem:[%s9 + $0x648] sm:$0xff]
          %v936 = vld [vmem:[%s9 + $0x650] sm:$0xff]
          %v937 = vld [vmem:[%s9 + $0x658] sm:$0xff]
          %v938 = vld [vmem:[%s9 + $0x660] sm:$0xff]
          %v939 = vld [vmem:[%s9 + $0x668] sm:$0xff]
          %v940 = vld [vmem:[%s9 + $0x670] sm:$0xff]
          %v941 = vld [vmem:[%s9 + $0x678] sm:$0xff]
          %v942 = vld [vmem:[%s9 + $0x680] sm:$0xff]
          %v943 = vld [vmem:[%s9 + $0x688] sm:$0xff]
          %v944 = vld [vmem:[%s9 + $0x690] sm:$0xff]
          %v945 = vld [vmem:[%s9 + $0x698] sm:$0xff]
          %v946 = vld [vmem:[%s9 + $0x6a0] sm:$0xff]
          %v947 = vld [vmem:[%s9 + $0x6a8] sm:$0xff]
          %v948 = vld [vmem:[%s9 + $0x6b0] sm:$0xff]
          %v949 = vld [vmem:[%s9 + $0x6b8] sm:$0xff]
          %v950 = vld [vmem:[%s9 + $0x6c0] sm:$0xff]
          %v951 = vld [vmem:[%s9 + $0x6c8] sm:$0xff]
          %v952 = vld [vmem:[%s9 + $0x6d0] sm:$0xff]
          %v953 = vld [vmem:[%s9 + $0x6d8] sm:$0xff]
          %v954 = vld [vmem:[%s9 + $0x6e0] sm:$0xff]
          %v955 = vld [vmem:[%s9 + $0x6e8] sm:$0xff]
          %v956 = vld [vmem:[%s9 + $0x6f0] sm:$0xff]
          %v957 = vld [vmem:[%s9 + $0x6f8] sm:$0xff]
          %v958 = vld [vmem:[%s9 + $0x700] sm:$0xff]
          %v959 = vld [vmem:[%s9 + $0x708] sm:$0xff]
          %v960 = vld [vmem:[%s9 + $0x710] sm:$0xff]
          %v961 = vld [vmem:[%s9 + $0x718] sm:$0xff]
          %v962 = vld [vmem:[%s9 + $0x720] sm:$0xff]
          %v963 = vld [vmem:[%s9 + $0x728] sm:$0xff]
          %v964 = vld [vmem:[%s9 + $0x730] sm:$0xff]
          %v965 = vld [vmem:[%s9 + $0x738] sm:$0xff]
          %v966 = vld [vmem:[%s9 + $0x740] sm:$0xff]
          %v967 = vld [vmem:[%s9 + $0x748] sm:$0xff]
          %v968 = vld [vmem:[%s9 + $0x750] sm:$0xff]
          %v969 = vld [vmem:[%s9 + $0x758] sm:$0xff]
          %v970 = vld [vmem:[%s9 + $0x760] sm:$0xff]
          %v971 = vld [vmem:[%s9 + $0x768] sm:$0xff]
          %v972 = vld [vmem:[%s9 + $0x770] sm:$0xff]
          %v973 = vld [vmem:[%s9 + $0x778] sm:$0xff]
          %v974 = vld [vmem:[%s9 + $0x780] sm:$0xff]
          %v975 = vld [vmem:[%s9 + $0x788] sm:$0xff]
          %v976 = vld [vmem:[%s9 + $0x790] sm:$0xff]
          %v977 = vld [vmem:[%s9 + $0x798] sm:$0xff]
          %v978 = vld [vmem:[%s9 + $0x7a0] sm:$0xff]
          %v979 = vld [vmem:[%s9 + $0x7a8] sm:$0xff]
          %v980 = vld [vmem:[%s9 + $0x7b0] sm:$0xff]
          %v981 = vld [vmem:[%s9 + $0x7b8] sm:$0xff]
          %v982 = vld [vmem:[%s9 + $0x7c0] sm:$0xff]
          %v983 = vld [vmem:[%s9 + $0x7c8] sm:$0xff]
          %v984 = vld [vmem:[%s9 + $0x7d0] sm:$0xff]
          %v985 = vld [vmem:[%s9 + $0x7d8] sm:$0xff]
          %v986 = vld [vmem:[%s9 + $0x7e0] sm:$0xff]
          %v987 = vld [vmem:[%s9 + $0x7e8] sm:$0xff]
          %v988 = vld [vmem:[%s9 + $0x7f0] sm:$0xff]
          %v989 = vld [vmem:[%s9 + $0x7f8] sm:$0xff]
          %v990 = vld [vmem:[%s9 + $0x800] sm:$0xff]
          %v991 = vld [vmem:[%s9 + $0x808] sm:$0xff]
          %v992 = vld [vmem:[%s9 + $0x810] sm:$0xff]
          %v993 = vld [vmem:[%s9 + $0x818] sm:$0xff]
          %v994 = vld [vmem:[%s9 + $0x820] sm:$0xff]
          %v995 = vld [vmem:[%s9 + $0x828] sm:$0xff]
          %v996 = vld [vmem:[%s9 + $0x830] sm:$0xff]
          %v997 = vld [vmem:[%s9 + $0x838] sm:$0xff]
          %v998 = vld [vmem:[%s9 + $0x840] sm:$0xff]
          %v999 = vld [vmem:[%s9 + $0x848] sm:$0xff]
          %v1000 = vld [vmem:[%s9 + $0x850] sm:$0xff]
          %v1001 = vld [vmem:[%s9 + $0x858] sm:$0xff]
          %v1002 = vld [vmem:[%s9 + $0x860] sm:$0xff]
          %v1003 = vld [vmem:[%s9 + $0x868] sm:$0xff]
          %v1004 = vld [vmem:[%s9 + $0x870] sm:$0xff]
          %v1005 = vld [vmem:[%s9 + $0x878] sm:$0xff]
          %v1006 = vld [vmem:[%s9 + $0x880] sm:$0xff]
          %v1007 = vld [vmem:[%s9 + $0x888] sm:$0xff]
          %v1008 = vld [vmem:[%s9 + $0x890] sm:$0xff]
          %v1009 = vld [vmem:[%s9 + $0x898] sm:$0xff]
          %v1010 = vld [vmem:[%s9 + $0x8a0] sm:$0xff]
          %v1011 = vld [vmem:[%s9 + $0x8a8] sm:$0xff]
          %v1012 = vld [vmem:[%s9 + $0x8b0] sm:$0xff]
          %v1013 = vld [vmem:[%s9 + $0x8b8] sm:$0xff]
          %v1014 = vld [vmem:[%s9 + $0x8c0] sm:$0xff]
          %v1015 = vld [vmem:[%s9 + $0x8c8] sm:$0xff]
          %v1016 = vld [vmem:[%s9 + $0x8d0] sm:$0xff]
          %v1017 = vld [vmem:[%s9 + $0x8d8] sm:$0xff]
          %v1018 = vld [vmem:[%s9 + $0x8e0] sm:$0xff]
          %v1019 = vld [vmem:[%s9 + $0x8e8] sm:$0xff]
          %v1020 = vld [vmem:[%s9 + $0x8f0] sm:$0xff]
          %v1021 = vld [vmem:[%s9 + $0x8f8] sm:$0xff]
          %v1022 = vld [vmem:[%s9 + $0x900] sm:$0xff]
          %v1023 = vld [vmem:[%s9 + $0x908] sm:$0xff]
          %v1024 = vld [vmem:[%s9 + $0x910] sm:$0xff]
          %v1025 = vld [vmem:[%s9 + $0x918] sm:$0xff]
          %v1026 = vld [vmem:[%s9 + $0x920] sm:$0xff]
          %v1027 = vld [vmem:[%s9 + $0x928] sm:$0xff]
          %v1028 = vld [vmem:[%s9 + $0x930] sm:$0xff]
          %v1029 = vld [vmem:[%s9 + $0x938] sm:$0xff]
          %v1030 = vld [vmem:[%s9 + $0x940] sm:$0xff]
          %v1031 = vld [vmem:[%s9 + $0x948] sm:$0xff]
          %v1032 = vld [vmem:[%s9 + $0x950] sm:$0xff]
          %v1033 = vld [vmem:[%s9 + $0x958] sm:$0xff]
          %v1034 = vld [vmem:[%s9 + $0x960] sm:$0xff]
          %v1035 = vld [vmem:[%s9 + $0x968] sm:$0xff]
          %v1036 = vld [vmem:[%s9 + $0x970] sm:$0xff]
          %v1037 = vld [vmem:[%s9 + $0x978] sm:$0xff]
          %v1038 = vld [vmem:[%s9 + $0x980] sm:$0xff]
          %v1039 = vld [vmem:[%s9 + $0x988] sm:$0xff]
          %v1040 = vld [vmem:[%s9 + $0x990] sm:$0xff]
          %v1041 = vld [vmem:[%s9 + $0x998] sm:$0xff]
          %v1042 = vld [vmem:[%s9 + $0x9a0] sm:$0xff]
          %v1043 = vld [vmem:[%s9 + $0x9a8] sm:$0xff]
          %v1044 = vld [vmem:[%s9 + $0x9b0] sm:$0xff]
          %v1045 = vld [vmem:[%s9 + $0x9b8] sm:$0xff]
          %v1046 = vld [vmem:[%s9 + $0x9c0] sm:$0xff]
          %v1047 = vld [vmem:[%s9 + $0x9c8] sm:$0xff]
          %v1048 = vld [vmem:[%s9 + $0x9d0] sm:$0xff]
          %v1049 = vld [vmem:[%s9 + $0x9d8] sm:$0xff]
          %v1050 = vld [vmem:[%s9 + $0x9e0] sm:$0xff]
          %v1051 = vld [vmem:[%s9 + $0x9e8] sm:$0xff]
          %v1052 = vld [vmem:[%s9 + $0x9f0] sm:$0xff]
          %v1053 = vld [vmem:[%s9 + $0x9f8] sm:$0xff]
          %v1054 = vld [vmem:[%s9 + $0xa00] sm:$0xff]
          %v1055 = vld [vmem:[%s9 + $0xa08] sm:$0xff]
          %v1056 = vld [vmem:[%s9 + $0xa10] sm:$0xff]
          %v1057 = vld [vmem:[%s9 + $0xa18] sm:$0xff]
          %v1058 = vld [vmem:[%s9 + $0xa20] sm:$0xff]
          %v1059 = vld [vmem:[%s9 + $0xa28] sm:$0xff]
          %v1060 = vld [vmem:[%s9 + $0xa30] sm:$0xff]
          %v1061 = vld [vmem:[%s9 + $0xa38] sm:$0xff]
          %v1062 = vld [vmem:[%s9 + $0xa40] sm:$0xff]
          %v1063 = vld [vmem:[%s9 + $0xa48] sm:$0xff]
          %v1064 = vld [vmem:[%s9 + $0xa50] sm:$0xff]
          %v1065 = vld [vmem:[%s9 + $0xa58] sm:$0xff]
          %v1066 = vld [vmem:[%s9 + $0xa60] sm:$0xff]
          %v1067 = vld [vmem:[%s9 + $0xa68] sm:$0xff]
          %v1068 = vld [vmem:[%s9 + $0xa70] sm:$0xff]
          %v1069 = vld [vmem:[%s9 + $0xa78] sm:$0xff]
          %v1070 = vld [vmem:[%s9 + $0xa80] sm:$0xff]
          %v1071 = vld [vmem:[%s9 + $0xa88] sm:$0xff]
          %v1072 = vld [vmem:[%s9 + $0xa90] sm:$0xff]
          %v1073 = vld [vmem:[%s9 + $0xa98] sm:$0xff]
          %v1074 = vld [vmem:[%s9 + $0xaa0] sm:$0xff]
          %v1075 = vld [vmem:[%s9 + $0xaa8] sm:$0xff]
          %v1076 = vld [vmem:[%s9 + $0xab0] sm:$0xff]
          %v1077 = vld [vmem:[%s9 + $0xab8] sm:$0xff]
          %v1078 = vld [vmem:[%s9 + $0xac0] sm:$0xff]
          %v1079 = vld [vmem:[%s9 + $0xac8] sm:$0xff]
          %v1080 = vld [vmem:[%s9 + $0xad0] sm:$0xff]
          %v1081 = vld [vmem:[%s9 + $0xad8] sm:$0xff]
          %v1082 = vld [vmem:[%s9 + $0xae0] sm:$0xff]
          %v1083 = vld [vmem:[%s9 + $0xae8] sm:$0xff]
          %v1084 = vld [vmem:[%s9 + $0xaf0] sm:$0xff]
          %v1085 = vld [vmem:[%s9 + $0xaf8] sm:$0xff]
          %v1086 = vld [vmem:[%s9 + $0xb00] sm:$0xff]
          %v1087 = vld [vmem:[%s9 + $0xb08] sm:$0xff]
          %v1088 = vld [vmem:[%s9 + $0xb10] sm:$0xff]
          %v1089 = vld [vmem:[%s9 + $0xb18] sm:$0xff]
          %v1090 = vld [vmem:[%s9 + $0xb20] sm:$0xff]
          %v1091 = vld [vmem:[%s9 + $0xb28] sm:$0xff]
          %v1092 = vld [vmem:[%s9 + $0xb30] sm:$0xff]
          %v1093 = vld [vmem:[%s9 + $0xb38] sm:$0xff]
          %v1094 = vld [vmem:[%s9 + $0xb40] sm:$0xff]
          %v1095 = vld [vmem:[%s9 + $0xb48] sm:$0xff]
          %v1096 = vld [vmem:[%s9 + $0xb50] sm:$0xff]
          %v1097 = vld [vmem:[%s9 + $0xb58] sm:$0xff]
          %v1098 = vld [vmem:[%s9 + $0xb60] sm:$0xff]
          %v1099 = vld [vmem:[%s9 + $0xb68] sm:$0xff]
          %v1100 = vld [vmem:[%s9 + $0xb70] sm:$0xff]
          %v1101 = vld [vmem:[%s9 + $0xb78] sm:$0xff]
          %v1102 = vld [vmem:[%s9 + $0xb80] sm:$0xff]
          %v1103 = vld [vmem:[%s9 + $0xb88] sm:$0xff]
          %v1104 = vld [vmem:[%s9 + $0xb90] sm:$0xff]
          %v1105 = vld [vmem:[%s9 + $0xb98] sm:$0xff]
          %v1106 = vld [vmem:[%s9 + $0xba0] sm:$0xff]
          %v1107 = vld [vmem:[%s9 + $0xba8] sm:$0xff]
          %v1108 = vld [vmem:[%s9 + $0xbb0] sm:$0xff]
          %v1109 = vld [vmem:[%s9 + $0xbb8] sm:$0xff]
          %v1110 = vld [vmem:[%s9 + $0xbc0] sm:$0xff]
          %v1111 = vld [vmem:[%s9 + $0xbc8] sm:$0xff]
          %v1112 = vld [vmem:[%s9 + $0xbd0] sm:$0xff]
          %v1113 = vld [vmem:[%s9 + $0xbd8] sm:$0xff]
          %v1114 = vld [vmem:[%s9 + $0xbe0] sm:$0xff]
          %v1115 = vld [vmem:[%s9 + $0xbe8] sm:$0xff]
          %v1116 = vld [vmem:[%s9 + $0xbf0] sm:$0xff]
          %v1117 = vld [vmem:[%s9 + $0xbf8] sm:$0xff]
          %v1118 = vld [vmem:[%s10] sm:$0xff]
          %v1119 = vld [vmem:[%s10 + $0x8] sm:$0xff]
          %v1120 = vld [vmem:[%s10 + $0x10] sm:$0xff]
          %v1124 = vlaneseq
          %v1125 = vshrl.u32 %v1124, 7
          %v1126 = vsub.s32 0, %v1125
          %v1127 = vrot.slane %v1118, %v1126
          %v1128 = vlaneseq
          %v1129 = vshrl.u32 %v1128, 7
          %v1130 = vsub.s32 1, %v1129
          %v1131 = vrot.slane %v1118, %v1130
          %v1132 = vlaneseq
          %v1133 = vshrl.u32 %v1132, 7
          %v1134 = vsub.s32 2, %v1133
          %v1135 = vrot.slane %v1118, %v1134
          %v1136 = vlaneseq
          %v1137 = vshrl.u32 %v1136, 7
          %v1138 = vsub.s32 3, %v1137
          %v1139 = vrot.slane %v1118, %v1138
          %v1140 = vlaneseq
          %v1141 = vshrl.u32 %v1140, 7
          %v1142 = vsub.s32 4, %v1141
          %v1143 = vrot.slane %v1118, %v1142
          %v1144 = vlaneseq
          %v1145 = vshrl.u32 %v1144, 7
          %v1146 = vsub.s32 5, %v1145
          %v1147 = vrot.slane %v1118, %v1146
          %v1148 = vlaneseq
          %v1149 = vshrl.u32 %v1148, 7
          %v1150 = vsub.s32 6, %v1149
          %v1151 = vrot.slane %v1118, %v1150
          %v1152 = vlaneseq
          %v1153 = vshrl.u32 %v1152, 7
          %v1154 = vsub.s32 7, %v1153
          %v1155 = vrot.slane %v1118, %v1154
          %v1156 = vlaneseq
          %v1157 = vshrl.u32 %v1156, 7
          %v1158 = vsub.s32 0, %v1157
          %v1159 = vrot.slane %v1119, %v1158
          %v1160 = vlaneseq
          %v1161 = vshrl.u32 %v1160, 7
          %v1162 = vsub.s32 1, %v1161
          %v1163 = vrot.slane %v1119, %v1162
          %v1164 = vlaneseq
          %v1165 = vshrl.u32 %v1164, 7
          %v1166 = vsub.s32 2, %v1165
          %v1167 = vrot.slane %v1119, %v1166
          %v1168 = vlaneseq
          %v1169 = vshrl.u32 %v1168, 7
          %v1170 = vsub.s32 3, %v1169
          %v1171 = vrot.slane %v1119, %v1170
          %v1172 = vlaneseq
          %v1173 = vshrl.u32 %v1172, 7
          %v1174 = vsub.s32 4, %v1173
          %v1175 = vrot.slane %v1119, %v1174
          %v1176 = vlaneseq
          %v1177 = vshrl.u32 %v1176, 7
          %v1178 = vsub.s32 5, %v1177
          %v1179 = vrot.slane %v1119, %v1178
          %v1180 = vlaneseq
          %v1181 = vshrl.u32 %v1180, 7
          %v1182 = vsub.s32 6, %v1181
          %v1183 = vrot.slane %v1119, %v1182
          %v1184 = vlaneseq
          %v1185 = vshrl.u32 %v1184, 7
          %v1186 = vsub.s32 7, %v1185
          %v1187 = vrot.slane %v1119, %v1186
          %v1188 = vlaneseq
          %v1189 = vshrl.u32 %v1188, 7
          %v1190 = vsub.s32 0, %v1189
          %v1191 = vrot.slane %v1120, %v1190
          %v1192 = vlaneseq
          %v1193 = vshrl.u32 %v1192, 7
          %v1194 = vsub.s32 1, %v1193
          %v1195 = vrot.slane %v1120, %v1194
          %v1196 = vlaneseq
          %v1197 = vshrl.u32 %v1196, 7
          %v1198 = vsub.s32 2, %v1197
          %v1199 = vrot.slane %v1120, %v1198
          %v1200 = vlaneseq
          %v1201 = vshrl.u32 %v1200, 7
          %v1202 = vsub.s32 3, %v1201
          %v1203 = vrot.slane %v1120, %v1202
          %v1204 = vlaneseq
          %v1205 = vshrl.u32 %v1204, 7
          %v1206 = vsub.s32 4, %v1205
          %v1207 = vrot.slane %v1120, %v1206
          %v1208 = vlaneseq
          %v1209 = vshrl.u32 %v1208, 7
          %v1210 = vsub.s32 5, %v1209
          %v1211 = vrot.slane %v1120, %v1210
          %v1212 = vlaneseq
          %v1213 = vshrl.u32 %v1212, 7
          %v1214 = vsub.s32 6, %v1213
          %v1215 = vrot.slane %v1120, %v1214
          %v1216 = vlaneseq
          %v1217 = vshrl.u32 %v1216, 7
          %v1218 = vsub.s32 7, %v1217
          %v1219 = vrot.slane %v1120, %v1218
          %1244 = vmatprep.subr.mxu0 %v735
          %1245 = vmatpush1.msra.mxu0 %v734
          %1246 = vmatprep.subr.mxu0 %v759
          %1247 = vmatpush1.msra.mxu0 %v758
          %1248 = vmatprep.subr.mxu0 %v783
          %1249 = vmatpush1.msra.mxu0 %v782
          %1250 = vmatprep.subr.mxu0 %v807
          %1251 = vmatpush1.msra.mxu0 %v806
          %1252 = vmatprep.subr.mxu0 %v831
          %1253 = vmatpush1.msra.mxu0 %v830
          %1254 = vmatprep.subr.mxu0 %v855
          %1255 = vmatpush1.msra.mxu0 %v854
          %1256 = vmatprep.subr.mxu0 %v879
          %1257 = vmatpush1.msra.mxu0 %v878
          %1258 = vmatprep.subr.mxu0 %v903
          %1259 = vmatpush1.msra.mxu0 %v902
          %1260 = vmatprep.subr.mxu0 %v927
          %1261 = vmatpush1.msra.mxu0 %v926
          %1262 = vmatprep.subr.mxu0 %v951
          %1263 = vmatpush1.msra.mxu0 %v950
          %1264 = vmatprep.subr.mxu0 %v975
          %1265 = vmatpush1.msra.mxu0 %v974
          %1266 = vmatprep.subr.mxu0 %v999
          %1267 = vmatpush1.msra.mxu0 %v998
          %1268 = vmatprep.subr.mxu0 %v1023
          %1269 = vmatpush1.msra.mxu0 %v1022
          %1270 = vmatprep.subr.mxu0 %v1047
          %1271 = vmatpush1.msra.mxu0 %v1046
          %1272 = vmatprep.subr.mxu0 %v1071
          %1273 = vmatpush1.msra.mxu0 %v1070
          %1274 = vmatprep.subr.mxu0 %v1095
          %1275 = vmatpush1.msra.mxu0 %v1094
          %1276 = vmatprep.subr.mxu0 0.0
          %1277 = vmatpush1.msra.mxu0 0.0
          %1278 = vmatprep.subr.mxu0 0.0
          %1279 = vmatpush1.msra.mxu0 0.0
          %1280 = vmatprep.subr.mxu0 0.0
          %1281 = vmatpush1.msra.mxu0 0.0
          %1282 = vmatprep.subr.mxu0 0.0
          %1283 = vmatpush1.msra.mxu0 0.0
          %1284 = vmatprep.subr.mxu0 0.0
          %1285 = vmatpush1.msra.mxu0 0.0
          %1286 = vmatprep.subr.mxu0 0.0
          %1287 = vmatpush1.msra.mxu0 0.0
          %1288 = vmatprep.subr.mxu0 0.0
          %1289 = vmatpush1.msra.mxu0 0.0
          %1290 = vmatprep.subr.mxu0 0.0
          %1291 = vmatpush1.msra.mxu0 0.0
          %1292 = vmatprep.subr.mxu0 0.0
          %1293 = vmatpush1.msra.mxu0 0.0
          %1294 = vmatprep.subr.mxu0 0.0
          %1295 = vmatpush1.msra.mxu0 0.0
          %1296 = vmatprep.subr.mxu0 0.0
          %1297 = vmatpush1.msra.mxu0 0.0
          %1298 = vmatprep.subr.mxu0 0.0
          %1299 = vmatpush1.msra.mxu0 0.0
          %1300 = vmatprep.subr.mxu0 0.0
          %1301 = vmatpush1.msra.mxu0 0.0
          %1302 = vmatprep.subr.mxu0 0.0
          %1303 = vmatpush1.msra.mxu0 0.0
          %1304 = vmatprep.subr.mxu0 0.0
          %1305 = vmatpush1.msra.mxu0 0.0
          %1306 = vmatprep.subr.mxu0 0.0
          %1307 = vmatpush1.msra.mxu0 0.0
          %1308 = vmatprep.mubr.f32.mxu0 0.0
          %1309 = vmatmul.mubr.f32.gmra.mrb[0].mxu0 %v733
          %v1310 = vpop.f32.mrb[0].mxu0
          %v1311 = vadd.f32 %v1127, %v1310
          %v1312 = vpop.f32.mrb[0].mxu0
          %v1313 = vadd.f32 %v1131, %v1312
          %1314 = vdwg.mxu0
          %1315 = vmatprep.subr.mxu0 %v737
          %1316 = vmatpush1.msra.mxu0 %v736
          %1317 = vmatprep.subr.mxu0 %v761
          %1318 = vmatpush1.msra.mxu0 %v760
          %1319 = vmatprep.subr.mxu0 %v785
          %1320 = vmatpush1.msra.mxu0 %v784
          %1321 = vmatprep.subr.mxu0 %v809
          %1322 = vmatpush1.msra.mxu0 %v808
          %1323 = vmatprep.subr.mxu0 %v833
          %1324 = vmatpush1.msra.mxu0 %v832
          %1325 = vmatprep.subr.mxu0 %v857
          %1326 = vmatpush1.msra.mxu0 %v856
          %1327 = vmatprep.subr.mxu0 %v881
          %1328 = vmatpush1.msra.mxu0 %v880
          %1329 = vmatprep.subr.mxu0 %v905
          %1330 = vmatpush1.msra.mxu0 %v904
          %1331 = vmatprep.subr.mxu0 %v929
          %1332 = vmatpush1.msra.mxu0 %v928
          %1333 = vmatprep.subr.mxu0 %v953
          %1334 = vmatpush1.msra.mxu0 %v952
          %1335 = vmatprep.subr.mxu0 %v977
          %1336 = vmatpush1.msra.mxu0 %v976
          %1337 = vmatprep.subr.mxu0 %v1001
          %1338 = vmatpush1.msra.mxu0 %v1000
          %1339 = vmatprep.subr.mxu0 %v1025
          %1340 = vmatpush1.msra.mxu0 %v1024
          %1341 = vmatprep.subr.mxu0 %v1049
          %1342 = vmatpush1.msra.mxu0 %v1048
          %1343 = vmatprep.subr.mxu0 %v1073
          %1344 = vmatpush1.msra.mxu0 %v1072
          %1345 = vmatprep.subr.mxu0 %v1097
          %1346 = vmatpush1.msra.mxu0 %v1096
          %1347 = vmatprep.subr.mxu0 0.0
          %1348 = vmatpush1.msra.mxu0 0.0
          %1349 = vmatprep.subr.mxu0 0.0
          %1350 = vmatpush1.msra.mxu0 0.0
          %1351 = vmatprep.subr.mxu0 0.0
          %1352 = vmatpush1.msra.mxu0 0.0
          %1353 = vmatprep.subr.mxu0 0.0
          %1354 = vmatpush1.msra.mxu0 0.0
          %1355 = vmatprep.subr.mxu0 0.0
          %1356 = vmatpush1.msra.mxu0 0.0
          %1357 = vmatprep.subr.mxu0 0.0
          %1358 = vmatpush1.msra.mxu0 0.0
          %1359 = vmatprep.subr.mxu0 0.0
          %1360 = vmatpush1.msra.mxu0 0.0
          %1361 = vmatprep.subr.mxu0 0.0
          %1362 = vmatpush1.msra.mxu0 0.0
          %1363 = vmatprep.subr.mxu0 0.0
          %1364 = vmatpush1.msra.mxu0 0.0
          %1365 = vmatprep.subr.mxu0 0.0
          %1366 = vmatpush1.msra.mxu0 0.0
          %1367 = vmatprep.subr.mxu0 0.0
          %1368 = vmatpush1.msra.mxu0 0.0
          %1369 = vmatprep.subr.mxu0 0.0
          %1370 = vmatpush1.msra.mxu0 0.0
          %1371 = vmatprep.subr.mxu0 0.0
          %1372 = vmatpush1.msra.mxu0 0.0
          %1373 = vmatprep.subr.mxu0 0.0
          %1374 = vmatpush1.msra.mxu0 0.0
          %1375 = vmatprep.subr.mxu0 0.0
          %1376 = vmatpush1.msra.mxu0 0.0
          %1377 = vmatprep.subr.mxu0 0.0
          %1378 = vmatpush1.msra.mxu0 0.0
          %1379 = vmatprep.mubr.f32.mxu0 0.0
          %1380 = vmatmul.mubr.f32.gmra.mrb[0].mxu0 %v733
          %v1381 = vpop.f32.mrb[0].mxu0
          %v1382 = vadd.f32 %v1135, %v1381
          %v1383 = vpop.f32.mrb[0].mxu0
          %v1384 = vadd.f32 %v1139, %v1383
          %1385 = vdwg.mxu0
          %1386 = vmatprep.subr.mxu0 %v739
          %1387 = vmatpush1.msra.mxu0 %v738
          %1388 = vmatprep.subr.mxu0 %v763
          %1389 = vmatpush1.msra.mxu0 %v762
          %1390 = vmatprep.subr.mxu0 %v787
          %1391 = vmatpush1.msra.mxu0 %v786
          %1392 = vmatprep.subr.mxu0 %v811
          %1393 = vmatpush1.msra.mxu0 %v810
          %1394 = vmatprep.subr.mxu0 %v835
          %1395 = vmatpush1.msra.mxu0 %v834
          %1396 = vmatprep.subr.mxu0 %v859
          %1397 = vmatpush1.msra.mxu0 %v858
          %1398 = vmatprep.subr.mxu0 %v883
          %1399 = vmatpush1.msra.mxu0 %v882
          %1400 = vmatprep.subr.mxu0 %v907
          %1401 = vmatpush1.msra.mxu0 %v906
          %1402 = vmatprep.subr.mxu0 %v931
          %1403 = vmatpush1.msra.mxu0 %v930
          %1404 = vmatprep.subr.mxu0 %v955
          %1405 = vmatpush1.msra.mxu0 %v954
          %1406 = vmatprep.subr.mxu0 %v979
          %1407 = vmatpush1.msra.mxu0 %v978
          %1408 = vmatprep.subr.mxu0 %v1003
          %1409 = vmatpush1.msra.mxu0 %v1002
          %1410 = vmatprep.subr.mxu0 %v1027
          %1411 = vmatpush1.msra.mxu0 %v1026
          %1412 = vmatprep.subr.mxu0 %v1051
          %1413 = vmatpush1.msra.mxu0 %v1050
          %1414 = vmatprep.subr.mxu0 %v1075
          %1415 = vmatpush1.msra.mxu0 %v1074
          %1416 = vmatprep.subr.mxu0 %v1099
          %1417 = vmatpush1.msra.mxu0 %v1098
          %1418 = vmatprep.subr.mxu0 0.0
          %1419 = vmatpush1.msra.mxu0 0.0
          %1420 = vmatprep.subr.mxu0 0.0
          %1421 = vmatpush1.msra.mxu0 0.0
          %1422 = vmatprep.subr.mxu0 0.0
          %1423 = vmatpush1.msra.mxu0 0.0
          %1424 = vmatprep.subr.mxu0 0.0
          %1425 = vmatpush1.msra.mxu0 0.0
          %1426 = vmatprep.subr.mxu0 0.0
          %1427 = vmatpush1.msra.mxu0 0.0
          %1428 = vmatprep.subr.mxu0 0.0
          %1429 = vmatpush1.msra.mxu0 0.0
          %1430 = vmatprep.subr.mxu0 0.0
          %1431 = vmatpush1.msra.mxu0 0.0
          %1432 = vmatprep.subr.mxu0 0.0
          %1433 = vmatpush1.msra.mxu0 0.0
          %1434 = vmatprep.subr.mxu0 0.0
          %1435 = vmatpush1.msra.mxu0 0.0
          %1436 = vmatprep.subr.mxu0 0.0
          %1437 = vmatpush1.msra.mxu0 0.0
          %1438 = vmatprep.subr.mxu0 0.0
          %1439 = vmatpush1.msra.mxu0 0.0
          %1440 = vmatprep.subr.mxu0 0.0
          %1441 = vmatpush1.msra.mxu0 0.0
          %1442 = vmatprep.subr.mxu0 0.0
          %1443 = vmatpush1.msra.mxu0 0.0
          %1444 = vmatprep.subr.mxu0 0.0
          %1445 = vmatpush1.msra.mxu0 0.0
          %1446 = vmatprep.subr.mxu0 0.0
          %1447 = vmatpush1.msra.mxu0 0.0
          %1448 = vmatprep.subr.mxu0 0.0
          %1449 = vmatpush1.msra.mxu0 0.0
          %1450 = vmatprep.mubr.f32.mxu0 0.0
          %1451 = vmatmul.mubr.f32.gmra.mrb[0].mxu0 %v733
          %v1452 = vpop.f32.mrb[0].mxu0
          %v1453 = vadd.f32 %v1143, %v1452
          %v1454 = vpop.f32.mrb[0].mxu0
          %v1455 = vadd.f32 %v1147, %v1454
          %1456 = vdwg.mxu0
          %1457 = vmatprep.subr.mxu0 %v741
          %1458 = vmatpush1.msra.mxu0 %v740
          %1459 = vmatprep.subr.mxu0 %v765
          %1460 = vmatpush1.msra.mxu0 %v764
          %1461 = vmatprep.subr.mxu0 %v789
          %1462 = vmatpush1.msra.mxu0 %v788
          %1463 = vmatprep.subr.mxu0 %v813
          %1464 = vmatpush1.msra.mxu0 %v812
          %1465 = vmatprep.subr.mxu0 %v837
          %1466 = vmatpush1.msra.mxu0 %v836
          %1467 = vmatprep.subr.mxu0 %v861
          %1468 = vmatpush1.msra.mxu0 %v860
          %1469 = vmatprep.subr.mxu0 %v885
          %1470 = vmatpush1.msra.mxu0 %v884
          %1471 = vmatprep.subr.mxu0 %v909
          %1472 = vmatpush1.msra.mxu0 %v908
          %1473 = vmatprep.subr.mxu0 %v933
          %1474 = vmatpush1.msra.mxu0 %v932
          %1475 = vmatprep.subr.mxu0 %v957
          %1476 = vmatpush1.msra.mxu0 %v956
          %1477 = vmatprep.subr.mxu0 %v981
          %1478 = vmatpush1.msra.mxu0 %v980
          %1479 = vmatprep.subr.mxu0 %v1005
          %1480 = vmatpush1.msra.mxu0 %v1004
          %1481 = vmatprep.subr.mxu0 %v1029
          %1482 = vmatpush1.msra.mxu0 %v1028
          %1483 = vmatprep.subr.mxu0 %v1053
          %1484 = vmatpush1.msra.mxu0 %v1052
          %1485 = vmatprep.subr.mxu0 %v1077
          %1486 = vmatpush1.msra.mxu0 %v1076
          %1487 = vmatprep.subr.mxu0 %v1101
          %1488 = vmatpush1.msra.mxu0 %v1100
          %1489 = vmatprep.subr.mxu0 0.0
          %1490 = vmatpush1.msra.mxu0 0.0
          %1491 = vmatprep.subr.mxu0 0.0
          %1492 = vmatpush1.msra.mxu0 0.0
          %1493 = vmatprep.subr.mxu0 0.0
          %1494 = vmatpush1.msra.mxu0 0.0
          %1495 = vmatprep.subr.mxu0 0.0
          %1496 = vmatpush1.msra.mxu0 0.0
          %1497 = vmatprep.subr.mxu0 0.0
          %1498 = vmatpush1.msra.mxu0 0.0
          %1499 = vmatprep.subr.mxu0 0.0
          %1500 = vmatpush1.msra.mxu0 0.0
          %1501 = vmatprep.subr.mxu0 0.0
          %1502 = vmatpush1.msra.mxu0 0.0
          %1503 = vmatprep.subr.mxu0 0.0
          %1504 = vmatpush1.msra.mxu0 0.0
          %1505 = vmatprep.subr.mxu0 0.0
          %1506 = vmatpush1.msra.mxu0 0.0
          %1507 = vmatprep.subr.mxu0 0.0
          %1508 = vmatpush1.msra.mxu0 0.0
          %1509 = vmatprep.subr.mxu0 0.0
          %1510 = vmatpush1.msra.mxu0 0.0
          %1511 = vmatprep.subr.mxu0 0.0
          %1512 = vmatpush1.msra.mxu0 0.0
          %1513 = vmatprep.subr.mxu0 0.0
          %1514 = vmatpush1.msra.mxu0 0.0
          %1515 = vmatprep.subr.mxu0 0.0
          %1516 = vmatpush1.msra.mxu0 0.0
          %1517 = vmatprep.subr.mxu0 0.0
          %1518 = vmatpush1.msra.mxu0 0.0
          %1519 = vmatprep.subr.mxu0 0.0
          %1520 = vmatpush1.msra.mxu0 0.0
          %1521 = vmatprep.mubr.f32.mxu0 0.0
          %1522 = vmatmul.mubr.f32.gmra.mrb[0].mxu0 %v733
          %v1523 = vpop.f32.mrb[0].mxu0
          %v1524 = vadd.f32 %v1151, %v1523
          %v1525 = vpop.f32.mrb[0].mxu0
          %v1526 = vadd.f32 %v1155, %v1525
          %1527 = vdwg.mxu0
          %1528 = vmatprep.subr.mxu0 %v743
          %1529 = vmatpush1.msra.mxu0 %v742
          %1530 = vmatprep.subr.mxu0 %v767
          %1531 = vmatpush1.msra.mxu0 %v766
          %1532 = vmatprep.subr.mxu0 %v791
          %1533 = vmatpush1.msra.mxu0 %v790
          %1534 = vmatprep.subr.mxu0 %v815
          %1535 = vmatpush1.msra.mxu0 %v814
          %1536 = vmatprep.subr.mxu0 %v839
          %1537 = vmatpush1.msra.mxu0 %v838
          %1538 = vmatprep.subr.mxu0 %v863
          %1539 = vmatpush1.msra.mxu0 %v862
          %1540 = vmatprep.subr.mxu0 %v887
          %1541 = vmatpush1.msra.mxu0 %v886
          %1542 = vmatprep.subr.mxu0 %v911
          %1543 = vmatpush1.msra.mxu0 %v910
          %1544 = vmatprep.subr.mxu0 %v935
          %1545 = vmatpush1.msra.mxu0 %v934
          %1546 = vmatprep.subr.mxu0 %v959
          %1547 = vmatpush1.msra.mxu0 %v958
          %1548 = vmatprep.subr.mxu0 %v983
          %1549 = vmatpush1.msra.mxu0 %v982
          %1550 = vmatprep.subr.mxu0 %v1007
          %1551 = vmatpush1.msra.mxu0 %v1006
          %1552 = vmatprep.subr.mxu0 %v1031
          %1553 = vmatpush1.msra.mxu0 %v1030
          %1554 = vmatprep.subr.mxu0 %v1055
          %1555 = vmatpush1.msra.mxu0 %v1054
          %1556 = vmatprep.subr.mxu0 %v1079
          %1557 = vmatpush1.msra.mxu0 %v1078
          %1558 = vmatprep.subr.mxu0 %v1103
          %1559 = vmatpush1.msra.mxu0 %v1102
          %1560 = vmatprep.subr.mxu0 0.0
          %1561 = vmatpush1.msra.mxu0 0.0
          %1562 = vmatprep.subr.mxu0 0.0
          %1563 = vmatpush1.msra.mxu0 0.0
          %1564 = vmatprep.subr.mxu0 0.0
          %1565 = vmatpush1.msra.mxu0 0.0
          %1566 = vmatprep.subr.mxu0 0.0
          %1567 = vmatpush1.msra.mxu0 0.0
          %1568 = vmatprep.subr.mxu0 0.0
          %1569 = vmatpush1.msra.mxu0 0.0
          %1570 = vmatprep.subr.mxu0 0.0
          %1571 = vmatpush1.msra.mxu0 0.0
          %1572 = vmatprep.subr.mxu0 0.0
          %1573 = vmatpush1.msra.mxu0 0.0
          %1574 = vmatprep.subr.mxu0 0.0
          %1575 = vmatpush1.msra.mxu0 0.0
          %1576 = vmatprep.subr.mxu0 0.0
          %1577 = vmatpush1.msra.mxu0 0.0
          %1578 = vmatprep.subr.mxu0 0.0
          %1579 = vmatpush1.msra.mxu0 0.0
          %1580 = vmatprep.subr.mxu0 0.0
          %1581 = vmatpush1.msra.mxu0 0.0
          %1582 = vmatprep.subr.mxu0 0.0
          %1583 = vmatpush1.msra.mxu0 0.0
          %1584 = vmatprep.subr.mxu0 0.0
          %1585 = vmatpush1.msra.mxu0 0.0
          %1586 = vmatprep.subr.mxu0 0.0
          %1587 = vmatpush1.msra.mxu0 0.0
          %1588 = vmatprep.subr.mxu0 0.0
          %1589 = vmatpush1.msra.mxu0 0.0
          %1590 = vmatprep.subr.mxu0 0.0
          %1591 = vmatpush1.msra.mxu0 0.0
          %1592 = vmatprep.mubr.f32.mxu0 0.0
          %1593 = vmatmul.mubr.f32.gmra.mrb[0].mxu0 %v733
          %v1594 = vpop.f32.mrb[0].mxu0
          %v1595 = vadd.f32 %v1159, %v1594
          %v1596 = vpop.f32.mrb[0].mxu0
          %v1597 = vadd.f32 %v1163, %v1596
          %1598 = vdwg.mxu0
          %1599 = vmatprep.subr.mxu0 %v745
          %1600 = vmatpush1.msra.mxu0 %v744
          %1601 = vmatprep.subr.mxu0 %v769
          %1602 = vmatpush1.msra.mxu0 %v768
          %1603 = vmatprep.subr.mxu0 %v793
          %1604 = vmatpush1.msra.mxu0 %v792
          %1605 = vmatprep.subr.mxu0 %v817
          %1606 = vmatpush1.msra.mxu0 %v816
          %1607 = vmatprep.subr.mxu0 %v841
          %1608 = vmatpush1.msra.mxu0 %v840
          %1609 = vmatprep.subr.mxu0 %v865
          %1610 = vmatpush1.msra.mxu0 %v864
          %1611 = vmatprep.subr.mxu0 %v889
          %1612 = vmatpush1.msra.mxu0 %v888
          %1613 = vmatprep.subr.mxu0 %v913
          %1614 = vmatpush1.msra.mxu0 %v912
          %1615 = vmatprep.subr.mxu0 %v937
          %1616 = vmatpush1.msra.mxu0 %v936
          %1617 = vmatprep.subr.mxu0 %v961
          %1618 = vmatpush1.msra.mxu0 %v960
          %1619 = vmatprep.subr.mxu0 %v985
          %1620 = vmatpush1.msra.mxu0 %v984
          %1621 = vmatprep.subr.mxu0 %v1009
          %1622 = vmatpush1.msra.mxu0 %v1008
          %1623 = vmatprep.subr.mxu0 %v1033
          %1624 = vmatpush1.msra.mxu0 %v1032
          %1625 = vmatprep.subr.mxu0 %v1057
          %1626 = vmatpush1.msra.mxu0 %v1056
          %1627 = vmatprep.subr.mxu0 %v1081
          %1628 = vmatpush1.msra.mxu0 %v1080
          %1629 = vmatprep.subr.mxu0 %v1105
          %1630 = vmatpush1.msra.mxu0 %v1104
          %1631 = vmatprep.subr.mxu0 0.0
          %1632 = vmatpush1.msra.mxu0 0.0
          %1633 = vmatprep.subr.mxu0 0.0
          %1634 = vmatpush1.msra.mxu0 0.0
          %1635 = vmatprep.subr.mxu0 0.0
          %1636 = vmatpush1.msra.mxu0 0.0
          %1637 = vmatprep.subr.mxu0 0.0
          %1638 = vmatpush1.msra.mxu0 0.0
          %1639 = vmatprep.subr.mxu0 0.0
          %1640 = vmatpush1.msra.mxu0 0.0
          %1641 = vmatprep.subr.mxu0 0.0
          %1642 = vmatpush1.msra.mxu0 0.0
          %1643 = vmatprep.subr.mxu0 0.0
          %1644 = vmatpush1.msra.mxu0 0.0
          %1645 = vmatprep.subr.mxu0 0.0
          %1646 = vmatpush1.msra.mxu0 0.0
          %1647 = vmatprep.subr.mxu0 0.0
          %1648 = vmatpush1.msra.mxu0 0.0
          %1649 = vmatprep.subr.mxu0 0.0
          %1650 = vmatpush1.msra.mxu0 0.0
          %1651 = vmatprep.subr.mxu0 0.0
          %1652 = vmatpush1.msra.mxu0 0.0
          %1653 = vmatprep.subr.mxu0 0.0
          %1654 = vmatpush1.msra.mxu0 0.0
          %1655 = vmatprep.subr.mxu0 0.0
          %1656 = vmatpush1.msra.mxu0 0.0
          %1657 = vmatprep.subr.mxu0 0.0
          %1658 = vmatpush1.msra.mxu0 0.0
          %1659 = vmatprep.subr.mxu0 0.0
          %1660 = vmatpush1.msra.mxu0 0.0
          %1661 = vmatprep.subr.mxu0 0.0
          %1662 = vmatpush1.msra.mxu0 0.0
          %1663 = vmatprep.mubr.f32.mxu0 0.0
          %1664 = vmatmul.mubr.f32.gmra.mrb[0].mxu0 %v733
          %v1665 = vpop.f32.mrb[0].mxu0
          %v1666 = vadd.f32 %v1167, %v1665
          %v1667 = vpop.f32.mrb[0].mxu0
          %v1668 = vadd.f32 %v1171, %v1667
          %1669 = vdwg.mxu0
          %1670 = vmatprep.subr.mxu0 %v747
          %1671 = vmatpush1.msra.mxu0 %v746
          %1672 = vmatprep.subr.mxu0 %v771
          %1673 = vmatpush1.msra.mxu0 %v770
          %1674 = vmatprep.subr.mxu0 %v795
          %1675 = vmatpush1.msra.mxu0 %v794
          %1676 = vmatprep.subr.mxu0 %v819
          %1677 = vmatpush1.msra.mxu0 %v818
          %1678 = vmatprep.subr.mxu0 %v843
          %1679 = vmatpush1.msra.mxu0 %v842
          %1680 = vmatprep.subr.mxu0 %v867
          %1681 = vmatpush1.msra.mxu0 %v866
          %1682 = vmatprep.subr.mxu0 %v891
          %1683 = vmatpush1.msra.mxu0 %v890
          %1684 = vmatprep.subr.mxu0 %v915
          %1685 = vmatpush1.msra.mxu0 %v914
          %1686 = vmatprep.subr.mxu0 %v939
          %1687 = vmatpush1.msra.mxu0 %v938
          %1688 = vmatprep.subr.mxu0 %v963
          %1689 = vmatpush1.msra.mxu0 %v962
          %1690 = vmatprep.subr.mxu0 %v987
          %1691 = vmatpush1.msra.mxu0 %v986
          %1692 = vmatprep.subr.mxu0 %v1011
          %1693 = vmatpush1.msra.mxu0 %v1010
          %1694 = vmatprep.subr.mxu0 %v1035
          %1695 = vmatpush1.msra.mxu0 %v1034
          %1696 = vmatprep.subr.mxu0 %v1059
          %1697 = vmatpush1.msra.mxu0 %v1058
          %1698 = vmatprep.subr.mxu0 %v1083
          %1699 = vmatpush1.msra.mxu0 %v1082
          %1700 = vmatprep.subr.mxu0 %v1107
          %1701 = vmatpush1.msra.mxu0 %v1106
          %1702 = vmatprep.subr.mxu0 0.0
          %1703 = vmatpush1.msra.mxu0 0.0
          %1704 = vmatprep.subr.mxu0 0.0
          %1705 = vmatpush1.msra.mxu0 0.0
          %1706 = vmatprep.subr.mxu0 0.0
          %1707 = vmatpush1.msra.mxu0 0.0
          %1708 = vmatprep.subr.mxu0 0.0
          %1709 = vmatpush1.msra.mxu0 0.0
          %1710 = vmatprep.subr.mxu0 0.0
          %1711 = vmatpush1.msra.mxu0 0.0
          %1712 = vmatprep.subr.mxu0 0.0
          %1713 = vmatpush1.msra.mxu0 0.0
          %1714 = vmatprep.subr.mxu0 0.0
          %1715 = vmatpush1.msra.mxu0 0.0
          %1716 = vmatprep.subr.mxu0 0.0
          %1717 = vmatpush1.msra.mxu0 0.0
          %1718 = vmatprep.subr.mxu0 0.0
          %1719 = vmatpush1.msra.mxu0 0.0
          %1720 = vmatprep.subr.mxu0 0.0
          %1721 = vmatpush1.msra.mxu0 0.0
          %1722 = vmatprep.subr.mxu0 0.0
          %1723 = vmatpush1.msra.mxu0 0.0
          %1724 = vmatprep.subr.mxu0 0.0
          %1725 = vmatpush1.msra.mxu0 0.0
          %1726 = vmatprep.subr.mxu0 0.0
          %1727 = vmatpush1.msra.mxu0 0.0
          %1728 = vmatprep.subr.mxu0 0.0
          %1729 = vmatpush1.msra.mxu0 0.0
          %1730 = vmatprep.subr.mxu0 0.0
          %1731 = vmatpush1.msra.mxu0 0.0
          %1732 = vmatprep.subr.mxu0 0.0
          %1733 = vmatpush1.msra.mxu0 0.0
          %1734 = vmatprep.mubr.f32.mxu0 0.0
          %1735 = vmatmul.mubr.f32.gmra.mrb[0].mxu0 %v733
          %v1736 = vpop.f32.mrb[0].mxu0
          %v1737 = vadd.f32 %v1175, %v1736
          %v1738 = vpop.f32.mrb[0].mxu0
          %v1739 = vadd.f32 %v1179, %v1738
          %1740 = vdwg.mxu0
          %1741 = vmatprep.subr.mxu0 %v749
          %1742 = vmatpush1.msra.mxu0 %v748
          %1743 = vmatprep.subr.mxu0 %v773
          %1744 = vmatpush1.msra.mxu0 %v772
          %1745 = vmatprep.subr.mxu0 %v797
          %1746 = vmatpush1.msra.mxu0 %v796
          %1747 = vmatprep.subr.mxu0 %v821
          %1748 = vmatpush1.msra.mxu0 %v820
          %1749 = vmatprep.subr.mxu0 %v845
          %1750 = vmatpush1.msra.mxu0 %v844
          %1751 = vmatprep.subr.mxu0 %v869
          %1752 = vmatpush1.msra.mxu0 %v868
          %1753 = vmatprep.subr.mxu0 %v893
          %1754 = vmatpush1.msra.mxu0 %v892
          %1755 = vmatprep.subr.mxu0 %v917
          %1756 = vmatpush1.msra.mxu0 %v916
          %1757 = vmatprep.subr.mxu0 %v941
          %1758 = vmatpush1.msra.mxu0 %v940
          %1759 = vmatprep.subr.mxu0 %v965
          %1760 = vmatpush1.msra.mxu0 %v964
          %1761 = vmatprep.subr.mxu0 %v989
          %1762 = vmatpush1.msra.mxu0 %v988
          %1763 = vmatprep.subr.mxu0 %v1013
          %1764 = vmatpush1.msra.mxu0 %v1012
          %1765 = vmatprep.subr.mxu0 %v1037
          %1766 = vmatpush1.msra.mxu0 %v1036
          %1767 = vmatprep.subr.mxu0 %v1061
          %1768 = vmatpush1.msra.mxu0 %v1060
          %1769 = vmatprep.subr.mxu0 %v1085
          %1770 = vmatpush1.msra.mxu0 %v1084
          %1771 = vmatprep.subr.mxu0 %v1109
          %1772 = vmatpush1.msra.mxu0 %v1108
          %1773 = vmatprep.subr.mxu0 0.0
          %1774 = vmatpush1.msra.mxu0 0.0
          %1775 = vmatprep.subr.mxu0 0.0
          %1776 = vmatpush1.msra.mxu0 0.0
          %1777 = vmatprep.subr.mxu0 0.0
          %1778 = vmatpush1.msra.mxu0 0.0
          %1779 = vmatprep.subr.mxu0 0.0
          %1780 = vmatpush1.msra.mxu0 0.0
          %1781 = vmatprep.subr.mxu0 0.0
          %1782 = vmatpush1.msra.mxu0 0.0
          %1783 = vmatprep.subr.mxu0 0.0
          %1784 = vmatpush1.msra.mxu0 0.0
          %1785 = vmatprep.subr.mxu0 0.0
          %1786 = vmatpush1.msra.mxu0 0.0
          %1787 = vmatprep.subr.mxu0 0.0
          %1788 = vmatpush1.msra.mxu0 0.0
          %1789 = vmatprep.subr.mxu0 0.0
          %1790 = vmatpush1.msra.mxu0 0.0
          %1791 = vmatprep.subr.mxu0 0.0
          %1792 = vmatpush1.msra.mxu0 0.0
          %1793 = vmatprep.subr.mxu0 0.0
          %1794 = vmatpush1.msra.mxu0 0.0
          %1795 = vmatprep.subr.mxu0 0.0
          %1796 = vmatpush1.msra.mxu0 0.0
          %1797 = vmatprep.subr.mxu0 0.0
          %1798 = vmatpush1.msra.mxu0 0.0
          %1799 = vmatprep.subr.mxu0 0.0
          %1800 = vmatpush1.msra.mxu0 0.0
          %1801 = vmatprep.subr.mxu0 0.0
          %1802 = vmatpush1.msra.mxu0 0.0
          %1803 = vmatprep.subr.mxu0 0.0
          %1804 = vmatpush1.msra.mxu0 0.0
          %1805 = vmatprep.mubr.f32.mxu0 0.0
          %1806 = vmatmul.mubr.f32.gmra.mrb[0].mxu0 %v733
          %v1807 = vpop.f32.mrb[0].mxu0
          %v1808 = vadd.f32 %v1183, %v1807
          %v1809 = vpop.f32.mrb[0].mxu0
          %v1810 = vadd.f32 %v1187, %v1809
          %1811 = vdwg.mxu0
          %1812 = vmatprep.subr.mxu0 %v751
          %1813 = vmatpush1.msra.mxu0 %v750
          %1814 = vmatprep.subr.mxu0 %v775
          %1815 = vmatpush1.msra.mxu0 %v774
          %1816 = vmatprep.subr.mxu0 %v799
          %1817 = vmatpush1.msra.mxu0 %v798
          %1818 = vmatprep.subr.mxu0 %v823
          %1819 = vmatpush1.msra.mxu0 %v822
          %1820 = vmatprep.subr.mxu0 %v847
          %1821 = vmatpush1.msra.mxu0 %v846
          %1822 = vmatprep.subr.mxu0 %v871
          %1823 = vmatpush1.msra.mxu0 %v870
          %1824 = vmatprep.subr.mxu0 %v895
          %1825 = vmatpush1.msra.mxu0 %v894
          %1826 = vmatprep.subr.mxu0 %v919
          %1827 = vmatpush1.msra.mxu0 %v918
          %1828 = vmatprep.subr.mxu0 %v943
          %1829 = vmatpush1.msra.mxu0 %v942
          %1830 = vmatprep.subr.mxu0 %v967
          %1831 = vmatpush1.msra.mxu0 %v966
          %1832 = vmatprep.subr.mxu0 %v991
          %1833 = vmatpush1.msra.mxu0 %v990
          %1834 = vmatprep.subr.mxu0 %v1015
          %1835 = vmatpush1.msra.mxu0 %v1014
          %1836 = vmatprep.subr.mxu0 %v1039
          %1837 = vmatpush1.msra.mxu0 %v1038
          %1838 = vmatprep.subr.mxu0 %v1063
          %1839 = vmatpush1.msra.mxu0 %v1062
          %1840 = vmatprep.subr.mxu0 %v1087
          %1841 = vmatpush1.msra.mxu0 %v1086
          %1842 = vmatprep.subr.mxu0 %v1111
          %1843 = vmatpush1.msra.mxu0 %v1110
          %1844 = vmatprep.subr.mxu0 0.0
          %1845 = vmatpush1.msra.mxu0 0.0
          %1846 = vmatprep.subr.mxu0 0.0
          %1847 = vmatpush1.msra.mxu0 0.0
          %1848 = vmatprep.subr.mxu0 0.0
          %1849 = vmatpush1.msra.mxu0 0.0
          %1850 = vmatprep.subr.mxu0 0.0
          %1851 = vmatpush1.msra.mxu0 0.0
          %1852 = vmatprep.subr.mxu0 0.0
          %1853 = vmatpush1.msra.mxu0 0.0
          %1854 = vmatprep.subr.mxu0 0.0
          %1855 = vmatpush1.msra.mxu0 0.0
          %1856 = vmatprep.subr.mxu0 0.0
          %1857 = vmatpush1.msra.mxu0 0.0
          %1858 = vmatprep.subr.mxu0 0.0
          %1859 = vmatpush1.msra.mxu0 0.0
          %1860 = vmatprep.subr.mxu0 0.0
          %1861 = vmatpush1.msra.mxu0 0.0
          %1862 = vmatprep.subr.mxu0 0.0
          %1863 = vmatpush1.msra.mxu0 0.0
          %1864 = vmatprep.subr.mxu0 0.0
          %1865 = vmatpush1.msra.mxu0 0.0
          %1866 = vmatprep.subr.mxu0 0.0
          %1867 = vmatpush1.msra.mxu0 0.0
          %1868 = vmatprep.subr.mxu0 0.0
          %1869 = vmatpush1.msra.mxu0 0.0
          %1870 = vmatprep.subr.mxu0 0.0
          %1871 = vmatpush1.msra.mxu0 0.0
          %1872 = vmatprep.subr.mxu0 0.0
          %1873 = vmatpush1.msra.mxu0 0.0
          %1874 = vmatprep.subr.mxu0 0.0
          %1875 = vmatpush1.msra.mxu0 0.0
          %1876 = vmatprep.mubr.f32.mxu0 0.0
          %1877 = vmatmul.mubr.f32.gmra.mrb[0].mxu0 %v733
          %v1878 = vpop.f32.mrb[0].mxu0
          %v1879 = vadd.f32 %v1191, %v1878
          %v1880 = vpop.f32.mrb[0].mxu0
          %v1881 = vadd.f32 %v1195, %v1880
          %1882 = vdwg.mxu0
          %1883 = vmatprep.subr.mxu0 %v753
          %1884 = vmatpush1.msra.mxu0 %v752
          %1885 = vmatprep.subr.mxu0 %v777
          %1886 = vmatpush1.msra.mxu0 %v776
          %1887 = vmatprep.subr.mxu0 %v801
          %1888 = vmatpush1.msra.mxu0 %v800
          %1889 = vmatprep.subr.mxu0 %v825
          %1890 = vmatpush1.msra.mxu0 %v824
          %1891 = vmatprep.subr.mxu0 %v849
          %1892 = vmatpush1.msra.mxu0 %v848
          %1893 = vmatprep.subr.mxu0 %v873
          %1894 = vmatpush1.msra.mxu0 %v872
          %1895 = vmatprep.subr.mxu0 %v897
          %1896 = vmatpush1.msra.mxu0 %v896
          %1897 = vmatprep.subr.mxu0 %v921
          %1898 = vmatpush1.msra.mxu0 %v920
          %1899 = vmatprep.subr.mxu0 %v945
          %1900 = vmatpush1.msra.mxu0 %v944
          %1901 = vmatprep.subr.mxu0 %v969
          %1902 = vmatpush1.msra.mxu0 %v968
          %1903 = vmatprep.subr.mxu0 %v993
          %1904 = vmatpush1.msra.mxu0 %v992
          %1905 = vmatprep.subr.mxu0 %v1017
          %1906 = vmatpush1.msra.mxu0 %v1016
          %1907 = vmatprep.subr.mxu0 %v1041
          %1908 = vmatpush1.msra.mxu0 %v1040
          %1909 = vmatprep.subr.mxu0 %v1065
          %1910 = vmatpush1.msra.mxu0 %v1064
          %1911 = vmatprep.subr.mxu0 %v1089
          %1912 = vmatpush1.msra.mxu0 %v1088
          %1913 = vmatprep.subr.mxu0 %v1113
          %1914 = vmatpush1.msra.mxu0 %v1112
          %1915 = vmatprep.subr.mxu0 0.0
          %1916 = vmatpush1.msra.mxu0 0.0
          %1917 = vmatprep.subr.mxu0 0.0
          %1918 = vmatpush1.msra.mxu0 0.0
          %1919 = vmatprep.subr.mxu0 0.0
          %1920 = vmatpush1.msra.mxu0 0.0
          %1921 = vmatprep.subr.mxu0 0.0
          %1922 = vmatpush1.msra.mxu0 0.0
          %1923 = vmatprep.subr.mxu0 0.0
          %1924 = vmatpush1.msra.mxu0 0.0
          %1925 = vmatprep.subr.mxu0 0.0
          %1926 = vmatpush1.msra.mxu0 0.0
          %1927 = vmatprep.subr.mxu0 0.0
          %1928 = vmatpush1.msra.mxu0 0.0
          %1929 = vmatprep.subr.mxu0 0.0
          %1930 = vmatpush1.msra.mxu0 0.0
          %1931 = vmatprep.subr.mxu0 0.0
          %1932 = vmatpush1.msra.mxu0 0.0
          %1933 = vmatprep.subr.mxu0 0.0
          %1934 = vmatpush1.msra.mxu0 0.0
          %1935 = vmatprep.subr.mxu0 0.0
          %1936 = vmatpush1.msra.mxu0 0.0
          %1937 = vmatprep.subr.mxu0 0.0
          %1938 = vmatpush1.msra.mxu0 0.0
          %1939 = vmatprep.subr.mxu0 0.0
          %1940 = vmatpush1.msra.mxu0 0.0
          %1941 = vmatprep.subr.mxu0 0.0
          %1942 = vmatpush1.msra.mxu0 0.0
          %1943 = vmatprep.subr.mxu0 0.0
          %1944 = vmatpush1.msra.mxu0 0.0
          %1945 = vmatprep.subr.mxu0 0.0
          %1946 = vmatpush1.msra.mxu0 0.0
          %1947 = vmatprep.mubr.f32.mxu0 0.0
          %1948 = vmatmul.mubr.f32.gmra.mrb[0].mxu0 %v733
          %v1949 = vpop.f32.mrb[0].mxu0
          %v1950 = vadd.f32 %v1199, %v1949
          %v1951 = vpop.f32.mrb[0].mxu0
          %v1952 = vadd.f32 %v1203, %v1951
          %1953 = vdwg.mxu0
          %1954 = vmatprep.subr.mxu0 %v755
          %1955 = vmatpush1.msra.mxu0 %v754
          %1956 = vmatprep.subr.mxu0 %v779
          %1957 = vmatpush1.msra.mxu0 %v778
          %1958 = vmatprep.subr.mxu0 %v803
          %1959 = vmatpush1.msra.mxu0 %v802
          %1960 = vmatprep.subr.mxu0 %v827
          %1961 = vmatpush1.msra.mxu0 %v826
          %1962 = vmatprep.subr.mxu0 %v851
          %1963 = vmatpush1.msra.mxu0 %v850
          %1964 = vmatprep.subr.mxu0 %v875
          %1965 = vmatpush1.msra.mxu0 %v874
          %1966 = vmatprep.subr.mxu0 %v899
          %1967 = vmatpush1.msra.mxu0 %v898
          %1968 = vmatprep.subr.mxu0 %v923
          %1969 = vmatpush1.msra.mxu0 %v922
          %1970 = vmatprep.subr.mxu0 %v947
          %1971 = vmatpush1.msra.mxu0 %v946
          %1972 = vmatprep.subr.mxu0 %v971
          %1973 = vmatpush1.msra.mxu0 %v970
          %1974 = vmatprep.subr.mxu0 %v995
          %1975 = vmatpush1.msra.mxu0 %v994
          %1976 = vmatprep.subr.mxu0 %v1019
          %1977 = vmatpush1.msra.mxu0 %v1018
          %1978 = vmatprep.subr.mxu0 %v1043
          %1979 = vmatpush1.msra.mxu0 %v1042
          %1980 = vmatprep.subr.mxu0 %v1067
          %1981 = vmatpush1.msra.mxu0 %v1066
          %1982 = vmatprep.subr.mxu0 %v1091
          %1983 = vmatpush1.msra.mxu0 %v1090
          %1984 = vmatprep.subr.mxu0 %v1115
          %1985 = vmatpush1.msra.mxu0 %v1114
          %1986 = vmatprep.subr.mxu0 0.0
          %1987 = vmatpush1.msra.mxu0 0.0
          %1988 = vmatprep.subr.mxu0 0.0
          %1989 = vmatpush1.msra.mxu0 0.0
          %1990 = vmatprep.subr.mxu0 0.0
          %1991 = vmatpush1.msra.mxu0 0.0
          %1992 = vmatprep.subr.mxu0 0.0
          %1993 = vmatpush1.msra.mxu0 0.0
          %1994 = vmatprep.subr.mxu0 0.0
          %1995 = vmatpush1.msra.mxu0 0.0
          %1996 = vmatprep.subr.mxu0 0.0
          %1997 = vmatpush1.msra.mxu0 0.0
          %1998 = vmatprep.subr.mxu0 0.0
          %1999 = vmatpush1.msra.mxu0 0.0
          %2000 = vmatprep.subr.mxu0 0.0
          %2001 = vmatpush1.msra.mxu0 0.0
          %2002 = vmatprep.subr.mxu0 0.0
          %2003 = vmatpush1.msra.mxu0 0.0
          %2004 = vmatprep.subr.mxu0 0.0
          %2005 = vmatpush1.msra.mxu0 0.0
          %2006 = vmatprep.subr.mxu0 0.0
          %2007 = vmatpush1.msra.mxu0 0.0
          %2008 = vmatprep.subr.mxu0 0.0
          %2009 = vmatpush1.msra.mxu0 0.0
          %2010 = vmatprep.subr.mxu0 0.0
          %2011 = vmatpush1.msra.mxu0 0.0
          %2012 = vmatprep.subr.mxu0 0.0
          %2013 = vmatpush1.msra.mxu0 0.0
          %2014 = vmatprep.subr.mxu0 0.0
          %2015 = vmatpush1.msra.mxu0 0.0
          %2016 = vmatprep.subr.mxu0 0.0
          %2017 = vmatpush1.msra.mxu0 0.0
          %2018 = vmatprep.mubr.f32.mxu0 0.0
          %2019 = vmatmul.mubr.f32.gmra.mrb[0].mxu0 %v733
          %v2020 = vpop.f32.mrb[0].mxu0
          %v2021 = vadd.f32 %v1207, %v2020
          %v2022 = vpop.f32.mrb[0].mxu0
          %v2023 = vadd.f32 %v1211, %v2022
          %2024 = vdwg.mxu0
          %2025 = vmatprep.subr.mxu0 %v757
          %2026 = vmatpush1.msra.mxu0 %v756
          %2027 = vmatprep.subr.mxu0 %v781
          %2028 = vmatpush1.msra.mxu0 %v780
          %2029 = vmatprep.subr.mxu0 %v805
          %2030 = vmatpush1.msra.mxu0 %v804
          %2031 = vmatprep.subr.mxu0 %v829
          %2032 = vmatpush1.msra.mxu0 %v828
          %2033 = vmatprep.subr.mxu0 %v853
          %2034 = vmatpush1.msra.mxu0 %v852
          %2035 = vmatprep.subr.mxu0 %v877
          %2036 = vmatpush1.msra.mxu0 %v876
          %2037 = vmatprep.subr.mxu0 %v901
          %2038 = vmatpush1.msra.mxu0 %v900
          %2039 = vmatprep.subr.mxu0 %v925
          %2040 = vmatpush1.msra.mxu0 %v924
          %2041 = vmatprep.subr.mxu0 %v949
          %2042 = vmatpush1.msra.mxu0 %v948
          %2043 = vmatprep.subr.mxu0 %v973
          %2044 = vmatpush1.msra.mxu0 %v972
          %2045 = vmatprep.subr.mxu0 %v997
          %2046 = vmatpush1.msra.mxu0 %v996
          %2047 = vmatprep.subr.mxu0 %v1021
          %2048 = vmatpush1.msra.mxu0 %v1020
          %2049 = vmatprep.subr.mxu0 %v1045
          %2050 = vmatpush1.msra.mxu0 %v1044
          %2051 = vmatprep.subr.mxu0 %v1069
          %2052 = vmatpush1.msra.mxu0 %v1068
          %2053 = vmatprep.subr.mxu0 %v1093
          %2054 = vmatpush1.msra.mxu0 %v1092
          %2055 = vmatprep.subr.mxu0 %v1117
          %2056 = vmatpush1.msra.mxu0 %v1116
          %2057 = vmatprep.subr.mxu0 0.0
          %2058 = vmatpush1.msra.mxu0 0.0
          %2059 = vmatprep.subr.mxu0 0.0
          %2060 = vmatpush1.msra.mxu0 0.0
          %2061 = vmatprep.subr.mxu0 0.0
          %2062 = vmatpush1.msra.mxu0 0.0
          %2063 = vmatprep.subr.mxu0 0.0
          %2064 = vmatpush1.msra.mxu0 0.0
          %2065 = vmatprep.subr.mxu0 0.0
          %2066 = vmatpush1.msra.mxu0 0.0
          %2067 = vmatprep.subr.mxu0 0.0
          %2068 = vmatpush1.msra.mxu0 0.0
          %2069 = vmatprep.subr.mxu0 0.0
          %2070 = vmatpush1.msra.mxu0 0.0
          %2071 = vmatprep.subr.mxu0 0.0
          %2072 = vmatpush1.msra.mxu0 0.0
          %2073 = vmatprep.subr.mxu0 0.0
          %2074 = vmatpush1.msra.mxu0 0.0
          %2075 = vmatprep.subr.mxu0 0.0
          %2076 = vmatpush1.msra.mxu0 0.0
          %2077 = vmatprep.subr.mxu0 0.0
          %2078 = vmatpush1.msra.mxu0 0.0
          %2079 = vmatprep.subr.mxu0 0.0
          %2080 = vmatpush1.msra.mxu0 0.0
          %2081 = vmatprep.subr.mxu0 0.0
          %2082 = vmatpush1.msra.mxu0 0.0
          %2083 = vmatprep.subr.mxu0 0.0
          %2084 = vmatpush1.msra.mxu0 0.0
          %2085 = vmatprep.subr.mxu0 0.0
          %2086 = vmatpush1.msra.mxu0 0.0
          %2087 = vmatprep.subr.mxu0 0.0
          %2088 = vmatpush1.msra.mxu0 0.0
          %2089 = vmatprep.mubr.f32.mxu0 0.0
          %2090 = vmatmul.mubr.f32.gmra.mrb[0].mxu0 %v733
          %v2091 = vpop.f32.mrb[0].mxu0
          %v2092 = vadd.f32 %v1215, %v2091
          %v2093 = vpop.f32.mrb[0].mxu0
          %v2094 = vadd.f32 %v1219, %v2093
          %2095 = vdwg.mxu0
          %v2098 = vcombine.low %v1311, %v1313
          %v2100 = vunpack.c.l.s4 1983009808
          %v2101 = vunpack.c.0.s8 %v2100
          %v2102 = vlaneseq
          %v2103 = vshrl.u32 %v2102, 7
          %v2104 = vsub.s32 %v2101, %v2103
          %v2105 = vrot.slane %v2098, %v2104
          %2107 = vst [vmem:[#allocation3] sm:$0xf] %v2105
          %v2110 = vcombine.low %v1382, %v1384
          %v2112 = vunpack.c.l.s4 1983009808
          %v2113 = vunpack.c.0.s8 %v2112
          %v2114 = vlaneseq
          %v2115 = vshrl.u32 %v2114, 7
          %v2116 = vsub.s32 %v2113, %v2115
          %v2117 = vrot.slane %v2110, %v2116
          %s2119 = scalar_lea.vmem [#allocation3], 4
          %2120 = vst [vmem:[%s2119] sm:$0xf] %v2117
          %v2123 = vcombine.low %v1453, %v1455
          %v2125 = vunpack.c.l.s4 1983009808
          %v2126 = vunpack.c.0.s8 %v2125
          %v2127 = vlaneseq
          %v2128 = vshrl.u32 %v2127, 7
          %v2129 = vsub.s32 %v2126, %v2128
          %v2130 = vrot.slane %v2123, %v2129
          %s2132 = scalar_lea.vmem [#allocation3], 8
          %2133 = vst [vmem:[%s2132] sm:$0xf] %v2130
          %v2136 = vcombine.low %v1524, %v1526
          %v2138 = vunpack.c.l.s4 1983009808
          %v2139 = vunpack.c.0.s8 %v2138
          %v2140 = vlaneseq
          %v2141 = vshrl.u32 %v2140, 7
          %v2142 = vsub.s32 %v2139, %v2141
          %v2143 = vrot.slane %v2136, %v2142
          %s2145 = scalar_lea.vmem [#allocation3], 12
          %2146 = vst [vmem:[%s2145] sm:$0xf] %v2143
          %v2149 = vcombine.low %v1595, %v1597
          %v2151 = vunpack.c.l.s4 1983009808
          %v2152 = vunpack.c.0.s8 %v2151
          %v2153 = vlaneseq
          %v2154 = vshrl.u32 %v2153, 7
          %v2155 = vsub.s32 %v2152, %v2154
          %v2156 = vrot.slane %v2149, %v2155
          %s2158 = scalar_lea.vmem [#allocation3], 16
          %2159 = vst [vmem:[%s2158] sm:$0xf] %v2156
          %v2162 = vcombine.low %v1666, %v1668
          %v2164 = vunpack.c.l.s4 1983009808
          %v2165 = vunpack.c.0.s8 %v2164
          %v2166 = vlaneseq
          %v2167 = vshrl.u32 %v2166, 7
          %v2168 = vsub.s32 %v2165, %v2167
          %v2169 = vrot.slane %v2162, %v2168
          %s2171 = scalar_lea.vmem [#allocation3], 20
          %2172 = vst [vmem:[%s2171] sm:$0xf] %v2169
          %v2175 = vcombine.low %v1737, %v1739
          %v2177 = vunpack.c.l.s4 1983009808
          %v2178 = vunpack.c.0.s8 %v2177
          %v2179 = vlaneseq
          %v2180 = vshrl.u32 %v2179, 7
          %v2181 = vsub.s32 %v2178, %v2180
          %v2182 = vrot.slane %v2175, %v2181
          %s2184 = scalar_lea.vmem [#allocation3], 24
          %2185 = vst [vmem:[%s2184] sm:$0xf] %v2182
          %v2188 = vcombine.low %v1808, %v1810
          %v2190 = vunpack.c.l.s4 1983009808
          %v2191 = vunpack.c.0.s8 %v2190
          %v2192 = vlaneseq
          %v2193 = vshrl.u32 %v2192, 7
          %v2194 = vsub.s32 %v2191, %v2193
          %v2195 = vrot.slane %v2188, %v2194
          %s2197 = scalar_lea.vmem [#allocation3], 28
          %2198 = vst [vmem:[%s2197] sm:$0xf] %v2195
          %v2201 = vcombine.low %v1879, %v1881
          %v2203 = vunpack.c.l.s4 1983009808
          %v2204 = vunpack.c.0.s8 %v2203
          %v2205 = vlaneseq
          %v2206 = vshrl.u32 %v2205, 7
          %v2207 = vsub.s32 %v2204, %v2206
          %v2208 = vrot.slane %v2201, %v2207
          %s2210 = scalar_lea.vmem [#allocation3], 32
          %2211 = vst [vmem:[%s2210] sm:$0xf] %v2208
          %v2214 = vcombine.low %v1950, %v1952
          %v2216 = vunpack.c.l.s4 1983009808
          %v2217 = vunpack.c.0.s8 %v2216
          %v2218 = vlaneseq
          %v2219 = vshrl.u32 %v2218, 7
          %v2220 = vsub.s32 %v2217, %v2219
          %v2221 = vrot.slane %v2214, %v2220
          %s2223 = scalar_lea.vmem [#allocation3], 36
          %2224 = vst [vmem:[%s2223] sm:$0xf] %v2221
          %v2227 = vcombine.low %v2021, %v2023
          %v2229 = vunpack.c.l.s4 1983009808
          %v2230 = vunpack.c.0.s8 %v2229
          %v2231 = vlaneseq
          %v2232 = vshrl.u32 %v2231, 7
          %v2233 = vsub.s32 %v2230, %v2232
          %v2234 = vrot.slane %v2227, %v2233
          %s2236 = scalar_lea.vmem [#allocation3], 40
          %2237 = vst [vmem:[%s2236] sm:$0xf] %v2234
          %v2240 = vcombine.low %v2092, %v2094
          %v2242 = vunpack.c.l.s4 1983009808
          %v2243 = vunpack.c.0.s8 %v2242
          %v2244 = vlaneseq
          %v2245 = vshrl.u32 %v2244, 7
          %v2246 = vsub.s32 %v2243, %v2245
          %v2247 = vrot.slane %v2240, %v2246
          %s2249 = scalar_lea.vmem [#allocation3], 44
          %2250 = vst [vmem:[%s2249] sm:$0xf] %v2247
          %v2251 = vld [vmem:[%s1] sm:$0x3]
          %v2252 = vld [vmem:[%s5] sm:$0xff]
          %v2253 = vld [vmem:[%s5 + $0x8] sm:$0xff]
          %v2254 = vld [vmem:[%s5 + $0x10] sm:$0xff]
          %v2255 = vld [vmem:[%s5 + $0x18] sm:$0xff]
          %v2256 = vld [vmem:[%s5 + $0x20] sm:$0xff]
          %v2257 = vld [vmem:[%s5 + $0x28] sm:$0xff]
          %v2258 = vld [vmem:[%s5 + $0x30] sm:$0xff]
          %v2259 = vld [vmem:[%s5 + $0x38] sm:$0xff]
          %v2260 = vld [vmem:[%s5 + $0x40] sm:$0xff]
          %v2261 = vld [vmem:[%s5 + $0x48] sm:$0xff]
          %v2262 = vld [vmem:[%s5 + $0x50] sm:$0xff]
          %v2263 = vld [vmem:[%s5 + $0x58] sm:$0xff]
          %v2264 = vld [vmem:[%s5 + $0x60] sm:$0xff]
          %v2265 = vld [vmem:[%s5 + $0x68] sm:$0xff]
          %v2266 = vld [vmem:[%s5 + $0x70] sm:$0xff]
          %v2267 = vld [vmem:[%s5 + $0x78] sm:$0xff]
          %v2268 = vld [vmem:[%s5 + $0x80] sm:$0xff]
          %v2269 = vld [vmem:[%s5 + $0x88] sm:$0xff]
          %v2270 = vld [vmem:[%s5 + $0x90] sm:$0xff]
          %v2271 = vld [vmem:[%s5 + $0x98] sm:$0xff]
          %v2272 = vld [vmem:[%s5 + $0xa0] sm:$0xff]
          %v2273 = vld [vmem:[%s5 + $0xa8] sm:$0xff]
          %v2274 = vld [vmem:[%s5 + $0xb0] sm:$0xff]
          %v2275 = vld [vmem:[%s5 + $0xb8] sm:$0xff]
          %v2276 = vld [vmem:[%s5 + $0xc0] sm:$0xff]
          %v2277 = vld [vmem:[%s5 + $0xc8] sm:$0xff]
          %v2278 = vld [vmem:[%s5 + $0xd0] sm:$0xff]
          %v2279 = vld [vmem:[%s5 + $0xd8] sm:$0xff]
          %v2280 = vld [vmem:[%s5 + $0xe0] sm:$0xff]
          %v2281 = vld [vmem:[%s5 + $0xe8] sm:$0xff]
          %v2282 = vld [vmem:[%s5 + $0xf0] sm:$0xff]
          %v2283 = vld [vmem:[%s5 + $0xf8] sm:$0xff]
          %v2284 = vld [vmem:[%s6] sm:$0x3]
          %v2286 = vlaneseq
          %v2287 = vshrl.u32 %v2286, 7
          %v2288 = vsub.s32 0, %v2287
          %v2289 = vrot.slane %v2284, %v2288
          %v2290 = vlaneseq
          %v2291 = vshrl.u32 %v2290, 7
          %v2292 = vsub.s32 1, %v2291
          %v2293 = vrot.slane %v2284, %v2292
          %2296 = vmatprep.subr.mxu0 %v2253
          %2297 = vmatpush1.msra.mxu0 %v2252
          %2298 = vmatprep.subr.mxu0 %v2255
          %2299 = vmatpush1.msra.mxu0 %v2254
          %2300 = vmatprep.subr.mxu0 %v2257
          %2301 = vmatpush1.msra.mxu0 %v2256
          %2302 = vmatprep.subr.mxu0 %v2259
          %2303 = vmatpush1.msra.mxu0 %v2258
          %2304 = vmatprep.subr.mxu0 %v2261
          %2305 = vmatpush1.msra.mxu0 %v2260
          %2306 = vmatprep.subr.mxu0 %v2263
          %2307 = vmatpush1.msra.mxu0 %v2262
          %2308 = vmatprep.subr.mxu0 %v2265
          %2309 = vmatpush1.msra.mxu0 %v2264
          %2310 = vmatprep.subr.mxu0 %v2267
          %2311 = vmatpush1.msra.mxu0 %v2266
          %2312 = vmatprep.subr.mxu0 %v2269
          %2313 = vmatpush1.msra.mxu0 %v2268
          %2314 = vmatprep.subr.mxu0 %v2271
          %2315 = vmatpush1.msra.mxu0 %v2270
          %2316 = vmatprep.subr.mxu0 %v2273
          %2317 = vmatpush1.msra.mxu0 %v2272
          %2318 = vmatprep.subr.mxu0 %v2275
          %2319 = vmatpush1.msra.mxu0 %v2274
          %2320 = vmatprep.subr.mxu0 %v2277
          %2321 = vmatpush1.msra.mxu0 %v2276
          %2322 = vmatprep.subr.mxu0 %v2279
          %2323 = vmatpush1.msra.mxu0 %v2278
          %2324 = vmatprep.subr.mxu0 %v2281
          %2325 = vmatpush1.msra.mxu0 %v2280
          %2326 = vmatprep.subr.mxu0 %v2283
          %2327 = vmatpush1.msra.mxu0 %v2282
          %2328 = vmatprep.subr.mxu0 0.0
          %2329 = vmatpush1.msra.mxu0 0.0
          %2330 = vmatprep.subr.mxu0 0.0
          %2331 = vmatpush1.msra.mxu0 0.0
          %2332 = vmatprep.subr.mxu0 0.0
          %2333 = vmatpush1.msra.mxu0 0.0
          %2334 = vmatprep.subr.mxu0 0.0
          %2335 = vmatpush1.msra.mxu0 0.0
          %2336 = vmatprep.subr.mxu0 0.0
          %2337 = vmatpush1.msra.mxu0 0.0
          %2338 = vmatprep.subr.mxu0 0.0
          %2339 = vmatpush1.msra.mxu0 0.0
          %2340 = vmatprep.subr.mxu0 0.0
          %2341 = vmatpush1.msra.mxu0 0.0
          %2342 = vmatprep.subr.mxu0 0.0
          %2343 = vmatpush1.msra.mxu0 0.0
          %2344 = vmatprep.subr.mxu0 0.0
          %2345 = vmatpush1.msra.mxu0 0.0
          %2346 = vmatprep.subr.mxu0 0.0
          %2347 = vmatpush1.msra.mxu0 0.0
          %2348 = vmatprep.subr.mxu0 0.0
          %2349 = vmatpush1.msra.mxu0 0.0
          %2350 = vmatprep.subr.mxu0 0.0
          %2351 = vmatpush1.msra.mxu0 0.0
          %2352 = vmatprep.subr.mxu0 0.0
          %2353 = vmatpush1.msra.mxu0 0.0
          %2354 = vmatprep.subr.mxu0 0.0
          %2355 = vmatpush1.msra.mxu0 0.0
          %2356 = vmatprep.subr.mxu0 0.0
          %2357 = vmatpush1.msra.mxu0 0.0
          %2358 = vmatprep.subr.mxu0 0.0
          %2359 = vmatpush1.msra.mxu0 0.0
          %2360 = vmatprep.mubr.f32.mxu0 0.0
          %2361 = vmatmul.mubr.f32.gmra.mrb[0].mxu0 %v2251
          %v2362 = vpop.f32.mrb[0].mxu0
          %v2363 = vadd.f32 %v2289, %v2362
          %v2364 = vpop.f32.mrb[0].mxu0
          %v2365 = vadd.f32 %v2293, %v2364
          %2366 = vdwg.mxu0
          %v2369 = vcombine.low %v2363, %v2365
          %v2371 = vunpack.c.l.s4 1983009808
          %v2372 = vunpack.c.0.s8 %v2371
          %v2373 = vlaneseq
          %v2374 = vshrl.u32 %v2373, 7
          %v2375 = vsub.s32 %v2372, %v2374
          %v2376 = vrot.slane %v2369, %v2375
          %2378 = vst [vmem:[#allocation4] sm:$0xf] %v2376
        $region114: #{decoder_forward.1} parent=105 // pred_fallthru
          _
        %p2379 = scmp.lt.s32.totalorder %s32, 6
        %p2380 = pnand %p728, %p2379
        %p2381 = pneg %p2380
        // Predicated region
        $region115: #{decoder_forward.1} parent=105 // pred_check
          _
        $region116: #{decoder_forward.1} parent=105 // pred_check_branch
          %2383 = sbr.rel (%p2380) target = $region118
        $region117: #{decoder_forward.1} parent=105 // pred_region
          %v2384 = vlaneseq
          %vm2385 = vcmp.ge.s32.totalorder %v2384, 0
          %vm2386 = vcmp.lt.s32.totalorder %v2384, 256
          %vm2387 = vmand %vm2385, %vm2386
          %2388 = vst.msk [vmem:[#allocation5] sm:$0x3] %vm2387, 0.0
          %2389 = vst.msk [vmem:[#allocation6] sm:$0x3] %vm2387, 0.0
        $region118: #{decoder_forward.1} parent=105 // pred_fallthru
          _
        // Predicated region
        $region119: #{decoder_forward.1} parent=105 // pred_check
          %p2390 = pneg %p727
        $region120: #{decoder_forward.1} parent=105 // pred_check_branch
          %2392 = sbr.rel (%p2390) target = $region122
        $region121: #{decoder_forward.1} parent=105 // pred_region
          %v2393 = vld [vmem:[%s635] sm:$0xff]
          %v2394 = vld [vmem:[%s635 + $0x8] sm:$0xff]
          %v2395 = vld [vmem:[%s635 + $0x10] sm:$0xff]
          %v2396 = vld [vmem:[%s635 + $0x18] sm:$0xff]
          %v2397 = vld [vmem:[%s635 + $0x20] sm:$0xff]
          %v2398 = vld [vmem:[%s635 + $0x28] sm:$0xff]
          %v2399 = vld [vmem:[%s635 + $0x30] sm:$0xff]
          %v2400 = vld [vmem:[%s635 + $0x38] sm:$0xff]
          %v2401 = vld [vmem:[%s635 + $0x40] sm:$0xff]
          %v2402 = vld [vmem:[%s635 + $0x48] sm:$0xff]
          %v2403 = vld [vmem:[%s635 + $0x50] sm:$0xff]
          %v2404 = vld [vmem:[%s635 + $0x58] sm:$0xff]
          %v2405 = vld [vmem:[%s635 + $0x60] sm:$0xff]
          %v2406 = vld [vmem:[%s635 + $0x68] sm:$0xff]
          %v2407 = vld [vmem:[%s635 + $0x70] sm:$0xff]
          %v2408 = vld [vmem:[%s635 + $0x78] sm:$0xff]
          %v2409 = vld [vmem:[%s635 + $0x80] sm:$0xff]
          %v2410 = vld [vmem:[%s635 + $0x88] sm:$0xff]
          %v2411 = vld [vmem:[%s635 + $0x90] sm:$0xff]
          %v2412 = vld [vmem:[%s635 + $0x98] sm:$0xff]
          %v2413 = vld [vmem:[%s635 + $0xa0] sm:$0xff]
          %v2414 = vld [vmem:[%s635 + $0xa8] sm:$0xff]
          %v2415 = vld [vmem:[%s635 + $0xb0] sm:$0xff]
          %v2416 = vld [vmem:[%s635 + $0xb8] sm:$0xff]
          %v2417 = vld [vmem:[%s635 + $0xc0] sm:$0xff]
          %v2418 = vld [vmem:[%s635 + $0xc8] sm:$0xff]
          %v2419 = vld [vmem:[%s635 + $0xd0] sm:$0xff]
          %v2420 = vld [vmem:[%s635 + $0xd8] sm:$0xff]
          %v2421 = vld [vmem:[%s635 + $0xe0] sm:$0xff]
          %v2422 = vld [vmem:[%s635 + $0xe8] sm:$0xff]
          %v2423 = vld [vmem:[%s635 + $0xf0] sm:$0xff]
          %v2424 = vld [vmem:[%s635 + $0xf8] sm:$0xff]
          %v2425 = vld [vmem:[%s3] sm:$0xff]
          %v2426 = vld [vmem:[%s3 + $0x8] sm:$0xff]
          %v2427 = vld [vmem:[%s3 + $0x10] sm:$0xff]
          %v2428 = vld [vmem:[%s3 + $0x18] sm:$0xff]
          %v2429 = vld [vmem:[%s3 + $0x20] sm:$0xff]
          %v2430 = vld [vmem:[%s3 + $0x28] sm:$0xff]
          %v2431 = vld [vmem:[%s3 + $0x30] sm:$0xff]
          %v2432 = vld [vmem:[%s3 + $0x38] sm:$0xff]
          %v2433 = vld [vmem:[%s3 + $0x40] sm:$0xff]
          %v2434 = vld [vmem:[%s3 + $0x48] sm:$0xff]
          %v2435 = vld [vmem:[%s3 + $0x50] sm:$0xff]
          %v2436 = vld [vmem:[%s3 + $0x58] sm:$0xff]
          %v2437 = vld [vmem:[%s3 + $0x60] sm:$0xff]
          %v2438 = vld [vmem:[%s3 + $0x68] sm:$0xff]
          %v2439 = vld [vmem:[%s3 + $0x70] sm:$0xff]
          %v2440 = vld [vmem:[%s3 + $0x78] sm:$0xff]
          %v2441 = vld [vmem:[%s3 + $0x80] sm:$0xff]
          %v2442 = vld [vmem:[%s3 + $0x88] sm:$0xff]
          %v2443 = vld [vmem:[%s3 + $0x90] sm:$0xff]
          %v2444 = vld [vmem:[%s3 + $0x98] sm:$0xff]
          %v2445 = vld [vmem:[%s3 + $0xa0] sm:$0xff]
          %v2446 = vld [vmem:[%s3 + $0xa8] sm:$0xff]
          %v2447 = vld [vmem:[%s3 + $0xb0] sm:$0xff]
          %v2448 = vld [vmem:[%s3 + $0xb8] sm:$0xff]
          %v2449 = vld [vmem:[%s3 + $0xc0] sm:$0xff]
          %v2450 = vld [vmem:[%s3 + $0xc8] sm:$0xff]
          %v2451 = vld [vmem:[%s3 + $0xd0] sm:$0xff]
          %v2452 = vld [vmem:[%s3 + $0xd8] sm:$0xff]
          %v2453 = vld [vmem:[%s3 + $0xe0] sm:$0xff]
          %v2454 = vld [vmem:[%s3 + $0xe8] sm:$0xff]
          %v2455 = vld [vmem:[%s3 + $0xf0] sm:$0xff]
          %v2456 = vld [vmem:[%s3 + $0xf8] sm:$0xff]
          %v2457 = vld [vmem:[%s4] sm:$0x3]
          %v2459 = vlaneseq
          %v2460 = vshrl.u32 %v2459, 7
          %v2461 = vsub.s32 0, %v2460
          %v2462 = vrot.slane %v2457, %v2461
          %v2463 = vlaneseq
          %v2464 = vshrl.u32 %v2463, 7
          %v2465 = vsub.s32 1, %v2464
          %v2466 = vrot.slane %v2457, %v2465
          %2469 = vmatprep.subr.mxu0 %v2426
          %2470 = vmatpush1.msra.mxu0 %v2425
          %2471 = vmatprep.subr.mxu0 %v2428
          %2472 = vmatpush1.msra.mxu0 %v2427
          %2473 = vmatprep.subr.mxu0 %v2430
          %2474 = vmatpush1.msra.mxu0 %v2429
          %2475 = vmatprep.subr.mxu0 %v2432
          %2476 = vmatpush1.msra.mxu0 %v2431
          %2477 = vmatprep.subr.mxu0 %v2434
          %2478 = vmatpush1.msra.mxu0 %v2433
          %2479 = vmatprep.subr.mxu0 %v2436
          %2480 = vmatpush1.msra.mxu0 %v2435
          %2481 = vmatprep.subr.mxu0 %v2438
          %2482 = vmatpush1.msra.mxu0 %v2437
          %2483 = vmatprep.subr.mxu0 %v2440
          %2484 = vmatpush1.msra.mxu0 %v2439
          %2485 = vmatprep.subr.mxu0 %v2442
          %2486 = vmatpush1.msra.mxu0 %v2441
          %2487 = vmatprep.subr.mxu0 %v2444
          %2488 = vmatpush1.msra.mxu0 %v2443
          %2489 = vmatprep.subr.mxu0 %v2446
          %2490 = vmatpush1.msra.mxu0 %v2445
          %2491 = vmatprep.subr.mxu0 %v2448
          %2492 = vmatpush1.msra.mxu0 %v2447
          %2493 = vmatprep.subr.mxu0 %v2450
          %2494 = vmatpush1.msra.mxu0 %v2449
          %2495 = vmatprep.subr.mxu0 %v2452
          %2496 = vmatpush1.msra.mxu0 %v2451
          %2497 = vmatprep.subr.mxu0 %v2454
          %2498 = vmatpush1.msra.mxu0 %v2453
          %2499 = vmatprep.subr.mxu0 %v2456
          %2500 = vmatpush1.msra.mxu0 %v2455
          %2501 = vmatprep.subr.mxu0 0.0
          %2502 = vmatpush1.msra.mxu0 0.0
          %2503 = vmatprep.subr.mxu0 0.0
          %2504 = vmatpush1.msra.mxu0 0.0
          %2505 = vmatprep.subr.mxu0 0.0
          %2506 = vmatpush1.msra.mxu0 0.0
          %2507 = vmatprep.subr.mxu0 0.0
          %2508 = vmatpush1.msra.mxu0 0.0
          %2509 = vmatprep.subr.mxu0 0.0
          %2510 = vmatpush1.msra.mxu0 0.0
          %2511 = vmatprep.subr.mxu0 0.0
          %2512 = vmatpush1.msra.mxu0 0.0
          %2513 = vmatprep.subr.mxu0 0.0
          %2514 = vmatpush1.msra.mxu0 0.0
          %2515 = vmatprep.subr.mxu0 0.0
          %2516 = vmatpush1.msra.mxu0 0.0
          %2517 = vmatprep.subr.mxu0 0.0
          %2518 = vmatpush1.msra.mxu0 0.0
          %2519 = vmatprep.subr.mxu0 0.0
          %2520 = vmatpush1.msra.mxu0 0.0
          %2521 = vmatprep.subr.mxu0 0.0
          %2522 = vmatpush1.msra.mxu0 0.0
          %2523 = vmatprep.subr.mxu0 0.0
          %2524 = vmatpush1.msra.mxu0 0.0
          %2525 = vmatprep.subr.mxu0 0.0
          %2526 = vmatpush1.msra.mxu0 0.0
          %2527 = vmatprep.subr.mxu0 0.0
          %2528 = vmatpush1.msra.mxu0 0.0
          %2529 = vmatprep.subr.mxu0 0.0
          %2530 = vmatpush1.msra.mxu0 0.0
          %2531 = vmatprep.subr.mxu0 0.0
          %2532 = vmatpush1.msra.mxu0 0.0
          %2533 = vmatprep.mubr.f32.mxu0 0.0
          %2534 = vmatmul.mubr.f32.gmra.mrb[0].mxu0 %v2393
          %v2535 = vpop.f32.mrb[0].mxu0
          %v2536 = vadd.f32 %v2462, %v2535
          %v2537 = vpop.f32.mrb[0].mxu0
          %v2538 = vadd.f32 %v2466, %v2537
          %2539 = vmatprep.mubr.f32.mxu0 0.0
          %2540 = vmatmul.mubr.f32.gmra.mrb[0].mxu0 %v2394
          %v2541 = vpop.f32.mrb[0].mxu0
          %v2542 = vadd.f32 %v2462, %v2541
          %v2543 = vpop.f32.mrb[0].mxu0
          %v2544 = vadd.f32 %v2466, %v2543
          %2545 = vmatprep.mubr.f32.mxu0 0.0
          %2546 = vmatmul.mubr.f32.gmra.mrb[0].mxu0 %v2395
          %v2547 = vpop.f32.mrb[0].mxu0
          %v2548 = vadd.f32 %v2462, %v2547
          %v2549 = vpop.f32.mrb[0].mxu0
          %v2550 = vadd.f32 %v2466, %v2549
          %2551 = vmatprep.mubr.f32.mxu0 0.0
          %2552 = vmatmul.mubr.f32.gmra.mrb[0].mxu0 %v2396
          %v2553 = vpop.f32.mrb[0].mxu0
          %v2554 = vadd.f32 %v2462, %v2553
          %v2555 = vpop.f32.mrb[0].mxu0
          %v2556 = vadd.f32 %v2466, %v2555
          %2557 = vmatprep.mubr.f32.mxu0 0.0
          %2558 = vmatmul.mubr.f32.gmra.mrb[0].mxu0 %v2397
          %v2559 = vpop.f32.mrb[0].mxu0
          %v2560 = vadd.f32 %v2462, %v2559
          %v2561 = vpop.f32.mrb[0].mxu0
          %v2562 = vadd.f32 %v2466, %v2561
          %2563 = vmatprep.mubr.f32.mxu0 0.0
          %2564 = vmatmul.mubr.f32.gmra.mrb[0].mxu0 %v2398
          %v2565 = vpop.f32.mrb[0].mxu0
          %v2566 = vadd.f32 %v2462, %v2565
          %v2567 = vpop.f32.mrb[0].mxu0
          %v2568 = vadd.f32 %v2466, %v2567
          %2569 = vmatprep.mubr.f32.mxu0 0.0
          %2570 = vmatmul.mubr.f32.gmra.mrb[0].mxu0 %v2399
          %v2571 = vpop.f32.mrb[0].mxu0
          %v2572 = vadd.f32 %v2462, %v2571
          %v2573 = vpop.f32.mrb[0].mxu0
          %v2574 = vadd.f32 %v2466, %v2573
          %2575 = vmatprep.mubr.f32.mxu0 0.0
          %2576 = vmatmul.mubr.f32.gmra.mrb[0].mxu0 %v2400
          %v2577 = vpop.f32.mrb[0].mxu0
          %v2578 = vadd.f32 %v2462, %v2577
          %v2579 = vpop.f32.mrb[0].mxu0
          %v2580 = vadd.f32 %v2466, %v2579
          %2581 = vmatprep.mubr.f32.mxu0 0.0
          %2582 = vmatmul.mubr.f32.gmra.mrb[0].mxu0 %v2401
          %v2583 = vpop.f32.mrb[0].mxu0
          %v2584 = vadd.f32 %v2462, %v2583
          %v2585 = vpop.f32.mrb[0].mxu0
          %v2586 = vadd.f32 %v2466, %v2585
          %2587 = vmatprep.mubr.f32.mxu0 0.0
          %2588 = vmatmul.mubr.f32.gmra.mrb[0].mxu0 %v2402
          %v2589 = vpop.f32.mrb[0].mxu0
          %v2590 = vadd.f32 %v2462, %v2589
          %v2591 = vpop.f32.mrb[0].mxu0
          %v2592 = vadd.f32 %v2466, %v2591
          %2593 = vmatprep.mubr.f32.mxu0 0.0
          %2594 = vmatmul.mubr.f32.gmra.mrb[0].mxu0 %v2403
          %v2595 = vpop.f32.mrb[0].mxu0
          %v2596 = vadd.f32 %v2462, %v2595
          %v2597 = vpop.f32.mrb[0].mxu0
          %v2598 = vadd.f32 %v2466, %v2597
          %2599 = vmatprep.mubr.f32.mxu0 0.0
          %2600 = vmatmul.mubr.f32.gmra.mrb[0].mxu0 %v2404
          %v2601 = vpop.f32.mrb[0].mxu0
          %v2602 = vadd.f32 %v2462, %v2601
          %v2603 = vpop.f32.mrb[0].mxu0
          %v2604 = vadd.f32 %v2466, %v2603
          %2605 = vmatprep.mubr.f32.mxu0 0.0
          %2606 = vmatmul.mubr.f32.gmra.mrb[0].mxu0 %v2405
          %v2607 = vpop.f32.mrb[0].mxu0
          %v2608 = vadd.f32 %v2462, %v2607
          %v2609 = vpop.f32.mrb[0].mxu0
          %v2610 = vadd.f32 %v2466, %v2609
          %2611 = vmatprep.mubr.f32.mxu0 0.0
          %2612 = vmatmul.mubr.f32.gmra.mrb[0].mxu0 %v2406
          %v2613 = vpop.f32.mrb[0].mxu0
          %v2614 = vadd.f32 %v2462, %v2613
          %v2615 = vpop.f32.mrb[0].mxu0
          %v2616 = vadd.f32 %v2466, %v2615
          %2617 = vmatprep.mubr.f32.mxu0 0.0
          %2618 = vmatmul.mubr.f32.gmra.mrb[0].mxu0 %v2407
          %v2619 = vpop.f32.mrb[0].mxu0
          %v2620 = vadd.f32 %v2462, %v2619
          %v2621 = vpop.f32.mrb[0].mxu0
          %v2622 = vadd.f32 %v2466, %v2621
          %2623 = vmatprep.mubr.f32.mxu0 0.0
          %2624 = vmatmul.mubr.f32.gmra.mrb[0].mxu0 %v2408
          %v2625 = vpop.f32.mrb[0].mxu0
          %v2626 = vadd.f32 %v2462, %v2625
          %v2627 = vpop.f32.mrb[0].mxu0
          %v2628 = vadd.f32 %v2466, %v2627
          %2629 = vmatprep.mubr.f32.mxu0 0.0
          %2630 = vmatmul.mubr.f32.gmra.mrb[0].mxu0 %v2409
          %v2631 = vpop.f32.mrb[0].mxu0
          %v2632 = vadd.f32 %v2462, %v2631
          %v2633 = vpop.f32.mrb[0].mxu0
          %v2634 = vadd.f32 %v2466, %v2633
          %2635 = vmatprep.mubr.f32.mxu0 0.0
          %2636 = vmatmul.mubr.f32.gmra.mrb[0].mxu0 %v2410
          %v2637 = vpop.f32.mrb[0].mxu0
          %v2638 = vadd.f32 %v2462, %v2637
          %v2639 = vpop.f32.mrb[0].mxu0
          %v2640 = vadd.f32 %v2466, %v2639
          %2641 = vmatprep.mubr.f32.mxu0 0.0
          %2642 = vmatmul.mubr.f32.gmra.mrb[0].mxu0 %v2411
          %v2643 = vpop.f32.mrb[0].mxu0
          %v2644 = vadd.f32 %v2462, %v2643
          %v2645 = vpop.f32.mrb[0].mxu0
          %v2646 = vadd.f32 %v2466, %v2645
          %2647 = vmatprep.mubr.f32.mxu0 0.0
          %2648 = vmatmul.mubr.f32.gmra.mrb[0].mxu0 %v2412
          %v2649 = vpop.f32.mrb[0].mxu0
          %v2650 = vadd.f32 %v2462, %v2649
          %v2651 = vpop.f32.mrb[0].mxu0
          %v2652 = vadd.f32 %v2466, %v2651
          %2653 = vmatprep.mubr.f32.mxu0 0.0
          %2654 = vmatmul.mubr.f32.gmra.mrb[0].mxu0 %v2413
          %v2655 = vpop.f32.mrb[0].mxu0
          %v2656 = vadd.f32 %v2462, %v2655
          %v2657 = vpop.f32.mrb[0].mxu0
          %v2658 = vadd.f32 %v2466, %v2657
          %2659 = vmatprep.mubr.f32.mxu0 0.0
          %2660 = vmatmul.mubr.f32.gmra.mrb[0].mxu0 %v2414
          %v2661 = vpop.f32.mrb[0].mxu0
          %v2662 = vadd.f32 %v2462, %v2661
          %v2663 = vpop.f32.mrb[0].mxu0
          %v2664 = vadd.f32 %v2466, %v2663
          %2665 = vmatprep.mubr.f32.mxu0 0.0
          %2666 = vmatmul.mubr.f32.gmra.mrb[0].mxu0 %v2415
          %v2667 = vpop.f32.mrb[0].mxu0
          %v2668 = vadd.f32 %v2462, %v2667
          %v2669 = vpop.f32.mrb[0].mxu0
          %v2670 = vadd.f32 %v2466, %v2669
          %2671 = vmatprep.mubr.f32.mxu0 0.0
          %2672 = vmatmul.mubr.f32.gmra.mrb[0].mxu0 %v2416
          %v2673 = vpop.f32.mrb[0].mxu0
          %v2674 = vadd.f32 %v2462, %v2673
          %v2675 = vpop.f32.mrb[0].mxu0
          %v2676 = vadd.f32 %v2466, %v2675
          %2677 = vmatprep.mubr.f32.mxu0 0.0
          %2678 = vmatmul.mubr.f32.gmra.mrb[0].mxu0 %v2417
          %v2679 = vpop.f32.mrb[0].mxu0
          %v2680 = vadd.f32 %v2462, %v2679
          %v2681 = vpop.f32.mrb[0].mxu0
          %v2682 = vadd.f32 %v2466, %v2681
          %2683 = vmatprep.mubr.f32.mxu0 0.0
          %2684 = vmatmul.mubr.f32.gmra.mrb[0].mxu0 %v2418
          %v2685 = vpop.f32.mrb[0].mxu0
          %v2686 = vadd.f32 %v2462, %v2685
          %v2687 = vpop.f32.mrb[0].mxu0
          %v2688 = vadd.f32 %v2466, %v2687
          %2689 = vmatprep.mubr.f32.mxu0 0.0
          %2690 = vmatmul.mubr.f32.gmra.mrb[0].mxu0 %v2419
          %v2691 = vpop.f32.mrb[0].mxu0
          %v2692 = vadd.f32 %v2462, %v2691
          %v2693 = vpop.f32.mrb[0].mxu0
          %v2694 = vadd.f32 %v2466, %v2693
          %2695 = vmatprep.mubr.f32.mxu0 0.0
          %2696 = vmatmul.mubr.f32.gmra.mrb[0].mxu0 %v2420
          %v2697 = vpop.f32.mrb[0].mxu0
          %v2698 = vadd.f32 %v2462, %v2697
          %v2699 = vpop.f32.mrb[0].mxu0
          %v2700 = vadd.f32 %v2466, %v2699
          %2701 = vmatprep.mubr.f32.mxu0 0.0
          %2702 = vmatmul.mubr.f32.gmra.mrb[0].mxu0 %v2421
          %v2703 = vpop.f32.mrb[0].mxu0
          %v2704 = vadd.f32 %v2462, %v2703
          %v2705 = vpop.f32.mrb[0].mxu0
          %v2706 = vadd.f32 %v2466, %v2705
          %2707 = vmatprep.mubr.f32.mxu0 0.0
          %2708 = vmatmul.mubr.f32.gmra.mrb[0].mxu0 %v2422
          %v2709 = vpop.f32.mrb[0].mxu0
          %v2710 = vadd.f32 %v2462, %v2709
          %v2711 = vpop.f32.mrb[0].mxu0
          %v2712 = vadd.f32 %v2466, %v2711
          %2713 = vmatprep.mubr.f32.mxu0 0.0
          %2714 = vmatmul.mubr.f32.gmra.mrb[0].mxu0 %v2423
          %v2715 = vpop.f32.mrb[0].mxu0
          %v2716 = vadd.f32 %v2462, %v2715
          %v2717 = vpop.f32.mrb[0].mxu0
          %v2718 = vadd.f32 %v2466, %v2717
          %2719 = vmatprep.mubr.f32.mxu0 0.0
          %2720 = vmatmul.mubr.f32.gmra.mrb[0].mxu0 %v2424
          %v2721 = vpop.f32.mrb[0].mxu0
          %v2722 = vadd.f32 %v2462, %v2721
          %v2723 = vpop.f32.mrb[0].mxu0
          %v2724 = vadd.f32 %v2466, %v2723
          %2725 = vdwg.mxu0
          %v2726 = vld [vmem:[#allocation4] sm:$0xf]
          %v2729 = vunpack.c.l.s4 1966171168
          %v2730 = vunpack.c.0.s8 %v2729
          %v2731 = vlaneseq
          %v2732 = vshrl.u32 %v2731, 7
          %v2733 = vsub.s32 %v2730, %v2732
          %v2734 = vrot.slane %v2726, %v2733
          %v2735 = vcombine.high %v2734, %v2734
          %v2736 = vlaneseq
          %v2737 = vshrl.u32 %v2736, 7
          %v2738 = vsub.s32 0, %v2737
          %v2739 = vrot.slane %v2734, %v2738
          %v2740 = vlaneseq
          %v2741 = vshrl.u32 %v2740, 7
          %v2742 = vsub.s32 1, %v2741
          %v2743 = vrot.slane %v2734, %v2742
          %v2744 = vlaneseq
          %v2745 = vshrl.u32 %v2744, 7
          %v2746 = vsub.s32 0, %v2745
          %v2747 = vrot.slane %v2735, %v2746
          %v2748 = vlaneseq
          %v2749 = vshrl.u32 %v2748, 7
          %v2750 = vsub.s32 1, %v2749
          %v2751 = vrot.slane %v2735, %v2750
          %v2756 = vadd.f32 %v2536, %v2739
          %v2757 = vadd.f32 %v2538, %v2743
          %v2758 = vadd.f32 %v2542, %v2739
          %v2759 = vadd.f32 %v2544, %v2743
          %v2760 = vadd.f32 %v2548, %v2739
          %v2761 = vadd.f32 %v2550, %v2743
          %v2762 = vadd.f32 %v2554, %v2739
          %v2763 = vadd.f32 %v2556, %v2743
          %v2764 = vadd.f32 %v2560, %v2739
          %v2765 = vadd.f32 %v2562, %v2743
          %v2766 = vadd.f32 %v2566, %v2739
          %v2767 = vadd.f32 %v2568, %v2743
          %v2768 = vadd.f32 %v2572, %v2739
          %v2769 = vadd.f32 %v2574, %v2743
          %v2770 = vadd.f32 %v2578, %v2739
          %v2771 = vadd.f32 %v2580, %v2743
          %v2772 = vadd.f32 %v2584, %v2739
          %v2773 = vadd.f32 %v2586, %v2743
          %v2774 = vadd.f32 %v2590, %v2739
          %v2775 = vadd.f32 %v2592, %v2743
          %v2776 = vadd.f32 %v2596, %v2739
          %v2777 = vadd.f32 %v2598, %v2743
          %v2778 = vadd.f32 %v2602, %v2739
          %v2779 = vadd.f32 %v2604, %v2743
          %v2780 = vadd.f32 %v2608, %v2739
          %v2781 = vadd.f32 %v2610, %v2743
          %v2782 = vadd.f32 %v2614, %v2739
          %v2783 = vadd.f32 %v2616, %v2743
          %v2784 = vadd.f32 %v2620, %v2739
          %v2785 = vadd.f32 %v2622, %v2743
          %v2786 = vadd.f32 %v2626, %v2739
          %v2787 = vadd.f32 %v2628, %v2743
          %v2788 = vadd.f32 %v2632, %v2747
          %v2789 = vadd.f32 %v2634, %v2751
          %v2790 = vadd.f32 %v2638, %v2747
          %v2791 = vadd.f32 %v2640, %v2751
          %v2792 = vadd.f32 %v2644, %v2747
          %v2793 = vadd.f32 %v2646, %v2751
          %v2794 = vadd.f32 %v2650, %v2747
          %v2795 = vadd.f32 %v2652, %v2751
          %v2796 = vadd.f32 %v2656, %v2747
          %v2797 = vadd.f32 %v2658, %v2751
          %v2798 = vadd.f32 %v2662, %v2747
          %v2799 = vadd.f32 %v2664, %v2751
          %v2800 = vadd.f32 %v2668, %v2747
          %v2801 = vadd.f32 %v2670, %v2751
          %v2802 = vadd.f32 %v2674, %v2747
          %v2803 = vadd.f32 %v2676, %v2751
          %v2804 = vadd.f32 %v2680, %v2747
          %v2805 = vadd.f32 %v2682, %v2751
          %v2806 = vadd.f32 %v2686, %v2747
          %v2807 = vadd.f32 %v2688, %v2751
          %v2808 = vadd.f32 %v2692, %v2747
          %v2809 = vadd.f32 %v2694, %v2751
          %v2810 = vadd.f32 %v2698, %v2747
          %v2811 = vadd.f32 %v2700, %v2751
          %v2812 = vadd.f32 %v2704, %v2747
          %v2813 = vadd.f32 %v2706, %v2751
          %v2814 = vadd.f32 %v2710, %v2747
          %v2815 = vadd.f32 %v2712, %v2751
          %v2816 = vadd.f32 %v2716, %v2747
          %v2817 = vadd.f32 %v2718, %v2751
          %v2818 = vadd.f32 %v2722, %v2747
          %v2819 = vadd.f32 %v2724, %v2751
          %v2820 = vpack.c.bf16 %v2758, %v2756
          %v2821 = vpack.c.bf16 %v2759, %v2757
          %v2822 = vpack.c.bf16 %v2762, %v2760
          %v2823 = vpack.c.bf16 %v2763, %v2761
          %v2824 = vpack.c.bf16 %v2766, %v2764
          %v2825 = vpack.c.bf16 %v2767, %v2765
          %v2826 = vpack.c.bf16 %v2770, %v2768
          %v2827 = vpack.c.bf16 %v2771, %v2769
          %v2828 = vpack.c.bf16 %v2774, %v2772
          %v2829 = vpack.c.bf16 %v2775, %v2773
          %v2830 = vpack.c.bf16 %v2778, %v2776
          %v2831 = vpack.c.bf16 %v2779, %v2777
          %v2832 = vpack.c.bf16 %v2782, %v2780
          %v2833 = vpack.c.bf16 %v2783, %v2781
          %v2834 = vpack.c.bf16 %v2786, %v2784
          %v2835 = vpack.c.bf16 %v2787, %v2785
          %v2836 = vpack.c.bf16 %v2790, %v2788
          %v2837 = vpack.c.bf16 %v2791, %v2789
          %v2838 = vpack.c.bf16 %v2794, %v2792
          %v2839 = vpack.c.bf16 %v2795, %v2793
          %v2840 = vpack.c.bf16 %v2798, %v2796
          %v2841 = vpack.c.bf16 %v2799, %v2797
          %v2842 = vpack.c.bf16 %v2802, %v2800
          %v2843 = vpack.c.bf16 %v2803, %v2801
          %v2844 = vpack.c.bf16 %v2806, %v2804
          %v2845 = vpack.c.bf16 %v2807, %v2805
          %v2846 = vpack.c.bf16 %v2810, %v2808
          %v2847 = vpack.c.bf16 %v2811, %v2809
          %v2848 = vpack.c.bf16 %v2814, %v2812
          %v2849 = vpack.c.bf16 %v2815, %v2813
          %v2850 = vpack.c.bf16 %v2818, %v2816
          %v2851 = vpack.c.bf16 %v2819, %v2817
          %s2852 = smul.u32 %s33, 32
          %s2853 = smul.addr %s2852, 8
          %s2854 = scalar_lea.vmem [#allocation2], %s2853
          %2855 = vst [vmem:[%s2854] sm:$0xff] %v2820
          %2856 = vst [vmem:[%s2854 + $0x8] sm:$0xff] %v2821
          %2857 = vst [vmem:[%s2854 + $0x10] sm:$0xff] %v2822
          %2858 = vst [vmem:[%s2854 + $0x18] sm:$0xff] %v2823
          %2859 = vst [vmem:[%s2854 + $0x20] sm:$0xff] %v2824
          %2860 = vst [vmem:[%s2854 + $0x28] sm:$0xff] %v2825
          %2861 = vst [vmem:[%s2854 + $0x30] sm:$0xff] %v2826
          %2862 = vst [vmem:[%s2854 + $0x38] sm:$0xff] %v2827
          %2863 = vst [vmem:[%s2854 + $0x40] sm:$0xff] %v2828
          %2864 = vst [vmem:[%s2854 + $0x48] sm:$0xff] %v2829
          %2865 = vst [vmem:[%s2854 + $0x50] sm:$0xff] %v2830
          %2866 = vst [vmem:[%s2854 + $0x58] sm:$0xff] %v2831
          %2867 = vst [vmem:[%s2854 + $0x60] sm:$0xff] %v2832
          %2868 = vst [vmem:[%s2854 + $0x68] sm:$0xff] %v2833
          %2869 = vst [vmem:[%s2854 + $0x70] sm:$0xff] %v2834
          %2870 = vst [vmem:[%s2854 + $0x78] sm:$0xff] %v2835
          %2871 = vst [vmem:[%s2854 + $0x80] sm:$0xff] %v2836
          %2872 = vst [vmem:[%s2854 + $0x88] sm:$0xff] %v2837
          %2873 = vst [vmem:[%s2854 + $0x90] sm:$0xff] %v2838
          %2874 = vst [vmem:[%s2854 + $0x98] sm:$0xff] %v2839
          %2875 = vst [vmem:[%s2854 + $0xa0] sm:$0xff] %v2840
          %2876 = vst [vmem:[%s2854 + $0xa8] sm:$0xff] %v2841
          %2877 = vst [vmem:[%s2854 + $0xb0] sm:$0xff] %v2842
          %2878 = vst [vmem:[%s2854 + $0xb8] sm:$0xff] %v2843
          %2879 = vst [vmem:[%s2854 + $0xc0] sm:$0xff] %v2844
          %2880 = vst [vmem:[%s2854 + $0xc8] sm:$0xff] %v2845
          %2881 = vst [vmem:[%s2854 + $0xd0] sm:$0xff] %v2846
          %2882 = vst [vmem:[%s2854 + $0xd8] sm:$0xff] %v2847
          %2883 = vst [vmem:[%s2854 + $0xe0] sm:$0xff] %v2848
          %2884 = vst [vmem:[%s2854 + $0xe8] sm:$0xff] %v2849
          %2885 = vst [vmem:[%s2854 + $0xf0] sm:$0xff] %v2850
          %2886 = vst [vmem:[%s2854 + $0xf8] sm:$0xff] %v2851
          %v2887 = vld [vmem:[#allocation5] sm:$0x3]
          %v2888 = vadd.f32 %v2756, %v2758
          %v2889 = vadd.f32 %v2888, %v2760
          %v2890 = vadd.f32 %v2889, %v2762
          %v2891 = vadd.f32 %v2890, %v2764
          %v2892 = vadd.f32 %v2891, %v2766
          %v2893 = vadd.f32 %v2892, %v2768
          %v2894 = vadd.f32 %v2893, %v2770
          %v2895 = vadd.f32 %v2894, %v2772
          %v2896 = vadd.f32 %v2895, %v2774
          %v2897 = vadd.f32 %v2896, %v2776
          %v2898 = vadd.f32 %v2897, %v2778
          %v2899 = vadd.f32 %v2898, %v2780
          %v2900 = vadd.f32 %v2899, %v2782
          %v2901 = vadd.f32 %v2900, %v2784
          %v2902 = vadd.f32 %v2901, %v2786
          %v2903 = vadd.f32 %v2902, %v2788
          %v2904 = vadd.f32 %v2903, %v2790
          %v2905 = vadd.f32 %v2904, %v2792
          %v2906 = vadd.f32 %v2905, %v2794
          %v2907 = vadd.f32 %v2906, %v2796
          %v2908 = vadd.f32 %v2907, %v2798
          %v2909 = vadd.f32 %v2908, %v2800
          %v2910 = vadd.f32 %v2909, %v2802
          %v2911 = vadd.f32 %v2910, %v2804
          %v2912 = vadd.f32 %v2911, %v2806
          %v2913 = vadd.f32 %v2912, %v2808
          %v2914 = vadd.f32 %v2913, %v2810
          %v2915 = vadd.f32 %v2914, %v2812
          %v2916 = vadd.f32 %v2915, %v2814
          %v2917 = vadd.f32 %v2916, %v2816
          %v2918 = vadd.f32 %v2917, %v2818
          %v2919 = vrot.slane %v2918, 4
          %v2920 = vadd.f32 %v2918, %v2919
          %v2921 = vrot.slane %v2920, 2
          %v2922 = vadd.f32 %v2920, %v2921
          %v2923 = vrot.slane %v2922, 1
          %v2924 = vadd.f32 %v2922, %v2923
          %v2925 = vadd.f32 %v2757, %v2759
          %v2926 = vadd.f32 %v2925, %v2761
          %v2927 = vadd.f32 %v2926, %v2763
          %v2928 = vadd.f32 %v2927, %v2765
          %v2929 = vadd.f32 %v2928, %v2767
          %v2930 = vadd.f32 %v2929, %v2769
          %v2931 = vadd.f32 %v2930, %v2771
          %v2932 = vadd.f32 %v2931, %v2773
          %v2933 = vadd.f32 %v2932, %v2775
          %v2934 = vadd.f32 %v2933, %v2777
          %v2935 = vadd.f32 %v2934, %v2779
          %v2936 = vadd.f32 %v2935, %v2781
          %v2937 = vadd.f32 %v2936, %v2783
          %v2938 = vadd.f32 %v2937, %v2785
          %v2939 = vadd.f32 %v2938, %v2787
          %v2940 = vadd.f32 %v2939, %v2789
          %v2941 = vadd.f32 %v2940, %v2791
          %v2942 = vadd.f32 %v2941, %v2793
          %v2943 = vadd.f32 %v2942, %v2795
          %v2944 = vadd.f32 %v2943, %v2797
          %v2945 = vadd.f32 %v2944, %v2799
          %v2946 = vadd.f32 %v2945, %v2801
          %v2947 = vadd.f32 %v2946, %v2803
          %v2948 = vadd.f32 %v2947, %v2805
          %v2949 = vadd.f32 %v2948, %v2807
          %v2950 = vadd.f32 %v2949, %v2809
          %v2951 = vadd.f32 %v2950, %v2811
          %v2952 = vadd.f32 %v2951, %v2813
          %v2953 = vadd.f32 %v2952, %v2815
          %v2954 = vadd.f32 %v2953, %v2817
          %v2955 = vadd.f32 %v2954, %v2819
          %v2956 = vrot.slane %v2955, 4
          %v2957 = vadd.f32 %v2955, %v2956
          %v2958 = vrot.slane %v2957, 2
          %v2959 = vadd.f32 %v2957, %v2958
          %v2960 = vrot.slane %v2959, 1
          %v2961 = vadd.f32 %v2959, %v2960
          %v2964 = vcombine.low %v2924, %v2961
          %v2966 = vunpack.c.l.s4 1966171168
          %v2967 = vunpack.c.0.s8 %v2966
          %v2968 = vlaneseq
          %v2969 = vshrl.u32 %v2968, 7
          %v2970 = vsub.s32 %v2967, %v2969
          %v2971 = vrot.slane %v2964, %v2970
          %v2973 = vunpack.c.l.s4 1966171168
          %v2974 = vunpack.c.0.s8 %v2973
          %v2975 = vlaneseq
          %v2976 = vshrl.u32 %v2975, 7
          %v2977 = vsub.s32 %v2974, %v2976
          %v2978 = vrot.slane %v2971, %v2977
          %v2980 = vadd.f32 %v2887, %v2978
          %v2981 = vlaneseq
          %vm2982 = vcmp.ge.s32.totalorder %v2981, 0
          %vm2983 = vcmp.lt.s32.totalorder %v2981, 256
          %vm2984 = vmand %vm2982, %vm2983
          %2985 = vst.msk [vmem:[#allocation5] sm:$0x3] %vm2984, %v2980
          %v2986 = vld [vmem:[#allocation6] sm:$0x3]
          %v2987 = vmul.f32 %v2756, %v2756
          %v2988 = vmul.f32 %v2757, %v2757
          %v2989 = vmul.f32 %v2758, %v2758
          %v2990 = vmul.f32 %v2759, %v2759
          %v2991 = vmul.f32 %v2760, %v2760
          %v2992 = vmul.f32 %v2761, %v2761
          %v2993 = vmul.f32 %v2762, %v2762
          %v2994 = vmul.f32 %v2763, %v2763
          %v2995 = vmul.f32 %v2764, %v2764
          %v2996 = vmul.f32 %v2765, %v2765
          %v2997 = vmul.f32 %v2766, %v2766
          %v2998 = vmul.f32 %v2767, %v2767
          %v2999 = vmul.f32 %v2768, %v2768
          %v3000 = vmul.f32 %v2769, %v2769
          %v3001 = vmul.f32 %v2770, %v2770
          %v3002 = vmul.f32 %v2771, %v2771
          %v3003 = vmul.f32 %v2772, %v2772
          %v3004 = vmul.f32 %v2773, %v2773
          %v3005 = vmul.f32 %v2774, %v2774
          %v3006 = vmul.f32 %v2775, %v2775
          %v3007 = vmul.f32 %v2776, %v2776
          %v3008 = vmul.f32 %v2777, %v2777
          %v3009 = vmul.f32 %v2778, %v2778
          %v3010 = vmul.f32 %v2779, %v2779
          %v3011 = vmul.f32 %v2780, %v2780
          %v3012 = vmul.f32 %v2781, %v2781
          %v3013 = vmul.f32 %v2782, %v2782
          %v3014 = vmul.f32 %v2783, %v2783
          %v3015 = vmul.f32 %v2784, %v2784
          %v3016 = vmul.f32 %v2785, %v2785
          %v3017 = vmul.f32 %v2786, %v2786
          %v3018 = vmul.f32 %v2787, %v2787
          %v3019 = vmul.f32 %v2788, %v2788
          %v3020 = vmul.f32 %v2789, %v2789
          %v3021 = vmul.f32 %v2790, %v2790
          %v3022 = vmul.f32 %v2791, %v2791
          %v3023 = vmul.f32 %v2792, %v2792
          %v3024 = vmul.f32 %v2793, %v2793
          %v3025 = vmul.f32 %v2794, %v2794
          %v3026 = vmul.f32 %v2795, %v2795
          %v3027 = vmul.f32 %v2796, %v2796
          %v3028 = vmul.f32 %v2797, %v2797
          %v3029 = vmul.f32 %v2798, %v2798
          %v3030 = vmul.f32 %v2799, %v2799
          %v3031 = vmul.f32 %v2800, %v2800
          %v3032 = vmul.f32 %v2801, %v2801
          %v3033 = vmul.f32 %v2802, %v2802
          %v3034 = vmul.f32 %v2803, %v2803
          %v3035 = vmul.f32 %v2804, %v2804
          %v3036 = vmul.f32 %v2805, %v2805
          %v3037 = vmul.f32 %v2806, %v2806
          %v3038 = vmul.f32 %v2807, %v2807
          %v3039 = vmul.f32 %v2808, %v2808
          %v3040 = vmul.f32 %v2809, %v2809
          %v3041 = vmul.f32 %v2810, %v2810
          %v3042 = vmul.f32 %v2811, %v2811
          %v3043 = vmul.f32 %v2812, %v2812
          %v3044 = vmul.f32 %v2813, %v2813
          %v3045 = vmul.f32 %v2814, %v2814
          %v3046 = vmul.f32 %v2815, %v2815
          %v3047 = vmul.f32 %v2816, %v2816
          %v3048 = vmul.f32 %v2817, %v2817
          %v3049 = vmul.f32 %v2818, %v2818
          %v3050 = vmul.f32 %v2819, %v2819
          %v3051 = vadd.f32 %v2987, %v2989
          %v3052 = vadd.f32 %v3051, %v2991
          %v3053 = vadd.f32 %v3052, %v2993
          %v3054 = vadd.f32 %v3053, %v2995
          %v3055 = vadd.f32 %v3054, %v2997
          %v3056 = vadd.f32 %v3055, %v2999
          %v3057 = vadd.f32 %v3056, %v3001
          %v3058 = vadd.f32 %v3057, %v3003
          %v3059 = vadd.f32 %v3058, %v3005
          %v3060 = vadd.f32 %v3059, %v3007
          %v3061 = vadd.f32 %v3060, %v3009
          %v3062 = vadd.f32 %v3061, %v3011
          %v3063 = vadd.f32 %v3062, %v3013
          %v3064 = vadd.f32 %v3063, %v3015
          %v3065 = vadd.f32 %v3064, %v3017
          %v3066 = vadd.f32 %v3065, %v3019
          %v3067 = vadd.f32 %v3066, %v3021
          %v3068 = vadd.f32 %v3067, %v3023
          %v3069 = vadd.f32 %v3068, %v3025
          %v3070 = vadd.f32 %v3069, %v3027
          %v3071 = vadd.f32 %v3070, %v3029
          %v3072 = vadd.f32 %v3071, %v3031
          %v3073 = vadd.f32 %v3072, %v3033
          %v3074 = vadd.f32 %v3073, %v3035
          %v3075 = vadd.f32 %v3074, %v3037
          %v3076 = vadd.f32 %v3075, %v3039
          %v3077 = vadd.f32 %v3076, %v3041
          %v3078 = vadd.f32 %v3077, %v3043
          %v3079 = vadd.f32 %v3078, %v3045
          %v3080 = vadd.f32 %v3079, %v3047
          %v3081 = vadd.f32 %v3080, %v3049
          %v3082 = vrot.slane %v3081, 4
          %v3083 = vadd.f32 %v3081, %v3082
          %v3084 = vrot.slane %v3083, 2
          %v3085 = vadd.f32 %v3083, %v3084
          %v3086 = vrot.slane %v3085, 1
          %v3087 = vadd.f32 %v3085, %v3086
          %v3088 = vadd.f32 %v2988, %v2990
          %v3089 = vadd.f32 %v3088, %v2992
          %v3090 = vadd.f32 %v3089, %v2994
          %v3091 = vadd.f32 %v3090, %v2996
          %v3092 = vadd.f32 %v3091, %v2998
          %v3093 = vadd.f32 %v3092, %v3000
          %v3094 = vadd.f32 %v3093, %v3002
          %v3095 = vadd.f32 %v3094, %v3004
          %v3096 = vadd.f32 %v3095, %v3006
          %v3097 = vadd.f32 %v3096, %v3008
          %v3098 = vadd.f32 %v3097, %v3010
          %v3099 = vadd.f32 %v3098, %v3012
          %v3100 = vadd.f32 %v3099, %v3014
          %v3101 = vadd.f32 %v3100, %v3016
          %v3102 = vadd.f32 %v3101, %v3018
          %v3103 = vadd.f32 %v3102, %v3020
          %v3104 = vadd.f32 %v3103, %v3022
          %v3105 = vadd.f32 %v3104, %v3024
          %v3106 = vadd.f32 %v3105, %v3026
          %v3107 = vadd.f32 %v3106, %v3028
          %v3108 = vadd.f32 %v3107, %v3030
          %v3109 = vadd.f32 %v3108, %v3032
          %v3110 = vadd.f32 %v3109, %v3034
          %v3111 = vadd.f32 %v3110, %v3036
          %v3112 = vadd.f32 %v3111, %v3038
          %v3113 = vadd.f32 %v3112, %v3040
          %v3114 = vadd.f32 %v3113, %v3042
          %v3115 = vadd.f32 %v3114, %v3044
          %v3116 = vadd.f32 %v3115, %v3046
          %v3117 = vadd.f32 %v3116, %v3048
          %v3118 = vadd.f32 %v3117, %v3050
          %v3119 = vrot.slane %v3118, 4
          %v3120 = vadd.f32 %v3118, %v3119
          %v3121 = vrot.slane %v3120, 2
          %v3122 = vadd.f32 %v3120, %v3121
          %v3123 = vrot.slane %v3122, 1
          %v3124 = vadd.f32 %v3122, %v3123
          %v3127 = vcombine.low %v3087, %v3124
          %v3129 = vunpack.c.l.s4 1966171168
          %v3130 = vunpack.c.0.s8 %v3129
          %v3131 = vlaneseq
          %v3132 = vshrl.u32 %v3131, 7
          %v3133 = vsub.s32 %v3130, %v3132
          %v3134 = vrot.slane %v3127, %v3133
          %v3136 = vunpack.c.l.s4 1966171168
          %v3137 = vunpack.c.0.s8 %v3136
          %v3138 = vlaneseq
          %v3139 = vshrl.u32 %v3138, 7
          %v3140 = vsub.s32 %v3137, %v3139
          %v3141 = vrot.slane %v3134, %v3140
          %v3143 = vadd.f32 %v2986, %v3141
          %3144 = vst.msk [vmem:[#allocation6] sm:$0x3] %vm2984, %v3143
        $region122: #{decoder_forward.1} parent=105 // pred_fallthru
          _
        %p3145 = scmp.ge.s32.totalorder %s32, 1
        %p3146 = scmp.le.s32.totalorder %s32, 5
        %p3147 = pnand %p3145, %p3146
        %p3148 = pneg %p3147
        // Predicated region
        $region123: #{decoder_forward.1} parent=105 // pred_check
          _
        $region124: #{decoder_forward.1} parent=105 // pred_check_branch
          %3150 = sbr.rel (%p3147) target = $region126
        $region125: #{decoder_forward.1} parent=105 // pred_region
          %s3151 = smul.u32 %s33, 32
          %s3152 = smul.addr %s3151, 8
          %s3153 = scalar_lea.vmem [#allocation2], %s3152
          %v3154 = vld [vmem:[%s3153] sm:$0xff]
          %v3155 = vld [vmem:[%s3153 + $0x8] sm:$0xff]
          %v3156 = vld [vmem:[%s3153 + $0x10] sm:$0xff]
          %v3157 = vld [vmem:[%s3153 + $0x18] sm:$0xff]
          %v3158 = vld [vmem:[%s3153 + $0x20] sm:$0xff]
          %v3159 = vld [vmem:[%s3153 + $0x28] sm:$0xff]
          %v3160 = vld [vmem:[%s3153 + $0x30] sm:$0xff]
          %v3161 = vld [vmem:[%s3153 + $0x38] sm:$0xff]
          %v3162 = vld [vmem:[%s3153 + $0x40] sm:$0xff]
          %v3163 = vld [vmem:[%s3153 + $0x48] sm:$0xff]
          %v3164 = vld [vmem:[%s3153 + $0x50] sm:$0xff]
          %v3165 = vld [vmem:[%s3153 + $0x58] sm:$0xff]
          %v3166 = vld [vmem:[%s3153 + $0x60] sm:$0xff]
          %v3167 = vld [vmem:[%s3153 + $0x68] sm:$0xff]
          %v3168 = vld [vmem:[%s3153 + $0x70] sm:$0xff]
          %v3169 = vld [vmem:[%s3153 + $0x78] sm:$0xff]
          %v3170 = vld [vmem:[%s3153 + $0x80] sm:$0xff]
          %v3171 = vld [vmem:[%s3153 + $0x88] sm:$0xff]
          %v3172 = vld [vmem:[%s3153 + $0x90] sm:$0xff]
          %v3173 = vld [vmem:[%s3153 + $0x98] sm:$0xff]
          %v3174 = vld [vmem:[%s3153 + $0xa0] sm:$0xff]
          %v3175 = vld [vmem:[%s3153 + $0xa8] sm:$0xff]
          %v3176 = vld [vmem:[%s3153 + $0xb0] sm:$0xff]
          %v3177 = vld [vmem:[%s3153 + $0xb8] sm:$0xff]
          %v3178 = vld [vmem:[%s3153 + $0xc0] sm:$0xff]
          %v3179 = vld [vmem:[%s3153 + $0xc8] sm:$0xff]
          %v3180 = vld [vmem:[%s3153 + $0xd0] sm:$0xff]
          %v3181 = vld [vmem:[%s3153 + $0xd8] sm:$0xff]
          %v3182 = vld [vmem:[%s3153 + $0xe0] sm:$0xff]
          %v3183 = vld [vmem:[%s3153 + $0xe8] sm:$0xff]
          %v3184 = vld [vmem:[%s3153 + $0xf0] sm:$0xff]
          %v3185 = vld [vmem:[%s3153 + $0xf8] sm:$0xff]
          %v3186 = vunpack.c.l.bf16 %v3154
          %v3187 = vunpack.c.l.bf16 %v3155
          %v3188 = vunpack.c.h.bf16 %v3154
          %v3189 = vunpack.c.h.bf16 %v3155
          %v3190 = vunpack.c.l.bf16 %v3156
          %v3191 = vunpack.c.l.bf16 %v3157
          %v3192 = vunpack.c.h.bf16 %v3156
          %v3193 = vunpack.c.h.bf16 %v3157
          %v3194 = vunpack.c.l.bf16 %v3158
          %v3195 = vunpack.c.l.bf16 %v3159
          %v3196 = vunpack.c.h.bf16 %v3158
          %v3197 = vunpack.c.h.bf16 %v3159
          %v3198 = vunpack.c.l.bf16 %v3160
          %v3199 = vunpack.c.l.bf16 %v3161
          %v3200 = vunpack.c.h.bf16 %v3160
          %v3201 = vunpack.c.h.bf16 %v3161
          %v3202 = vunpack.c.l.bf16 %v3162
          %v3203 = vunpack.c.l.bf16 %v3163
          %v3204 = vunpack.c.h.bf16 %v3162
          %v3205 = vunpack.c.h.bf16 %v3163
          %v3206 = vunpack.c.l.bf16 %v3164
          %v3207 = vunpack.c.l.bf16 %v3165
          %v3208 = vunpack.c.h.bf16 %v3164
          %v3209 = vunpack.c.h.bf16 %v3165
          %v3210 = vunpack.c.l.bf16 %v3166
          %v3211 = vunpack.c.l.bf16 %v3167
          %v3212 = vunpack.c.h.bf16 %v3166
          %v3213 = vunpack.c.h.bf16 %v3167
          %v3214 = vunpack.c.l.bf16 %v3168
          %v3215 = vunpack.c.l.bf16 %v3169
          %v3216 = vunpack.c.h.bf16 %v3168
          %v3217 = vunpack.c.h.bf16 %v3169
          %v3218 = vunpack.c.l.bf16 %v3170
          %v3219 = vunpack.c.l.bf16 %v3171
          %v3220 = vunpack.c.h.bf16 %v3170
          %v3221 = vunpack.c.h.bf16 %v3171
          %v3222 = vunpack.c.l.bf16 %v3172
          %v3223 = vunpack.c.l.bf16 %v3173
          %v3224 = vunpack.c.h.bf16 %v3172
          %v3225 = vunpack.c.h.bf16 %v3173
          %v3226 = vunpack.c.l.bf16 %v3174
          %v3227 = vunpack.c.l.bf16 %v3175
          %v3228 = vunpack.c.h.bf16 %v3174
          %v3229 = vunpack.c.h.bf16 %v3175
          %v3230 = vunpack.c.l.bf16 %v3176
          %v3231 = vunpack.c.l.bf16 %v3177
          %v3232 = vunpack.c.h.bf16 %v3176
          %v3233 = vunpack.c.h.bf16 %v3177
          %v3234 = vunpack.c.l.bf16 %v3178
          %v3235 = vunpack.c.l.bf16 %v3179
          %v3236 = vunpack.c.h.bf16 %v3178
          %v3237 = vunpack.c.h.bf16 %v3179
          %v3238 = vunpack.c.l.bf16 %v3180
          %v3239 = vunpack.c.l.bf16 %v3181
          %v3240 = vunpack.c.h.bf16 %v3180
          %v3241 = vunpack.c.h.bf16 %v3181
          %v3242 = vunpack.c.l.bf16 %v3182
          %v3243 = vunpack.c.l.bf16 %v3183
          %v3244 = vunpack.c.h.bf16 %v3182
          %v3245 = vunpack.c.h.bf16 %v3183
          %v3246 = vunpack.c.l.bf16 %v3184
          %v3247 = vunpack.c.l.bf16 %v3185
          %v3248 = vunpack.c.h.bf16 %v3184
          %v3249 = vunpack.c.h.bf16 %v3185
          %v3250 = vld [vmem:[#allocation7] sm:$0xf]
          %v3253 = vunpack.c.l.s4 1966171168
          %v3254 = vunpack.c.0.s8 %v3253
          %v3255 = vlaneseq
          %v3256 = vshrl.u32 %v3255, 7
          %v3257 = vsub.s32 %v3254, %v3256
          %v3258 = vrot.slane %v3250, %v3257
          %v3259 = vcombine.high %v3258, %v3258
          %v3260 = vlaneseq
          %v3261 = vshrl.u32 %v3260, 7
          %v3262 = vsub.s32 0, %v3261
          %v3263 = vrot.slane %v3258, %v3262
          %v3264 = vlaneseq
          %v3265 = vshrl.u32 %v3264, 7
          %v3266 = vsub.s32 1, %v3265
          %v3267 = vrot.slane %v3258, %v3266
          %v3268 = vlaneseq
          %v3269 = vshrl.u32 %v3268, 7
          %v3270 = vsub.s32 0, %v3269
          %v3271 = vrot.slane %v3259, %v3270
          %v3272 = vlaneseq
          %v3273 = vshrl.u32 %v3272, 7
          %v3274 = vsub.s32 1, %v3273
          %v3275 = vrot.slane %v3259, %v3274
          %v3280 = vmul.f32 %v3263, %v3186
          %v3281 = vmul.f32 %v3267, %v3187
          %v3282 = vmul.f32 %v3263, %v3188
          %v3283 = vmul.f32 %v3267, %v3189
          %v3284 = vmul.f32 %v3263, %v3190
          %v3285 = vmul.f32 %v3267, %v3191
          %v3286 = vmul.f32 %v3263, %v3192
          %v3287 = vmul.f32 %v3267, %v3193
          %v3288 = vmul.f32 %v3263, %v3194
          %v3289 = vmul.f32 %v3267, %v3195
          %v3290 = vmul.f32 %v3263, %v3196
          %v3291 = vmul.f32 %v3267, %v3197
          %v3292 = vmul.f32 %v3263, %v3198
          %v3293 = vmul.f32 %v3267, %v3199
          %v3294 = vmul.f32 %v3263, %v3200
          %v3295 = vmul.f32 %v3267, %v3201
          %v3296 = vmul.f32 %v3263, %v3202
          %v3297 = vmul.f32 %v3267, %v3203
          %v3298 = vmul.f32 %v3263, %v3204
          %v3299 = vmul.f32 %v3267, %v3205
          %v3300 = vmul.f32 %v3263, %v3206
          %v3301 = vmul.f32 %v3267, %v3207
          %v3302 = vmul.f32 %v3263, %v3208
          %v3303 = vmul.f32 %v3267, %v3209
          %v3304 = vmul.f32 %v3263, %v3210
          %v3305 = vmul.f32 %v3267, %v3211
          %v3306 = vmul.f32 %v3263, %v3212
          %v3307 = vmul.f32 %v3267, %v3213
          %v3308 = vmul.f32 %v3263, %v3214
          %v3309 = vmul.f32 %v3267, %v3215
          %v3310 = vmul.f32 %v3263, %v3216
          %v3311 = vmul.f32 %v3267, %v3217
          %v3312 = vmul.f32 %v3271, %v3218
          %v3313 = vmul.f32 %v3275, %v3219
          %v3314 = vmul.f32 %v3271, %v3220
          %v3315 = vmul.f32 %v3275, %v3221
          %v3316 = vmul.f32 %v3271, %v3222
          %v3317 = vmul.f32 %v3275, %v3223
          %v3318 = vmul.f32 %v3271, %v3224
          %v3319 = vmul.f32 %v3275, %v3225
          %v3320 = vmul.f32 %v3271, %v3226
          %v3321 = vmul.f32 %v3275, %v3227
          %v3322 = vmul.f32 %v3271, %v3228
          %v3323 = vmul.f32 %v3275, %v3229
          %v3324 = vmul.f32 %v3271, %v3230
          %v3325 = vmul.f32 %v3275, %v3231
          %v3326 = vmul.f32 %v3271, %v3232
          %v3327 = vmul.f32 %v3275, %v3233
          %v3328 = vmul.f32 %v3271, %v3234
          %v3329 = vmul.f32 %v3275, %v3235
          %v3330 = vmul.f32 %v3271, %v3236
          %v3331 = vmul.f32 %v3275, %v3237
          %v3332 = vmul.f32 %v3271, %v3238
          %v3333 = vmul.f32 %v3275, %v3239
          %v3334 = vmul.f32 %v3271, %v3240
          %v3335 = vmul.f32 %v3275, %v3241
          %v3336 = vmul.f32 %v3271, %v3242
          %v3337 = vmul.f32 %v3275, %v3243
          %v3338 = vmul.f32 %v3271, %v3244
          %v3339 = vmul.f32 %v3275, %v3245
          %v3340 = vmul.f32 %v3271, %v3246
          %v3341 = vmul.f32 %v3275, %v3247
          %v3342 = vmul.f32 %v3271, %v3248
          %v3343 = vmul.f32 %v3275, %v3249
          %v3344 = vld [vmem:[#allocation8] sm:$0xf]
          %v3347 = vunpack.c.l.s4 1966171168
          %v3348 = vunpack.c.0.s8 %v3347
          %v3349 = vlaneseq
          %v3350 = vshrl.u32 %v3349, 7
          %v3351 = vsub.s32 %v3348, %v3350
          %v3352 = vrot.slane %v3344, %v3351
          %v3353 = vcombine.high %v3352, %v3352
          %v3354 = vlaneseq
          %v3355 = vshrl.u32 %v3354, 7
          %v3356 = vsub.s32 0, %v3355
          %v3357 = vrot.slane %v3352, %v3356
          %v3358 = vlaneseq
          %v3359 = vshrl.u32 %v3358, 7
          %v3360 = vsub.s32 1, %v3359
          %v3361 = vrot.slane %v3352, %v3360
          %v3362 = vlaneseq
          %v3363 = vshrl.u32 %v3362, 7
          %v3364 = vsub.s32 0, %v3363
          %v3365 = vrot.slane %v3353, %v3364
          %v3366 = vlaneseq
          %v3367 = vshrl.u32 %v3366, 7
          %v3368 = vsub.s32 1, %v3367
          %v3369 = vrot.slane %v3353, %v3368
          %v3374 = vadd.f32 %v3280, %v3357
          %v3375 = vadd.f32 %v3281, %v3361
          %v3376 = vadd.f32 %v3282, %v3357
          %v3377 = vadd.f32 %v3283, %v3361
          %v3378 = vadd.f32 %v3284, %v3357
          %v3379 = vadd.f32 %v3285, %v3361
          %v3380 = vadd.f32 %v3286, %v3357
          %v3381 = vadd.f32 %v3287, %v3361
          %v3382 = vadd.f32 %v3288, %v3357
          %v3383 = vadd.f32 %v3289, %v3361
          %v3384 = vadd.f32 %v3290, %v3357
          %v3385 = vadd.f32 %v3291, %v3361
          %v3386 = vadd.f32 %v3292, %v3357
          %v3387 = vadd.f32 %v3293, %v3361
          %v3388 = vadd.f32 %v3294, %v3357
          %v3389 = vadd.f32 %v3295, %v3361
          %v3390 = vadd.f32 %v3296, %v3357
          %v3391 = vadd.f32 %v3297, %v3361
          %v3392 = vadd.f32 %v3298, %v3357
          %v3393 = vadd.f32 %v3299, %v3361
          %v3394 = vadd.f32 %v3300, %v3357
          %v3395 = vadd.f32 %v3301, %v3361
          %v3396 = vadd.f32 %v3302, %v3357
          %v3397 = vadd.f32 %v3303, %v3361
          %v3398 = vadd.f32 %v3304, %v3357
          %v3399 = vadd.f32 %v3305, %v3361
          %v3400 = vadd.f32 %v3306, %v3357
          %v3401 = vadd.f32 %v3307, %v3361
          %v3402 = vadd.f32 %v3308, %v3357
          %v3403 = vadd.f32 %v3309, %v3361
          %v3404 = vadd.f32 %v3310, %v3357
          %v3405 = vadd.f32 %v3311, %v3361
          %v3406 = vadd.f32 %v3312, %v3365
          %v3407 = vadd.f32 %v3313, %v3369
          %v3408 = vadd.f32 %v3314, %v3365
          %v3409 = vadd.f32 %v3315, %v3369
          %v3410 = vadd.f32 %v3316, %v3365
          %v3411 = vadd.f32 %v3317, %v3369
          %v3412 = vadd.f32 %v3318, %v3365
          %v3413 = vadd.f32 %v3319, %v3369
          %v3414 = vadd.f32 %v3320, %v3365
          %v3415 = vadd.f32 %v3321, %v3369
          %v3416 = vadd.f32 %v3322, %v3365
          %v3417 = vadd.f32 %v3323, %v3369
          %v3418 = vadd.f32 %v3324, %v3365
          %v3419 = vadd.f32 %v3325, %v3369
          %v3420 = vadd.f32 %v3326, %v3365
          %v3421 = vadd.f32 %v3327, %v3369
          %v3422 = vadd.f32 %v3328, %v3365
          %v3423 = vadd.f32 %v3329, %v3369
          %v3424 = vadd.f32 %v3330, %v3365
          %v3425 = vadd.f32 %v3331, %v3369
          %v3426 = vadd.f32 %v3332, %v3365
          %v3427 = vadd.f32 %v3333, %v3369
          %v3428 = vadd.f32 %v3334, %v3365
          %v3429 = vadd.f32 %v3335, %v3369
          %v3430 = vadd.f32 %v3336, %v3365
          %v3431 = vadd.f32 %v3337, %v3369
          %v3432 = vadd.f32 %v3338, %v3365
          %v3433 = vadd.f32 %v3339, %v3369
          %v3434 = vadd.f32 %v3340, %v3365
          %v3435 = vadd.f32 %v3341, %v3369
          %v3436 = vadd.f32 %v3342, %v3365
          %v3437 = vadd.f32 %v3343, %v3369
          %v3438 = vmax.f32 %v3374, 0.0
          %v3439 = vmax.f32 %v3375, 0.0
          %v3440 = vmax.f32 %v3376, 0.0
          %v3441 = vmax.f32 %v3377, 0.0
          %v3442 = vmax.f32 %v3378, 0.0
          %v3443 = vmax.f32 %v3379, 0.0
          %v3444 = vmax.f32 %v3380, 0.0
          %v3445 = vmax.f32 %v3381, 0.0
          %v3446 = vmax.f32 %v3382, 0.0
          %v3447 = vmax.f32 %v3383, 0.0
          %v3448 = vmax.f32 %v3384, 0.0
          %v3449 = vmax.f32 %v3385, 0.0
          %v3450 = vmax.f32 %v3386, 0.0
          %v3451 = vmax.f32 %v3387, 0.0
          %v3452 = vmax.f32 %v3388, 0.0
          %v3453 = vmax.f32 %v3389, 0.0
          %v3454 = vmax.f32 %v3390, 0.0
          %v3455 = vmax.f32 %v3391, 0.0
          %v3456 = vmax.f32 %v3392, 0.0
          %v3457 = vmax.f32 %v3393, 0.0
          %v3458 = vmax.f32 %v3394, 0.0
          %v3459 = vmax.f32 %v3395, 0.0
          %v3460 = vmax.f32 %v3396, 0.0
          %v3461 = vmax.f32 %v3397, 0.0
          %v3462 = vmax.f32 %v3398, 0.0
          %v3463 = vmax.f32 %v3399, 0.0
          %v3464 = vmax.f32 %v3400, 0.0
          %v3465 = vmax.f32 %v3401, 0.0
          %v3466 = vmax.f32 %v3402, 0.0
          %v3467 = vmax.f32 %v3403, 0.0
          %v3468 = vmax.f32 %v3404, 0.0
          %v3469 = vmax.f32 %v3405, 0.0
          %v3470 = vmax.f32 %v3406, 0.0
          %v3471 = vmax.f32 %v3407, 0.0
          %v3472 = vmax.f32 %v3408, 0.0
          %v3473 = vmax.f32 %v3409, 0.0
          %v3474 = vmax.f32 %v3410, 0.0
          %v3475 = vmax.f32 %v3411, 0.0
          %v3476 = vmax.f32 %v3412, 0.0
          %v3477 = vmax.f32 %v3413, 0.0
          %v3478 = vmax.f32 %v3414, 0.0
          %v3479 = vmax.f32 %v3415, 0.0
          %v3480 = vmax.f32 %v3416, 0.0
          %v3481 = vmax.f32 %v3417, 0.0
          %v3482 = vmax.f32 %v3418, 0.0
          %v3483 = vmax.f32 %v3419, 0.0
          %v3484 = vmax.f32 %v3420, 0.0
          %v3485 = vmax.f32 %v3421, 0.0
          %v3486 = vmax.f32 %v3422, 0.0
          %v3487 = vmax.f32 %v3423, 0.0
          %v3488 = vmax.f32 %v3424, 0.0
          %v3489 = vmax.f32 %v3425, 0.0
          %v3490 = vmax.f32 %v3426, 0.0
          %v3491 = vmax.f32 %v3427, 0.0
          %v3492 = vmax.f32 %v3428, 0.0
          %v3493 = vmax.f32 %v3429, 0.0
          %v3494 = vmax.f32 %v3430, 0.0
          %v3495 = vmax.f32 %v3431, 0.0
          %v3496 = vmax.f32 %v3432, 0.0
          %v3497 = vmax.f32 %v3433, 0.0
          %v3498 = vmax.f32 %v3434, 0.0
          %v3499 = vmax.f32 %v3435, 0.0
          %v3500 = vmax.f32 %v3436, 0.0
          %v3501 = vmax.f32 %v3437, 0.0
          %v3502 = vpack.c.bf16 %v3440, %v3438
          %v3503 = vpack.c.bf16 %v3441, %v3439
          %v3504 = vpack.c.bf16 %v3444, %v3442
          %v3505 = vpack.c.bf16 %v3445, %v3443
          %v3506 = vpack.c.bf16 %v3448, %v3446
          %v3507 = vpack.c.bf16 %v3449, %v3447
          %v3508 = vpack.c.bf16 %v3452, %v3450
          %v3509 = vpack.c.bf16 %v3453, %v3451
          %v3510 = vpack.c.bf16 %v3456, %v3454
          %v3511 = vpack.c.bf16 %v3457, %v3455
          %v3512 = vpack.c.bf16 %v3460, %v3458
          %v3513 = vpack.c.bf16 %v3461, %v3459
          %v3514 = vpack.c.bf16 %v3464, %v3462
          %v3515 = vpack.c.bf16 %v3465, %v3463
          %v3516 = vpack.c.bf16 %v3468, %v3466
          %v3517 = vpack.c.bf16 %v3469, %v3467
          %v3518 = vpack.c.bf16 %v3472, %v3470
          %v3519 = vpack.c.bf16 %v3473, %v3471
          %v3520 = vpack.c.bf16 %v3476, %v3474
          %v3521 = vpack.c.bf16 %v3477, %v3475
          %v3522 = vpack.c.bf16 %v3480, %v3478
          %v3523 = vpack.c.bf16 %v3481, %v3479
          %v3524 = vpack.c.bf16 %v3484, %v3482
          %v3525 = vpack.c.bf16 %v3485, %v3483
          %v3526 = vpack.c.bf16 %v3488, %v3486
          %v3527 = vpack.c.bf16 %v3489, %v3487
          %v3528 = vpack.c.bf16 %v3492, %v3490
          %v3529 = vpack.c.bf16 %v3493, %v3491
          %v3530 = vpack.c.bf16 %v3496, %v3494
          %v3531 = vpack.c.bf16 %v3497, %v3495
          %v3532 = vpack.c.bf16 %v3500, %v3498
          %v3533 = vpack.c.bf16 %v3501, %v3499
          %v3534 = vld [vmem:[%s707] sm:$0xff]
          %v3535 = vld [vmem:[%s707 + $0x8] sm:$0xff]
          %v3536 = vld [vmem:[%s707 + $0x10] sm:$0xff]
          %v3537 = vld [vmem:[%s707 + $0x18] sm:$0xff]
          %v3538 = vld [vmem:[%s707 + $0x20] sm:$0xff]
          %v3539 = vld [vmem:[%s707 + $0x28] sm:$0xff]
          %v3540 = vld [vmem:[%s707 + $0x30] sm:$0xff]
          %v3541 = vld [vmem:[%s707 + $0x38] sm:$0xff]
          %v3542 = vld [vmem:[%s707 + $0x40] sm:$0xff]
          %v3543 = vld [vmem:[%s707 + $0x48] sm:$0xff]
          %v3544 = vld [vmem:[%s707 + $0x50] sm:$0xff]
          %v3545 = vld [vmem:[%s707 + $0x58] sm:$0xff]
          %v3546 = vld [vmem:[%s707 + $0x60] sm:$0xff]
          %v3547 = vld [vmem:[%s707 + $0x68] sm:$0xff]
          %v3548 = vld [vmem:[%s707 + $0x70] sm:$0xff]
          %v3549 = vld [vmem:[%s707 + $0x78] sm:$0xff]
          %v3550 = vld [vmem:[%s707 + $0x80] sm:$0xff]
          %v3551 = vld [vmem:[%s707 + $0x88] sm:$0xff]
          %v3552 = vld [vmem:[%s707 + $0x90] sm:$0xff]
          %v3553 = vld [vmem:[%s707 + $0x98] sm:$0xff]
          %v3554 = vld [vmem:[%s707 + $0xa0] sm:$0xff]
          %v3555 = vld [vmem:[%s707 + $0xa8] sm:$0xff]
          %v3556 = vld [vmem:[%s707 + $0xb0] sm:$0xff]
          %v3557 = vld [vmem:[%s707 + $0xb8] sm:$0xff]
          %v3558 = vld [vmem:[%s707 + $0xc0] sm:$0xff]
          %v3559 = vld [vmem:[%s707 + $0xc8] sm:$0xff]
          %v3560 = vld [vmem:[%s707 + $0xd0] sm:$0xff]
          %v3561 = vld [vmem:[%s707 + $0xd8] sm:$0xff]
          %v3562 = vld [vmem:[%s707 + $0xe0] sm:$0xff]
          %v3563 = vld [vmem:[%s707 + $0xe8] sm:$0xff]
          %v3564 = vld [vmem:[%s707 + $0xf0] sm:$0xff]
          %v3565 = vld [vmem:[%s707 + $0xf8] sm:$0xff]
          %v3566 = vld [vmem:[%s721] sm:$0x3]
          %v3568 = vlaneseq
          %v3569 = vshrl.u32 %v3568, 7
          %v3570 = vsub.s32 0, %v3569
          %v3571 = vrot.slane %v3566, %v3570
          %v3572 = vlaneseq
          %v3573 = vshrl.u32 %v3572, 7
          %v3574 = vsub.s32 1, %v3573
          %v3575 = vrot.slane %v3566, %v3574
          %v3610 = vunpack.c.l.b16 %v3534
          %v3611 = vunpack.c.h.b16 %v3534
          %v3612 = vunpack.c.l.b16 %v3535
          %v3613 = vunpack.c.h.b16 %v3535
          %v3614 = vunpack.c.l.b16 %v3536
          %v3615 = vunpack.c.h.b16 %v3536
          %v3616 = vunpack.c.l.b16 %v3537
          %v3617 = vunpack.c.h.b16 %v3537
          %v3618 = vunpack.c.l.b16 %v3538
          %v3619 = vunpack.c.h.b16 %v3538
          %v3620 = vunpack.c.l.b16 %v3539
          %v3621 = vunpack.c.h.b16 %v3539
          %v3622 = vunpack.c.l.b16 %v3540
          %v3623 = vunpack.c.h.b16 %v3540
          %v3624 = vunpack.c.l.b16 %v3541
          %v3625 = vunpack.c.h.b16 %v3541
          %v3626 = vunpack.c.l.b16 %v3542
          %v3627 = vunpack.c.h.b16 %v3542
          %v3628 = vunpack.c.l.b16 %v3543
          %v3629 = vunpack.c.h.b16 %v3543
          %v3630 = vunpack.c.l.b16 %v3544
          %v3631 = vunpack.c.h.b16 %v3544
          %v3632 = vunpack.c.l.b16 %v3545
          %v3633 = vunpack.c.h.b16 %v3545
          %v3634 = vunpack.c.l.b16 %v3546
          %v3635 = vunpack.c.h.b16 %v3546
          %v3636 = vunpack.c.l.b16 %v3547
          %v3637 = vunpack.c.h.b16 %v3547
          %v3638 = vunpack.c.l.b16 %v3548
          %v3639 = vunpack.c.h.b16 %v3548
          %v3640 = vunpack.c.l.b16 %v3549
          %v3641 = vunpack.c.h.b16 %v3549
          %v3642 = vunpack.c.l.b16 %v3550
          %v3643 = vunpack.c.h.b16 %v3550
          %v3644 = vunpack.c.l.b16 %v3551
          %v3645 = vunpack.c.h.b16 %v3551
          %v3646 = vunpack.c.l.b16 %v3552
          %v3647 = vunpack.c.h.b16 %v3552
          %v3648 = vunpack.c.l.b16 %v3553
          %v3649 = vunpack.c.h.b16 %v3553
          %v3650 = vunpack.c.l.b16 %v3554
          %v3651 = vunpack.c.h.b16 %v3554
          %v3652 = vunpack.c.l.b16 %v3555
          %v3653 = vunpack.c.h.b16 %v3555
          %v3654 = vunpack.c.l.b16 %v3556
          %v3655 = vunpack.c.h.b16 %v3556
          %v3656 = vunpack.c.l.b16 %v3557
          %v3657 = vunpack.c.h.b16 %v3557
          %v3658 = vunpack.c.l.b16 %v3558
          %v3659 = vunpack.c.h.b16 %v3558
          %v3660 = vunpack.c.l.b16 %v3559
          %v3661 = vunpack.c.h.b16 %v3559
          %v3662 = vunpack.c.l.b16 %v3560
          %v3663 = vunpack.c.h.b16 %v3560
          %v3664 = vunpack.c.l.b16 %v3561
          %v3665 = vunpack.c.h.b16 %v3561
          %v3666 = vunpack.c.l.b16 %v3562
          %v3667 = vunpack.c.h.b16 %v3562
          %v3668 = vunpack.c.l.b16 %v3563
          %v3669 = vunpack.c.h.b16 %v3563
          %v3670 = vunpack.c.l.b16 %v3564
          %v3671 = vunpack.c.h.b16 %v3564
          %v3672 = vunpack.c.l.b16 %v3565
          %v3673 = vunpack.c.h.b16 %v3565
          %v3674 = vpack.c.b16 %v3612, %v3610
          %v3675 = vpack.c.b16 %v3613, %v3611
          %v3676 = vpack.c.b16 %v3616, %v3614
          %v3677 = vpack.c.b16 %v3617, %v3615
          %v3678 = vpack.c.b16 %v3620, %v3618
          %v3679 = vpack.c.b16 %v3621, %v3619
          %v3680 = vpack.c.b16 %v3624, %v3622
          %v3681 = vpack.c.b16 %v3625, %v3623
          %v3682 = vpack.c.b16 %v3628, %v3626
          %v3683 = vpack.c.b16 %v3629, %v3627
          %v3684 = vpack.c.b16 %v3632, %v3630
          %v3685 = vpack.c.b16 %v3633, %v3631
          %v3686 = vpack.c.b16 %v3636, %v3634
          %v3687 = vpack.c.b16 %v3637, %v3635
          %v3688 = vpack.c.b16 %v3640, %v3638
          %v3689 = vpack.c.b16 %v3641, %v3639
          %v3690 = vpack.c.b16 %v3644, %v3642
          %v3691 = vpack.c.b16 %v3645, %v3643
          %v3692 = vpack.c.b16 %v3648, %v3646
          %v3693 = vpack.c.b16 %v3649, %v3647
          %v3694 = vpack.c.b16 %v3652, %v3650
          %v3695 = vpack.c.b16 %v3653, %v3651
          %v3696 = vpack.c.b16 %v3656, %v3654
          %v3697 = vpack.c.b16 %v3657, %v3655
          %v3698 = vpack.c.b16 %v3660, %v3658
          %v3699 = vpack.c.b16 %v3661, %v3659
          %v3700 = vpack.c.b16 %v3664, %v3662
          %v3701 = vpack.c.b16 %v3665, %v3663
          %v3702 = vpack.c.b16 %v3668, %v3666
          %v3703 = vpack.c.b16 %v3669, %v3667
          %v3704 = vpack.c.b16 %v3672, %v3670
          %v3705 = vpack.c.b16 %v3673, %v3671
          %3738 = vmatprep.subr.bf16.mxu0 %v3675
          %3739 = vmatpush1.bf16.msra.mxu0 %v3674
          %3740 = vmatprep.subr.bf16.mxu0 %v3677
          %3741 = vmatpush1.bf16.msra.mxu0 %v3676
          %3742 = vmatprep.subr.bf16.mxu0 %v3679
          %3743 = vmatpush1.bf16.msra.mxu0 %v3678
          %3744 = vmatprep.subr.bf16.mxu0 %v3681
          %3745 = vmatpush1.bf16.msra.mxu0 %v3680
          %3746 = vmatprep.subr.bf16.mxu0 %v3683
          %3747 = vmatpush1.bf16.msra.mxu0 %v3682
          %3748 = vmatprep.subr.bf16.mxu0 %v3685
          %3749 = vmatpush1.bf16.msra.mxu0 %v3684
          %3750 = vmatprep.subr.bf16.mxu0 %v3687
          %3751 = vmatpush1.bf16.msra.mxu0 %v3686
          %3752 = vmatprep.subr.bf16.mxu0 %v3689
          %3753 = vmatpush1.bf16.msra.mxu0 %v3688
          %3754 = vmatprep.subr.bf16.mxu0 %v3691
          %3755 = vmatpush1.bf16.msra.mxu0 %v3690
          %3756 = vmatprep.subr.bf16.mxu0 %v3693
          %3757 = vmatpush1.bf16.msra.mxu0 %v3692
          %3758 = vmatprep.subr.bf16.mxu0 %v3695
          %3759 = vmatpush1.bf16.msra.mxu0 %v3694
          %3760 = vmatprep.subr.bf16.mxu0 %v3697
          %3761 = vmatpush1.bf16.msra.mxu0 %v3696
          %3762 = vmatprep.subr.bf16.mxu0 %v3699
          %3763 = vmatpush1.bf16.msra.mxu0 %v3698
          %3764 = vmatprep.subr.bf16.mxu0 %v3701
          %3765 = vmatpush1.bf16.msra.mxu0 %v3700
          %3766 = vmatprep.subr.bf16.mxu0 %v3703
          %3767 = vmatpush1.bf16.msra.mxu0 %v3702
          %3768 = vmatprep.subr.bf16.mxu0 %v3705
          %3769 = vmatpush1.bf16.msra.mxu0 %v3704
          %3770 = vmatprep.mubr.bf16.mxu0 %v3503
          %3771 = vmatmul.mubr.bf16.gmra.mrb[0].mxu0 %v3502
          %v3772 = vpop.f32.mrb[0].mxu0
          %v3773 = vadd.f32 %v3571, %v3772
          %v3774 = vpop.f32.mrb[0].mxu0
          %v3775 = vadd.f32 %v3575, %v3774
          %v3776 = vpop.f32.mrb[0].mxu0
          %v3777 = vadd.f32 %v3571, %v3776
          %v3778 = vpop.f32.mrb[0].mxu0
          %v3779 = vadd.f32 %v3575, %v3778
          %3780 = vmatprep.mubr.bf16.mxu0 %v3505
          %3781 = vmatmul.mubr.bf16.gmra.mrb[0].mxu0 %v3504
          %v3782 = vpop.f32.mrb[0].mxu0
          %v3783 = vadd.f32 %v3571, %v3782
          %v3784 = vpop.f32.mrb[0].mxu0
          %v3785 = vadd.f32 %v3575, %v3784
          %v3786 = vpop.f32.mrb[0].mxu0
          %v3787 = vadd.f32 %v3571, %v3786
          %v3788 = vpop.f32.mrb[0].mxu0
          %v3789 = vadd.f32 %v3575, %v3788
          %3790 = vmatprep.mubr.bf16.mxu0 %v3507
          %3791 = vmatmul.mubr.bf16.gmra.mrb[0].mxu0 %v3506
          %v3792 = vpop.f32.mrb[0].mxu0
          %v3793 = vadd.f32 %v3571, %v3792
          %v3794 = vpop.f32.mrb[0].mxu0
          %v3795 = vadd.f32 %v3575, %v3794
          %v3796 = vpop.f32.mrb[0].mxu0
          %v3797 = vadd.f32 %v3571, %v3796
          %v3798 = vpop.f32.mrb[0].mxu0
          %v3799 = vadd.f32 %v3575, %v3798
          %3800 = vmatprep.mubr.bf16.mxu0 %v3509
          %3801 = vmatmul.mubr.bf16.gmra.mrb[0].mxu0 %v3508
          %v3802 = vpop.f32.mrb[0].mxu0
          %v3803 = vadd.f32 %v3571, %v3802
          %v3804 = vpop.f32.mrb[0].mxu0
          %v3805 = vadd.f32 %v3575, %v3804
          %v3806 = vpop.f32.mrb[0].mxu0
          %v3807 = vadd.f32 %v3571, %v3806
          %v3808 = vpop.f32.mrb[0].mxu0
          %v3809 = vadd.f32 %v3575, %v3808
          %3810 = vmatprep.mubr.bf16.mxu0 %v3511
          %3811 = vmatmul.mubr.bf16.gmra.mrb[0].mxu0 %v3510
          %v3812 = vpop.f32.mrb[0].mxu0
          %v3813 = vadd.f32 %v3571, %v3812
          %v3814 = vpop.f32.mrb[0].mxu0
          %v3815 = vadd.f32 %v3575, %v3814
          %v3816 = vpop.f32.mrb[0].mxu0
          %v3817 = vadd.f32 %v3571, %v3816
          %v3818 = vpop.f32.mrb[0].mxu0
          %v3819 = vadd.f32 %v3575, %v3818
          %3820 = vmatprep.mubr.bf16.mxu0 %v3513
          %3821 = vmatmul.mubr.bf16.gmra.mrb[0].mxu0 %v3512
          %v3822 = vpop.f32.mrb[0].mxu0
          %v3823 = vadd.f32 %v3571, %v3822
          %v3824 = vpop.f32.mrb[0].mxu0
          %v3825 = vadd.f32 %v3575, %v3824
          %v3826 = vpop.f32.mrb[0].mxu0
          %v3827 = vadd.f32 %v3571, %v3826
          %v3828 = vpop.f32.mrb[0].mxu0
          %v3829 = vadd.f32 %v3575, %v3828
          %3830 = vmatprep.mubr.bf16.mxu0 %v3515
          %3831 = vmatmul.mubr.bf16.gmra.mrb[0].mxu0 %v3514
          %v3832 = vpop.f32.mrb[0].mxu0
          %v3833 = vadd.f32 %v3571, %v3832
          %v3834 = vpop.f32.mrb[0].mxu0
          %v3835 = vadd.f32 %v3575, %v3834
          %v3836 = vpop.f32.mrb[0].mxu0
          %v3837 = vadd.f32 %v3571, %v3836
          %v3838 = vpop.f32.mrb[0].mxu0
          %v3839 = vadd.f32 %v3575, %v3838
          %3840 = vmatprep.mubr.bf16.mxu0 %v3517
          %3841 = vmatmul.mubr.bf16.gmra.mrb[0].mxu0 %v3516
          %v3842 = vpop.f32.mrb[0].mxu0
          %v3843 = vadd.f32 %v3571, %v3842
          %v3844 = vpop.f32.mrb[0].mxu0
          %v3845 = vadd.f32 %v3575, %v3844
          %v3846 = vpop.f32.mrb[0].mxu0
          %v3847 = vadd.f32 %v3571, %v3846
          %v3848 = vpop.f32.mrb[0].mxu0
          %v3849 = vadd.f32 %v3575, %v3848
          %3850 = vmatprep.mubr.bf16.mxu0 %v3519
          %3851 = vmatmul.mubr.bf16.gmra.mrb[0].mxu0 %v3518
          %v3852 = vpop.f32.mrb[0].mxu0
          %v3853 = vadd.f32 %v3571, %v3852
          %v3854 = vpop.f32.mrb[0].mxu0
          %v3855 = vadd.f32 %v3575, %v3854
          %v3856 = vpop.f32.mrb[0].mxu0
          %v3857 = vadd.f32 %v3571, %v3856
          %v3858 = vpop.f32.mrb[0].mxu0
          %v3859 = vadd.f32 %v3575, %v3858
          %3860 = vmatprep.mubr.bf16.mxu0 %v3521
          %3861 = vmatmul.mubr.bf16.gmra.mrb[0].mxu0 %v3520
          %v3862 = vpop.f32.mrb[0].mxu0
          %v3863 = vadd.f32 %v3571, %v3862
          %v3864 = vpop.f32.mrb[0].mxu0
          %v3865 = vadd.f32 %v3575, %v3864
          %v3866 = vpop.f32.mrb[0].mxu0
          %v3867 = vadd.f32 %v3571, %v3866
          %v3868 = vpop.f32.mrb[0].mxu0
          %v3869 = vadd.f32 %v3575, %v3868
          %3870 = vmatprep.mubr.bf16.mxu0 %v3523
          %3871 = vmatmul.mubr.bf16.gmra.mrb[0].mxu0 %v3522
          %v3872 = vpop.f32.mrb[0].mxu0
          %v3873 = vadd.f32 %v3571, %v3872
          %v3874 = vpop.f32.mrb[0].mxu0
          %v3875 = vadd.f32 %v3575, %v3874
          %v3876 = vpop.f32.mrb[0].mxu0
          %v3877 = vadd.f32 %v3571, %v3876
          %v3878 = vpop.f32.mrb[0].mxu0
          %v3879 = vadd.f32 %v3575, %v3878
          %3880 = vmatprep.mubr.bf16.mxu0 %v3525
          %3881 = vmatmul.mubr.bf16.gmra.mrb[0].mxu0 %v3524
          %v3882 = vpop.f32.mrb[0].mxu0
          %v3883 = vadd.f32 %v3571, %v3882
          %v3884 = vpop.f32.mrb[0].mxu0
          %v3885 = vadd.f32 %v3575, %v3884
          %v3886 = vpop.f32.mrb[0].mxu0
          %v3887 = vadd.f32 %v3571, %v3886
          %v3888 = vpop.f32.mrb[0].mxu0
          %v3889 = vadd.f32 %v3575, %v3888
          %3890 = vmatprep.mubr.bf16.mxu0 %v3527
          %3891 = vmatmul.mubr.bf16.gmra.mrb[0].mxu0 %v3526
          %v3892 = vpop.f32.mrb[0].mxu0
          %v3893 = vadd.f32 %v3571, %v3892
          %v3894 = vpop.f32.mrb[0].mxu0
          %v3895 = vadd.f32 %v3575, %v3894
          %v3896 = vpop.f32.mrb[0].mxu0
          %v3897 = vadd.f32 %v3571, %v3896
          %v3898 = vpop.f32.mrb[0].mxu0
          %v3899 = vadd.f32 %v3575, %v3898
          %3900 = vmatprep.mubr.bf16.mxu0 %v3529
          %3901 = vmatmul.mubr.bf16.gmra.mrb[0].mxu0 %v3528
          %v3902 = vpop.f32.mrb[0].mxu0
          %v3903 = vadd.f32 %v3571, %v3902
          %v3904 = vpop.f32.mrb[0].mxu0
          %v3905 = vadd.f32 %v3575, %v3904
          %v3906 = vpop.f32.mrb[0].mxu0
          %v3907 = vadd.f32 %v3571, %v3906
          %v3908 = vpop.f32.mrb[0].mxu0
          %v3909 = vadd.f32 %v3575, %v3908
          %3910 = vmatprep.mubr.bf16.mxu0 %v3531
          %3911 = vmatmul.mubr.bf16.gmra.mrb[0].mxu0 %v3530
          %v3912 = vpop.f32.mrb[0].mxu0
          %v3913 = vadd.f32 %v3571, %v3912
          %v3914 = vpop.f32.mrb[0].mxu0
          %v3915 = vadd.f32 %v3575, %v3914
          %v3916 = vpop.f32.mrb[0].mxu0
          %v3917 = vadd.f32 %v3571, %v3916
          %v3918 = vpop.f32.mrb[0].mxu0
          %v3919 = vadd.f32 %v3575, %v3918
          %3920 = vmatprep.mubr.bf16.mxu0 %v3533
          %3921 = vmatmul.mubr.bf16.gmra.mrb[0].mxu0 %v3532
          %v3922 = vpop.f32.mrb[0].mxu0
          %v3923 = vadd.f32 %v3571, %v3922
          %v3924 = vpop.f32.mrb[0].mxu0
          %v3925 = vadd.f32 %v3575, %v3924
          %v3926 = vpop.f32.mrb[0].mxu0
          %v3927 = vadd.f32 %v3571, %v3926
          %v3928 = vpop.f32.mrb[0].mxu0
          %v3929 = vadd.f32 %v3575, %v3928
          %3930 = vdwg.mxu0
          %v3931 = vpack.c.bf16 %v3777, %v3773
          %v3932 = vpack.c.bf16 %v3779, %v3775
          %v3933 = vpack.c.bf16 %v3787, %v3783
          %v3934 = vpack.c.bf16 %v3789, %v3785
          %v3935 = vpack.c.bf16 %v3797, %v3793
          %v3936 = vpack.c.bf16 %v3799, %v3795
          %v3937 = vpack.c.bf16 %v3807, %v3803
          %v3938 = vpack.c.bf16 %v3809, %v3805
          %v3939 = vpack.c.bf16 %v3817, %v3813
          %v3940 = vpack.c.bf16 %v3819, %v3815
          %v3941 = vpack.c.bf16 %v3827, %v3823
          %v3942 = vpack.c.bf16 %v3829, %v3825
          %v3943 = vpack.c.bf16 %v3837, %v3833
          %v3944 = vpack.c.bf16 %v3839, %v3835
          %v3945 = vpack.c.bf16 %v3847, %v3843
          %v3946 = vpack.c.bf16 %v3849, %v3845
          %v3947 = vpack.c.bf16 %v3857, %v3853
          %v3948 = vpack.c.bf16 %v3859, %v3855
          %v3949 = vpack.c.bf16 %v3867, %v3863
          %v3950 = vpack.c.bf16 %v3869, %v3865
          %v3951 = vpack.c.bf16 %v3877, %v3873
          %v3952 = vpack.c.bf16 %v3879, %v3875
          %v3953 = vpack.c.bf16 %v3887, %v3883
          %v3954 = vpack.c.bf16 %v3889, %v3885
          %v3955 = vpack.c.bf16 %v3897, %v3893
          %v3956 = vpack.c.bf16 %v3899, %v3895
          %v3957 = vpack.c.bf16 %v3907, %v3903
          %v3958 = vpack.c.bf16 %v3909, %v3905
          %v3959 = vpack.c.bf16 %v3917, %v3913
          %v3960 = vpack.c.bf16 %v3919, %v3915
          %v3961 = vpack.c.bf16 %v3927, %v3923
          %v3962 = vpack.c.bf16 %v3929, %v3925
          %3963 = vst [vmem:[%s3153] sm:$0xff] %v3931
          %3964 = vst [vmem:[%s3153 + $0x8] sm:$0xff] %v3932
          %3965 = vst [vmem:[%s3153 + $0x10] sm:$0xff] %v3933
          %3966 = vst [vmem:[%s3153 + $0x18] sm:$0xff] %v3934
          %3967 = vst [vmem:[%s3153 + $0x20] sm:$0xff] %v3935
          %3968 = vst [vmem:[%s3153 + $0x28] sm:$0xff] %v3936
          %3969 = vst [vmem:[%s3153 + $0x30] sm:$0xff] %v3937
          %3970 = vst [vmem:[%s3153 + $0x38] sm:$0xff] %v3938
          %3971 = vst [vmem:[%s3153 + $0x40] sm:$0xff] %v3939
          %3972 = vst [vmem:[%s3153 + $0x48] sm:$0xff] %v3940
          %3973 = vst [vmem:[%s3153 + $0x50] sm:$0xff] %v3941
          %3974 = vst [vmem:[%s3153 + $0x58] sm:$0xff] %v3942
          %3975 = vst [vmem:[%s3153 + $0x60] sm:$0xff] %v3943
          %3976 = vst [vmem:[%s3153 + $0x68] sm:$0xff] %v3944
          %3977 = vst [vmem:[%s3153 + $0x70] sm:$0xff] %v3945
          %3978 = vst [vmem:[%s3153 + $0x78] sm:$0xff] %v3946
          %3979 = vst [vmem:[%s3153 + $0x80] sm:$0xff] %v3947
          %3980 = vst [vmem:[%s3153 + $0x88] sm:$0xff] %v3948
          %3981 = vst [vmem:[%s3153 + $0x90] sm:$0xff] %v3949
          %3982 = vst [vmem:[%s3153 + $0x98] sm:$0xff] %v3950
          %3983 = vst [vmem:[%s3153 + $0xa0] sm:$0xff] %v3951
          %3984 = vst [vmem:[%s3153 + $0xa8] sm:$0xff] %v3952
          %3985 = vst [vmem:[%s3153 + $0xb0] sm:$0xff] %v3953
          %3986 = vst [vmem:[%s3153 + $0xb8] sm:$0xff] %v3954
          %3987 = vst [vmem:[%s3153 + $0xc0] sm:$0xff] %v3955
          %3988 = vst [vmem:[%s3153 + $0xc8] sm:$0xff] %v3956
          %3989 = vst [vmem:[%s3153 + $0xd0] sm:$0xff] %v3957
          %3990 = vst [vmem:[%s3153 + $0xd8] sm:$0xff] %v3958
          %3991 = vst [vmem:[%s3153 + $0xe0] sm:$0xff] %v3959
          %3992 = vst [vmem:[%s3153 + $0xe8] sm:$0xff] %v3960
          %3993 = vst [vmem:[%s3153 + $0xf0] sm:$0xff] %v3961
          %3994 = vst [vmem:[%s3153 + $0xf8] sm:$0xff] %v3962
          %v3995 = vld [vmem:[#allocation5] sm:$0x3]
          %v3996 = vadd.f32 %v3773, %v3777
          %v3997 = vadd.f32 %v3996, %v3783
          %v3998 = vadd.f32 %v3997, %v3787
          %v3999 = vadd.f32 %v3998, %v3793
          %v4000 = vadd.f32 %v3999, %v3797
          %v4001 = vadd.f32 %v4000, %v3803
          %v4002 = vadd.f32 %v4001, %v3807
          %v4003 = vadd.f32 %v4002, %v3813
          %v4004 = vadd.f32 %v4003, %v3817
          %v4005 = vadd.f32 %v4004, %v3823
          %v4006 = vadd.f32 %v4005, %v3827
          %v4007 = vadd.f32 %v4006, %v3833
          %v4008 = vadd.f32 %v4007, %v3837
          %v4009 = vadd.f32 %v4008, %v3843
          %v4010 = vadd.f32 %v4009, %v3847
          %v4011 = vadd.f32 %v4010, %v3853
          %v4012 = vadd.f32 %v4011, %v3857
          %v4013 = vadd.f32 %v4012, %v3863
          %v4014 = vadd.f32 %v4013, %v3867
          %v4015 = vadd.f32 %v4014, %v3873
          %v4016 = vadd.f32 %v4015, %v3877
          %v4017 = vadd.f32 %v4016, %v3883
          %v4018 = vadd.f32 %v4017, %v3887
          %v4019 = vadd.f32 %v4018, %v3893
          %v4020 = vadd.f32 %v4019, %v3897
          %v4021 = vadd.f32 %v4020, %v3903
          %v4022 = vadd.f32 %v4021, %v3907
          %v4023 = vadd.f32 %v4022, %v3913
          %v4024 = vadd.f32 %v4023, %v3917
          %v4025 = vadd.f32 %v4024, %v3923
          %v4026 = vadd.f32 %v4025, %v3927
          %v4027 = vrot.slane %v4026, 4
          %v4028 = vadd.f32 %v4026, %v4027
          %v4029 = vrot.slane %v4028, 2
          %v4030 = vadd.f32 %v4028, %v4029
          %v4031 = vrot.slane %v4030, 1
          %v4032 = vadd.f32 %v4030, %v4031
          %v4033 = vadd.f32 %v3775, %v3779
          %v4034 = vadd.f32 %v4033, %v3785
          %v4035 = vadd.f32 %v4034, %v3789
          %v4036 = vadd.f32 %v4035, %v3795
          %v4037 = vadd.f32 %v4036, %v3799
          %v4038 = vadd.f32 %v4037, %v3805
          %v4039 = vadd.f32 %v4038, %v3809
          %v4040 = vadd.f32 %v4039, %v3815
          %v4041 = vadd.f32 %v4040, %v3819
          %v4042 = vadd.f32 %v4041, %v3825
          %v4043 = vadd.f32 %v4042, %v3829
          %v4044 = vadd.f32 %v4043, %v3835
          %v4045 = vadd.f32 %v4044, %v3839
          %v4046 = vadd.f32 %v4045, %v3845
          %v4047 = vadd.f32 %v4046, %v3849
          %v4048 = vadd.f32 %v4047, %v3855
          %v4049 = vadd.f32 %v4048, %v3859
          %v4050 = vadd.f32 %v4049, %v3865
          %v4051 = vadd.f32 %v4050, %v3869
          %v4052 = vadd.f32 %v4051, %v3875
          %v4053 = vadd.f32 %v4052, %v3879
          %v4054 = vadd.f32 %v4053, %v3885
          %v4055 = vadd.f32 %v4054, %v3889
          %v4056 = vadd.f32 %v4055, %v3895
          %v4057 = vadd.f32 %v4056, %v3899
          %v4058 = vadd.f32 %v4057, %v3905
          %v4059 = vadd.f32 %v4058, %v3909
          %v4060 = vadd.f32 %v4059, %v3915
          %v4061 = vadd.f32 %v4060, %v3919
          %v4062 = vadd.f32 %v4061, %v3925
          %v4063 = vadd.f32 %v4062, %v3929
          %v4064 = vrot.slane %v4063, 4
          %v4065 = vadd.f32 %v4063, %v4064
          %v4066 = vrot.slane %v4065, 2
          %v4067 = vadd.f32 %v4065, %v4066
          %v4068 = vrot.slane %v4067, 1
          %v4069 = vadd.f32 %v4067, %v4068
          %v4072 = vcombine.low %v4032, %v4069
          %v4074 = vunpack.c.l.s4 1966171168
          %v4075 = vunpack.c.0.s8 %v4074
          %v4076 = vlaneseq
          %v4077 = vshrl.u32 %v4076, 7
          %v4078 = vsub.s32 %v4075, %v4077
          %v4079 = vrot.slane %v4072, %v4078
          %v4081 = vunpack.c.l.s4 1966171168
          %v4082 = vunpack.c.0.s8 %v4081
          %v4083 = vlaneseq
          %v4084 = vshrl.u32 %v4083, 7
          %v4085 = vsub.s32 %v4082, %v4084
          %v4086 = vrot.slane %v4079, %v4085
          %v4088 = vadd.f32 %v3995, %v4086
          %v4089 = vlaneseq
          %vm4090 = vcmp.ge.s32.totalorder %v4089, 0
          %vm4091 = vcmp.lt.s32.totalorder %v4089, 256
          %vm4092 = vmand %vm4090, %vm4091
          %4093 = vst.msk [vmem:[#allocation5] sm:$0x3] %vm4092, %v4088
          %v4094 = vld [vmem:[#allocation6] sm:$0x3]
          %v4095 = vmul.f32 %v3773, %v3773
          %v4096 = vmul.f32 %v3775, %v3775
          %v4097 = vmul.f32 %v3777, %v3777
          %v4098 = vmul.f32 %v3779, %v3779
          %v4099 = vmul.f32 %v3783, %v3783
          %v4100 = vmul.f32 %v3785, %v3785
          %v4101 = vmul.f32 %v3787, %v3787
          %v4102 = vmul.f32 %v3789, %v3789
          %v4103 = vmul.f32 %v3793, %v3793
          %v4104 = vmul.f32 %v3795, %v3795
          %v4105 = vmul.f32 %v3797, %v3797
          %v4106 = vmul.f32 %v3799, %v3799
          %v4107 = vmul.f32 %v3803, %v3803
          %v4108 = vmul.f32 %v3805, %v3805
          %v4109 = vmul.f32 %v3807, %v3807
          %v4110 = vmul.f32 %v3809, %v3809
          %v4111 = vmul.f32 %v3813, %v3813
          %v4112 = vmul.f32 %v3815, %v3815
          %v4113 = vmul.f32 %v3817, %v3817
          %v4114 = vmul.f32 %v3819, %v3819
          %v4115 = vmul.f32 %v3823, %v3823
          %v4116 = vmul.f32 %v3825, %v3825
          %v4117 = vmul.f32 %v3827, %v3827
          %v4118 = vmul.f32 %v3829, %v3829
          %v4119 = vmul.f32 %v3833, %v3833
          %v4120 = vmul.f32 %v3835, %v3835
          %v4121 = vmul.f32 %v3837, %v3837
          %v4122 = vmul.f32 %v3839, %v3839
          %v4123 = vmul.f32 %v3843, %v3843
          %v4124 = vmul.f32 %v3845, %v3845
          %v4125 = vmul.f32 %v3847, %v3847
          %v4126 = vmul.f32 %v3849, %v3849
          %v4127 = vmul.f32 %v3853, %v3853
          %v4128 = vmul.f32 %v3855, %v3855
          %v4129 = vmul.f32 %v3857, %v3857
          %v4130 = vmul.f32 %v3859, %v3859
          %v4131 = vmul.f32 %v3863, %v3863
          %v4132 = vmul.f32 %v3865, %v3865
          %v4133 = vmul.f32 %v3867, %v3867
          %v4134 = vmul.f32 %v3869, %v3869
          %v4135 = vmul.f32 %v3873, %v3873
          %v4136 = vmul.f32 %v3875, %v3875
          %v4137 = vmul.f32 %v3877, %v3877
          %v4138 = vmul.f32 %v3879, %v3879
          %v4139 = vmul.f32 %v3883, %v3883
          %v4140 = vmul.f32 %v3885, %v3885
          %v4141 = vmul.f32 %v3887, %v3887
          %v4142 = vmul.f32 %v3889, %v3889
          %v4143 = vmul.f32 %v3893, %v3893
          %v4144 = vmul.f32 %v3895, %v3895
          %v4145 = vmul.f32 %v3897, %v3897
          %v4146 = vmul.f32 %v3899, %v3899
          %v4147 = vmul.f32 %v3903, %v3903
          %v4148 = vmul.f32 %v3905, %v3905
          %v4149 = vmul.f32 %v3907, %v3907
          %v4150 = vmul.f32 %v3909, %v3909
          %v4151 = vmul.f32 %v3913, %v3913
          %v4152 = vmul.f32 %v3915, %v3915
          %v4153 = vmul.f32 %v3917, %v3917
          %v4154 = vmul.f32 %v3919, %v3919
          %v4155 = vmul.f32 %v3923, %v3923
          %v4156 = vmul.f32 %v3925, %v3925
          %v4157 = vmul.f32 %v3927, %v3927
          %v4158 = vmul.f32 %v3929, %v3929
          %v4159 = vadd.f32 %v4095, %v4097
          %v4160 = vadd.f32 %v4159, %v4099
          %v4161 = vadd.f32 %v4160, %v4101
          %v4162 = vadd.f32 %v4161, %v4103
          %v4163 = vadd.f32 %v4162, %v4105
          %v4164 = vadd.f32 %v4163, %v4107
          %v4165 = vadd.f32 %v4164, %v4109
          %v4166 = vadd.f32 %v4165, %v4111
          %v4167 = vadd.f32 %v4166, %v4113
          %v4168 = vadd.f32 %v4167, %v4115
          %v4169 = vadd.f32 %v4168, %v4117
          %v4170 = vadd.f32 %v4169, %v4119
          %v4171 = vadd.f32 %v4170, %v4121
          %v4172 = vadd.f32 %v4171, %v4123
          %v4173 = vadd.f32 %v4172, %v4125
          %v4174 = vadd.f32 %v4173, %v4127
          %v4175 = vadd.f32 %v4174, %v4129
          %v4176 = vadd.f32 %v4175, %v4131
          %v4177 = vadd.f32 %v4176, %v4133
          %v4178 = vadd.f32 %v4177, %v4135
          %v4179 = vadd.f32 %v4178, %v4137
          %v4180 = vadd.f32 %v4179, %v4139
          %v4181 = vadd.f32 %v4180, %v4141
          %v4182 = vadd.f32 %v4181, %v4143
          %v4183 = vadd.f32 %v4182, %v4145
          %v4184 = vadd.f32 %v4183, %v4147
          %v4185 = vadd.f32 %v4184, %v4149
          %v4186 = vadd.f32 %v4185, %v4151
          %v4187 = vadd.f32 %v4186, %v4153
          %v4188 = vadd.f32 %v4187, %v4155
          %v4189 = vadd.f32 %v4188, %v4157
          %v4190 = vrot.slane %v4189, 4
          %v4191 = vadd.f32 %v4189, %v4190
          %v4192 = vrot.slane %v4191, 2
          %v4193 = vadd.f32 %v4191, %v4192
          %v4194 = vrot.slane %v4193, 1
          %v4195 = vadd.f32 %v4193, %v4194
          %v4196 = vadd.f32 %v4096, %v4098
          %v4197 = vadd.f32 %v4196, %v4100
          %v4198 = vadd.f32 %v4197, %v4102
          %v4199 = vadd.f32 %v4198, %v4104
          %v4200 = vadd.f32 %v4199, %v4106
          %v4201 = vadd.f32 %v4200, %v4108
          %v4202 = vadd.f32 %v4201, %v4110
          %v4203 = vadd.f32 %v4202, %v4112
          %v4204 = vadd.f32 %v4203, %v4114
          %v4205 = vadd.f32 %v4204, %v4116
          %v4206 = vadd.f32 %v4205, %v4118
          %v4207 = vadd.f32 %v4206, %v4120
          %v4208 = vadd.f32 %v4207, %v4122
          %v4209 = vadd.f32 %v4208, %v4124
          %v4210 = vadd.f32 %v4209, %v4126
          %v4211 = vadd.f32 %v4210, %v4128
          %v4212 = vadd.f32 %v4211, %v4130
          %v4213 = vadd.f32 %v4212, %v4132
          %v4214 = vadd.f32 %v4213, %v4134
          %v4215 = vadd.f32 %v4214, %v4136
          %v4216 = vadd.f32 %v4215, %v4138
          %v4217 = vadd.f32 %v4216, %v4140
          %v4218 = vadd.f32 %v4217, %v4142
          %v4219 = vadd.f32 %v4218, %v4144
          %v4220 = vadd.f32 %v4219, %v4146
          %v4221 = vadd.f32 %v4220, %v4148
          %v4222 = vadd.f32 %v4221, %v4150
          %v4223 = vadd.f32 %v4222, %v4152
          %v4224 = vadd.f32 %v4223, %v4154
          %v4225 = vadd.f32 %v4224, %v4156
          %v4226 = vadd.f32 %v4225, %v4158
          %v4227 = vrot.slane %v4226, 4
          %v4228 = vadd.f32 %v4226, %v4227
          %v4229 = vrot.slane %v4228, 2
          %v4230 = vadd.f32 %v4228, %v4229
          %v4231 = vrot.slane %v4230, 1
          %v4232 = vadd.f32 %v4230, %v4231
          %v4235 = vcombine.low %v4195, %v4232
          %v4237 = vunpack.c.l.s4 1966171168
          %v4238 = vunpack.c.0.s8 %v4237
          %v4239 = vlaneseq
          %v4240 = vshrl.u32 %v4239, 7
          %v4241 = vsub.s32 %v4238, %v4240
          %v4242 = vrot.slane %v4235, %v4241
          %v4244 = vunpack.c.l.s4 1966171168
          %v4245 = vunpack.c.0.s8 %v4244
          %v4246 = vlaneseq
          %v4247 = vshrl.u32 %v4246, 7
          %v4248 = vsub.s32 %v4245, %v4247
          %v4249 = vrot.slane %v4242, %v4248
          %v4251 = vadd.f32 %v4094, %v4249
          %4252 = vst.msk [vmem:[#allocation6] sm:$0x3] %vm4092, %v4251
        $region126: #{decoder_forward.1} parent=105 // pred_fallthru
          _
        %p4253 = scmp.eq.s32.totalorder %s33, 1
        %p4254 = pnand %p4253, %p2379
        %p4255 = pneg %p4254
        // Predicated region
        $region127: #{decoder_forward.1} parent=105 // pred_check
          _
        $region128: #{decoder_forward.1} parent=105 // pred_check_branch
          %4257 = sbr.rel (%p4254) target = $region130
        $region129: #{decoder_forward.1} parent=105 // pred_region
          %v4258 = vld [vmem:[#allocation5] sm:$0x3]
          %v4259 = vmul.f32 %v4258, 0.001953125
          %v4260 = vld [vmem:[#allocation6] sm:$0x3]
          %v4261 = vmul.f32 %v4260, 0.001953125
          %v4262 = vmul.f32 %v4259, %v4259
          %v4263 = vsub.f32 %v4261, %v4262
          %v4264 = vadd.f32 %v4263, 1e-05
          %v4265 = vrsqrt.pop %v4264
          %s4266 = smul.u32 %s32, 2
          %s4267 = smul.addr %s4266, 2
          %s4268 = scalar_lea.vmem [#allocation3], %s4267
          %v4269 = vld [vmem:[%s4268] sm:$0xf]
          %s4270 = sadd.s32 %s32, 6
          %s4271 = smul.u32 %s4270, 2
          %s4272 = smul.addr %s4271, 2
          %s4273 = scalar_lea.vmem [#allocation3], %s4272
          %v4274 = vld [vmem:[%s4273] sm:$0xf]
          %v4276 = vlaneseq
          %v4277 = vshrl.u32 %v4276, 7
          %v4278 = vsub.s32 0, %v4277
          %v4279 = vrot.slane %v4265, %v4278
          %v4280 = vlaneseq
          %v4281 = vshrl.u32 %v4280, 7
          %v4282 = vsub.s32 1, %v4281
          %v4283 = vrot.slane %v4265, %v4282
          %v4284 = vcombine.low %v4279, %v4283
          %v4286 = vunpack.c.l.s4 1983009808
          %v4287 = vunpack.c.0.s8 %v4286
          %v4288 = vlaneseq
          %v4289 = vshrl.u32 %v4288, 7
          %v4290 = vsub.s32 %v4287, %v4289
          %v4291 = vrot.slane %v4284, %v4290
          %v4293 = vmul.f32 %v4269, %v4291
          %4294 = vst [vmem:[#allocation7] sm:$0xf] %v4293
          %v4296 = vlaneseq
          %v4297 = vshrl.u32 %v4296, 7
          %v4298 = vsub.s32 0, %v4297
          %v4299 = vrot.slane %v4259, %v4298
          %v4300 = vlaneseq
          %v4301 = vshrl.u32 %v4300, 7
          %v4302 = vsub.s32 1, %v4301
          %v4303 = vrot.slane %v4259, %v4302
          %v4304 = vcombine.low %v4299, %v4303
          %v4306 = vunpack.c.l.s4 1983009808
          %v4307 = vunpack.c.0.s8 %v4306
          %v4308 = vlaneseq
          %v4309 = vshrl.u32 %v4308, 7
          %v4310 = vsub.s32 %v4307, %v4309
          %v4311 = vrot.slane %v4304, %v4310
          %v4313 = vmul.f32 %v4293, %v4311
          %v4314 = vsub.f32 %v4274, %v4313
          %4315 = vst [vmem:[#allocation8] sm:$0xf] %v4314
        $region130: #{decoder_forward.1} parent=105 // pred_fallthru
          _
        %p4316 = scmp.eq.s32.totalorder %s32, 6
        // Predicated region
        $region131: #{decoder_forward.1} parent=105 // pred_check
          %p4317 = pneg %p4316
        $region132: #{decoder_forward.1} parent=105 // pred_check_branch
          %4319 = sbr.rel (%p4317) target = $region134
        $region133: #{decoder_forward.1} parent=105 // pred_region
          %s4320 = smul.u32 %s33, 32
          %s4321 = smul.addr %s4320, 8
          %s4322 = scalar_lea.vmem [#allocation2], %s4321
          %v4323 = vld [vmem:[%s4322] sm:$0xff]
          %v4324 = vld [vmem:[%s4322 + $0x8] sm:$0xff]
          %v4325 = vld [vmem:[%s4322 + $0x10] sm:$0xff]
          %v4326 = vld [vmem:[%s4322 + $0x18] sm:$0xff]
          %v4327 = vld [vmem:[%s4322 + $0x20] sm:$0xff]
          %v4328 = vld [vmem:[%s4322 + $0x28] sm:$0xff]
          %v4329 = vld [vmem:[%s4322 + $0x30] sm:$0xff]
          %v4330 = vld [vmem:[%s4322 + $0x38] sm:$0xff]
          %v4331 = vld [vmem:[%s4322 + $0x40] sm:$0xff]
          %v4332 = vld [vmem:[%s4322 + $0x48] sm:$0xff]
          %v4333 = vld [vmem:[%s4322 + $0x50] sm:$0xff]
          %v4334 = vld [vmem:[%s4322 + $0x58] sm:$0xff]
          %v4335 = vld [vmem:[%s4322 + $0x60] sm:$0xff]
          %v4336 = vld [vmem:[%s4322 + $0x68] sm:$0xff]
          %v4337 = vld [vmem:[%s4322 + $0x70] sm:$0xff]
          %v4338 = vld [vmem:[%s4322 + $0x78] sm:$0xff]
          %v4339 = vld [vmem:[%s4322 + $0x80] sm:$0xff]
          %v4340 = vld [vmem:[%s4322 + $0x88] sm:$0xff]
          %v4341 = vld [vmem:[%s4322 + $0x90] sm:$0xff]
          %v4342 = vld [vmem:[%s4322 + $0x98] sm:$0xff]
          %v4343 = vld [vmem:[%s4322 + $0xa0] sm:$0xff]
          %v4344 = vld [vmem:[%s4322 + $0xa8] sm:$0xff]
          %v4345 = vld [vmem:[%s4322 + $0xb0] sm:$0xff]
          %v4346 = vld [vmem:[%s4322 + $0xb8] sm:$0xff]
          %v4347 = vld [vmem:[%s4322 + $0xc0] sm:$0xff]
          %v4348 = vld [vmem:[%s4322 + $0xc8] sm:$0xff]
          %v4349 = vld [vmem:[%s4322 + $0xd0] sm:$0xff]
          %v4350 = vld [vmem:[%s4322 + $0xd8] sm:$0xff]
          %v4351 = vld [vmem:[%s4322 + $0xe0] sm:$0xff]
          %v4352 = vld [vmem:[%s4322 + $0xe8] sm:$0xff]
          %v4353 = vld [vmem:[%s4322 + $0xf0] sm:$0xff]
          %v4354 = vld [vmem:[%s4322 + $0xf8] sm:$0xff]
          %v4355 = vunpack.c.l.bf16 %v4323
          %v4356 = vunpack.c.l.bf16 %v4324
          %v4357 = vunpack.c.h.bf16 %v4323
          %v4358 = vunpack.c.h.bf16 %v4324
          %v4359 = vunpack.c.l.bf16 %v4325
          %v4360 = vunpack.c.l.bf16 %v4326
          %v4361 = vunpack.c.h.bf16 %v4325
          %v4362 = vunpack.c.h.bf16 %v4326
          %v4363 = vunpack.c.l.bf16 %v4327
          %v4364 = vunpack.c.l.bf16 %v4328
          %v4365 = vunpack.c.h.bf16 %v4327
          %v4366 = vunpack.c.h.bf16 %v4328
          %v4367 = vunpack.c.l.bf16 %v4329
          %v4368 = vunpack.c.l.bf16 %v4330
          %v4369 = vunpack.c.h.bf16 %v4329
          %v4370 = vunpack.c.h.bf16 %v4330
          %v4371 = vunpack.c.l.bf16 %v4331
          %v4372 = vunpack.c.l.bf16 %v4332
          %v4373 = vunpack.c.h.bf16 %v4331
          %v4374 = vunpack.c.h.bf16 %v4332
          %v4375 = vunpack.c.l.bf16 %v4333
          %v4376 = vunpack.c.l.bf16 %v4334
          %v4377 = vunpack.c.h.bf16 %v4333
          %v4378 = vunpack.c.h.bf16 %v4334
          %v4379 = vunpack.c.l.bf16 %v4335
          %v4380 = vunpack.c.l.bf16 %v4336
          %v4381 = vunpack.c.h.bf16 %v4335
          %v4382 = vunpack.c.h.bf16 %v4336
          %v4383 = vunpack.c.l.bf16 %v4337
          %v4384 = vunpack.c.l.bf16 %v4338
          %v4385 = vunpack.c.h.bf16 %v4337
          %v4386 = vunpack.c.h.bf16 %v4338
          %v4387 = vunpack.c.l.bf16 %v4339
          %v4388 = vunpack.c.l.bf16 %v4340
          %v4389 = vunpack.c.h.bf16 %v4339
          %v4390 = vunpack.c.h.bf16 %v4340
          %v4391 = vunpack.c.l.bf16 %v4341
          %v4392 = vunpack.c.l.bf16 %v4342
          %v4393 = vunpack.c.h.bf16 %v4341
          %v4394 = vunpack.c.h.bf16 %v4342
          %v4395 = vunpack.c.l.bf16 %v4343
          %v4396 = vunpack.c.l.bf16 %v4344
          %v4397 = vunpack.c.h.bf16 %v4343
          %v4398 = vunpack.c.h.bf16 %v4344
          %v4399 = vunpack.c.l.bf16 %v4345
          %v4400 = vunpack.c.l.bf16 %v4346
          %v4401 = vunpack.c.h.bf16 %v4345
          %v4402 = vunpack.c.h.bf16 %v4346
          %v4403 = vunpack.c.l.bf16 %v4347
          %v4404 = vunpack.c.l.bf16 %v4348
          %v4405 = vunpack.c.h.bf16 %v4347
          %v4406 = vunpack.c.h.bf16 %v4348
          %v4407 = vunpack.c.l.bf16 %v4349
          %v4408 = vunpack.c.l.bf16 %v4350
          %v4409 = vunpack.c.h.bf16 %v4349
          %v4410 = vunpack.c.h.bf16 %v4350
          %v4411 = vunpack.c.l.bf16 %v4351
          %v4412 = vunpack.c.l.bf16 %v4352
          %v4413 = vunpack.c.h.bf16 %v4351
          %v4414 = vunpack.c.h.bf16 %v4352
          %v4415 = vunpack.c.l.bf16 %v4353
          %v4416 = vunpack.c.l.bf16 %v4354
          %v4417 = vunpack.c.h.bf16 %v4353
          %v4418 = vunpack.c.h.bf16 %v4354
          %v4419 = vld [vmem:[#allocation7] sm:$0xf]
          %v4422 = vunpack.c.l.s4 1966171168
          %v4423 = vunpack.c.0.s8 %v4422
          %v4424 = vlaneseq
          %v4425 = vshrl.u32 %v4424, 7
          %v4426 = vsub.s32 %v4423, %v4425
          %v4427 = vrot.slane %v4419, %v4426
          %v4428 = vcombine.high %v4427, %v4427
          %v4429 = vlaneseq
          %v4430 = vshrl.u32 %v4429, 7
          %v4431 = vsub.s32 0, %v4430
          %v4432 = vrot.slane %v4427, %v4431
          %v4433 = vlaneseq
          %v4434 = vshrl.u32 %v4433, 7
          %v4435 = vsub.s32 1, %v4434
          %v4436 = vrot.slane %v4427, %v4435
          %v4437 = vlaneseq
          %v4438 = vshrl.u32 %v4437, 7
          %v4439 = vsub.s32 0, %v4438
          %v4440 = vrot.slane %v4428, %v4439
          %v4441 = vlaneseq
          %v4442 = vshrl.u32 %v4441, 7
          %v4443 = vsub.s32 1, %v4442
          %v4444 = vrot.slane %v4428, %v4443
          %v4449 = vmul.f32 %v4432, %v4355
          %v4450 = vmul.f32 %v4436, %v4356
          %v4451 = vmul.f32 %v4432, %v4357
          %v4452 = vmul.f32 %v4436, %v4358
          %v4453 = vmul.f32 %v4432, %v4359
          %v4454 = vmul.f32 %v4436, %v4360
          %v4455 = vmul.f32 %v4432, %v4361
          %v4456 = vmul.f32 %v4436, %v4362
          %v4457 = vmul.f32 %v4432, %v4363
          %v4458 = vmul.f32 %v4436, %v4364
          %v4459 = vmul.f32 %v4432, %v4365
          %v4460 = vmul.f32 %v4436, %v4366
          %v4461 = vmul.f32 %v4432, %v4367
          %v4462 = vmul.f32 %v4436, %v4368
          %v4463 = vmul.f32 %v4432, %v4369
          %v4464 = vmul.f32 %v4436, %v4370
          %v4465 = vmul.f32 %v4432, %v4371
          %v4466 = vmul.f32 %v4436, %v4372
          %v4467 = vmul.f32 %v4432, %v4373
          %v4468 = vmul.f32 %v4436, %v4374
          %v4469 = vmul.f32 %v4432, %v4375
          %v4470 = vmul.f32 %v4436, %v4376
          %v4471 = vmul.f32 %v4432, %v4377
          %v4472 = vmul.f32 %v4436, %v4378
          %v4473 = vmul.f32 %v4432, %v4379
          %v4474 = vmul.f32 %v4436, %v4380
          %v4475 = vmul.f32 %v4432, %v4381
          %v4476 = vmul.f32 %v4436, %v4382
          %v4477 = vmul.f32 %v4432, %v4383
          %v4478 = vmul.f32 %v4436, %v4384
          %v4479 = vmul.f32 %v4432, %v4385
          %v4480 = vmul.f32 %v4436, %v4386
          %v4481 = vmul.f32 %v4440, %v4387
          %v4482 = vmul.f32 %v4444, %v4388
          %v4483 = vmul.f32 %v4440, %v4389
          %v4484 = vmul.f32 %v4444, %v4390
          %v4485 = vmul.f32 %v4440, %v4391
          %v4486 = vmul.f32 %v4444, %v4392
          %v4487 = vmul.f32 %v4440, %v4393
          %v4488 = vmul.f32 %v4444, %v4394
          %v4489 = vmul.f32 %v4440, %v4395
          %v4490 = vmul.f32 %v4444, %v4396
          %v4491 = vmul.f32 %v4440, %v4397
          %v4492 = vmul.f32 %v4444, %v4398
          %v4493 = vmul.f32 %v4440, %v4399
          %v4494 = vmul.f32 %v4444, %v4400
          %v4495 = vmul.f32 %v4440, %v4401
          %v4496 = vmul.f32 %v4444, %v4402
          %v4497 = vmul.f32 %v4440, %v4403
          %v4498 = vmul.f32 %v4444, %v4404
          %v4499 = vmul.f32 %v4440, %v4405
          %v4500 = vmul.f32 %v4444, %v4406
          %v4501 = vmul.f32 %v4440, %v4407
          %v4502 = vmul.f32 %v4444, %v4408
          %v4503 = vmul.f32 %v4440, %v4409
          %v4504 = vmul.f32 %v4444, %v4410
          %v4505 = vmul.f32 %v4440, %v4411
          %v4506 = vmul.f32 %v4444, %v4412
          %v4507 = vmul.f32 %v4440, %v4413
          %v4508 = vmul.f32 %v4444, %v4414
          %v4509 = vmul.f32 %v4440, %v4415
          %v4510 = vmul.f32 %v4444, %v4416
          %v4511 = vmul.f32 %v4440, %v4417
          %v4512 = vmul.f32 %v4444, %v4418
          %v4513 = vld [vmem:[#allocation8] sm:$0xf]
          %v4516 = vunpack.c.l.s4 1966171168
          %v4517 = vunpack.c.0.s8 %v4516
          %v4518 = vlaneseq
          %v4519 = vshrl.u32 %v4518, 7
          %v4520 = vsub.s32 %v4517, %v4519
          %v4521 = vrot.slane %v4513, %v4520
          %v4522 = vcombine.high %v4521, %v4521
          %v4523 = vlaneseq
          %v4524 = vshrl.u32 %v4523, 7
          %v4525 = vsub.s32 0, %v4524
          %v4526 = vrot.slane %v4521, %v4525
          %v4527 = vlaneseq
          %v4528 = vshrl.u32 %v4527, 7
          %v4529 = vsub.s32 1, %v4528
          %v4530 = vrot.slane %v4521, %v4529
          %v4531 = vlaneseq
          %v4532 = vshrl.u32 %v4531, 7
          %v4533 = vsub.s32 0, %v4532
          %v4534 = vrot.slane %v4522, %v4533
          %v4535 = vlaneseq
          %v4536 = vshrl.u32 %v4535, 7
          %v4537 = vsub.s32 1, %v4536
          %v4538 = vrot.slane %v4522, %v4537
          %v4543 = vadd.f32 %v4449, %v4526
          %v4544 = vadd.f32 %v4450, %v4530
          %v4545 = vadd.f32 %v4451, %v4526
          %v4546 = vadd.f32 %v4452, %v4530
          %v4547 = vadd.f32 %v4453, %v4526
          %v4548 = vadd.f32 %v4454, %v4530
          %v4549 = vadd.f32 %v4455, %v4526
          %v4550 = vadd.f32 %v4456, %v4530
          %v4551 = vadd.f32 %v4457, %v4526
          %v4552 = vadd.f32 %v4458, %v4530
          %v4553 = vadd.f32 %v4459, %v4526
          %v4554 = vadd.f32 %v4460, %v4530
          %v4555 = vadd.f32 %v4461, %v4526
          %v4556 = vadd.f32 %v4462, %v4530
          %v4557 = vadd.f32 %v4463, %v4526
          %v4558 = vadd.f32 %v4464, %v4530
          %v4559 = vadd.f32 %v4465, %v4526
          %v4560 = vadd.f32 %v4466, %v4530
          %v4561 = vadd.f32 %v4467, %v4526
          %v4562 = vadd.f32 %v4468, %v4530
          %v4563 = vadd.f32 %v4469, %v4526
          %v4564 = vadd.f32 %v4470, %v4530
          %v4565 = vadd.f32 %v4471, %v4526
          %v4566 = vadd.f32 %v4472, %v4530
          %v4567 = vadd.f32 %v4473, %v4526
          %v4568 = vadd.f32 %v4474, %v4530
          %v4569 = vadd.f32 %v4475, %v4526
          %v4570 = vadd.f32 %v4476, %v4530
          %v4571 = vadd.f32 %v4477, %v4526
          %v4572 = vadd.f32 %v4478, %v4530
          %v4573 = vadd.f32 %v4479, %v4526
          %v4574 = vadd.f32 %v4480, %v4530
          %v4575 = vadd.f32 %v4481, %v4534
          %v4576 = vadd.f32 %v4482, %v4538
          %v4577 = vadd.f32 %v4483, %v4534
          %v4578 = vadd.f32 %v4484, %v4538
          %v4579 = vadd.f32 %v4485, %v4534
          %v4580 = vadd.f32 %v4486, %v4538
          %v4581 = vadd.f32 %v4487, %v4534
          %v4582 = vadd.f32 %v4488, %v4538
          %v4583 = vadd.f32 %v4489, %v4534
          %v4584 = vadd.f32 %v4490, %v4538
          %v4585 = vadd.f32 %v4491, %v4534
          %v4586 = vadd.f32 %v4492, %v4538
          %v4587 = vadd.f32 %v4493, %v4534
          %v4588 = vadd.f32 %v4494, %v4538
          %v4589 = vadd.f32 %v4495, %v4534
          %v4590 = vadd.f32 %v4496, %v4538
          %v4591 = vadd.f32 %v4497, %v4534
          %v4592 = vadd.f32 %v4498, %v4538
          %v4593 = vadd.f32 %v4499, %v4534
          %v4594 = vadd.f32 %v4500, %v4538
          %v4595 = vadd.f32 %v4501, %v4534
          %v4596 = vadd.f32 %v4502, %v4538
          %v4597 = vadd.f32 %v4503, %v4534
          %v4598 = vadd.f32 %v4504, %v4538
          %v4599 = vadd.f32 %v4505, %v4534
          %v4600 = vadd.f32 %v4506, %v4538
          %v4601 = vadd.f32 %v4507, %v4534
          %v4602 = vadd.f32 %v4508, %v4538
          %v4603 = vadd.f32 %v4509, %v4534
          %v4604 = vadd.f32 %v4510, %v4538
          %v4605 = vadd.f32 %v4511, %v4534
          %v4606 = vadd.f32 %v4512, %v4538
          %v4607 = vmax.f32 %v4543, 0.0
          %v4608 = vmax.f32 %v4544, 0.0
          %v4609 = vmax.f32 %v4545, 0.0
          %v4610 = vmax.f32 %v4546, 0.0
          %v4611 = vmax.f32 %v4547, 0.0
          %v4612 = vmax.f32 %v4548, 0.0
          %v4613 = vmax.f32 %v4549, 0.0
          %v4614 = vmax.f32 %v4550, 0.0
          %v4615 = vmax.f32 %v4551, 0.0
          %v4616 = vmax.f32 %v4552, 0.0
          %v4617 = vmax.f32 %v4553, 0.0
          %v4618 = vmax.f32 %v4554, 0.0
          %v4619 = vmax.f32 %v4555, 0.0
          %v4620 = vmax.f32 %v4556, 0.0
          %v4621 = vmax.f32 %v4557, 0.0
          %v4622 = vmax.f32 %v4558, 0.0
          %v4623 = vmax.f32 %v4559, 0.0
          %v4624 = vmax.f32 %v4560, 0.0
          %v4625 = vmax.f32 %v4561, 0.0
          %v4626 = vmax.f32 %v4562, 0.0
          %v4627 = vmax.f32 %v4563, 0.0
          %v4628 = vmax.f32 %v4564, 0.0
          %v4629 = vmax.f32 %v4565, 0.0
          %v4630 = vmax.f32 %v4566, 0.0
          %v4631 = vmax.f32 %v4567, 0.0
          %v4632 = vmax.f32 %v4568, 0.0
          %v4633 = vmax.f32 %v4569, 0.0
          %v4634 = vmax.f32 %v4570, 0.0
          %v4635 = vmax.f32 %v4571, 0.0
          %v4636 = vmax.f32 %v4572, 0.0
          %v4637 = vmax.f32 %v4573, 0.0
          %v4638 = vmax.f32 %v4574, 0.0
          %v4639 = vmax.f32 %v4575, 0.0
          %v4640 = vmax.f32 %v4576, 0.0
          %v4641 = vmax.f32 %v4577, 0.0
          %v4642 = vmax.f32 %v4578, 0.0
          %v4643 = vmax.f32 %v4579, 0.0
          %v4644 = vmax.f32 %v4580, 0.0
          %v4645 = vmax.f32 %v4581, 0.0
          %v4646 = vmax.f32 %v4582, 0.0
          %v4647 = vmax.f32 %v4583, 0.0
          %v4648 = vmax.f32 %v4584, 0.0
          %v4649 = vmax.f32 %v4585, 0.0
          %v4650 = vmax.f32 %v4586, 0.0
          %v4651 = vmax.f32 %v4587, 0.0
          %v4652 = vmax.f32 %v4588, 0.0
          %v4653 = vmax.f32 %v4589, 0.0
          %v4654 = vmax.f32 %v4590, 0.0
          %v4655 = vmax.f32 %v4591, 0.0
          %v4656 = vmax.f32 %v4592, 0.0
          %v4657 = vmax.f32 %v4593, 0.0
          %v4658 = vmax.f32 %v4594, 0.0
          %v4659 = vmax.f32 %v4595, 0.0
          %v4660 = vmax.f32 %v4596, 0.0
          %v4661 = vmax.f32 %v4597, 0.0
          %v4662 = vmax.f32 %v4598, 0.0
          %v4663 = vmax.f32 %v4599, 0.0
          %v4664 = vmax.f32 %v4600, 0.0
          %v4665 = vmax.f32 %v4601, 0.0
          %v4666 = vmax.f32 %v4602, 0.0
          %v4667 = vmax.f32 %v4603, 0.0
          %v4668 = vmax.f32 %v4604, 0.0
          %v4669 = vmax.f32 %v4605, 0.0
          %v4670 = vmax.f32 %v4606, 0.0
          %v4671 = vld [vmem:[%s11] sm:$0x3]
          %v4673 = vlaneseq
          %v4674 = vshrl.u32 %v4673, 7
          %v4675 = vsub.s32 0, %v4674
          %v4676 = vrot.slane %v4671, %v4675
          %v4677 = vlaneseq
          %v4678 = vshrl.u32 %v4677, 7
          %v4679 = vsub.s32 1, %v4678
          %v4680 = vrot.slane %v4671, %v4679
          %v4683 = vmul.f32 %v4607, %v4676
          %v4684 = vmul.f32 %v4608, %v4680
          %v4685 = vmul.f32 %v4609, %v4676
          %v4686 = vmul.f32 %v4610, %v4680
          %v4687 = vmul.f32 %v4611, %v4676
          %v4688 = vmul.f32 %v4612, %v4680
          %v4689 = vmul.f32 %v4613, %v4676
          %v4690 = vmul.f32 %v4614, %v4680
          %v4691 = vmul.f32 %v4615, %v4676
          %v4692 = vmul.f32 %v4616, %v4680
          %v4693 = vmul.f32 %v4617, %v4676
          %v4694 = vmul.f32 %v4618, %v4680
          %v4695 = vmul.f32 %v4619, %v4676
          %v4696 = vmul.f32 %v4620, %v4680
          %v4697 = vmul.f32 %v4621, %v4676
          %v4698 = vmul.f32 %v4622, %v4680
          %v4699 = vmul.f32 %v4623, %v4676
          %v4700 = vmul.f32 %v4624, %v4680
          %v4701 = vmul.f32 %v4625, %v4676
          %v4702 = vmul.f32 %v4626, %v4680
          %v4703 = vmul.f32 %v4627, %v4676
          %v4704 = vmul.f32 %v4628, %v4680
          %v4705 = vmul.f32 %v4629, %v4676
          %v4706 = vmul.f32 %v4630, %v4680
          %v4707 = vmul.f32 %v4631, %v4676
          %v4708 = vmul.f32 %v4632, %v4680
          %v4709 = vmul.f32 %v4633, %v4676
          %v4710 = vmul.f32 %v4634, %v4680
          %v4711 = vmul.f32 %v4635, %v4676
          %v4712 = vmul.f32 %v4636, %v4680
          %v4713 = vmul.f32 %v4637, %v4676
          %v4714 = vmul.f32 %v4638, %v4680
          %v4715 = vmul.f32 %v4639, %v4676
          %v4716 = vmul.f32 %v4640, %v4680
          %v4717 = vmul.f32 %v4641, %v4676
          %v4718 = vmul.f32 %v4642, %v4680
          %v4719 = vmul.f32 %v4643, %v4676
          %v4720 = vmul.f32 %v4644, %v4680
          %v4721 = vmul.f32 %v4645, %v4676
          %v4722 = vmul.f32 %v4646, %v4680
          %v4723 = vmul.f32 %v4647, %v4676
          %v4724 = vmul.f32 %v4648, %v4680
          %v4725 = vmul.f32 %v4649, %v4676
          %v4726 = vmul.f32 %v4650, %v4680
          %v4727 = vmul.f32 %v4651, %v4676
          %v4728 = vmul.f32 %v4652, %v4680
          %v4729 = vmul.f32 %v4653, %v4676
          %v4730 = vmul.f32 %v4654, %v4680
          %v4731 = vmul.f32 %v4655, %v4676
          %v4732 = vmul.f32 %v4656, %v4680
          %v4733 = vmul.f32 %v4657, %v4676
          %v4734 = vmul.f32 %v4658, %v4680
          %v4735 = vmul.f32 %v4659, %v4676
          %v4736 = vmul.f32 %v4660, %v4680
          %v4737 = vmul.f32 %v4661, %v4676
          %v4738 = vmul.f32 %v4662, %v4680
          %v4739 = vmul.f32 %v4663, %v4676
          %v4740 = vmul.f32 %v4664, %v4680
          %v4741 = vmul.f32 %v4665, %v4676
          %v4742 = vmul.f32 %v4666, %v4680
          %v4743 = vmul.f32 %v4667, %v4676
          %v4744 = vmul.f32 %v4668, %v4680
          %v4745 = vmul.f32 %v4669, %v4676
          %v4746 = vmul.f32 %v4670, %v4680
          %v4747 = vadd.f32 %v4683, %v4684
          %4748 = vadd.xlane.f32.xlu0 %v4747
          %v4749 = vpop.xlane.xlu0 %4748
          %v4750 = vadd.f32 %v4685, %v4686
          %4751 = vadd.xlane.f32.xlu0 %v4750
          %v4752 = vpop.xlane.xlu0 %4751
          %v4753 = vadd.f32 %v4687, %v4688
          %4754 = vadd.xlane.f32.xlu0 %v4753
          %v4755 = vpop.xlane.xlu0 %4754
          %v4756 = vadd.f32 %v4689, %v4690
          %4757 = vadd.xlane.f32.xlu0 %v4756
          %v4758 = vpop.xlane.xlu0 %4757
          %v4759 = vadd.f32 %v4691, %v4692
          %4760 = vadd.xlane.f32.xlu0 %v4759
          %v4761 = vpop.xlane.xlu0 %4760
          %v4762 = vadd.f32 %v4693, %v4694
          %4763 = vadd.xlane.f32.xlu0 %v4762
          %v4764 = vpop.xlane.xlu0 %4763
          %v4765 = vadd.f32 %v4695, %v4696
          %4766 = vadd.xlane.f32.xlu0 %v4765
          %v4767 = vpop.xlane.xlu0 %4766
          %v4768 = vadd.f32 %v4697, %v4698
          %4769 = vadd.xlane.f32.xlu0 %v4768
          %v4770 = vpop.xlane.xlu0 %4769
          %v4771 = vadd.f32 %v4699, %v4700
          %4772 = vadd.xlane.f32.xlu0 %v4771
          %v4773 = vpop.xlane.xlu0 %4772
          %v4774 = vadd.f32 %v4701, %v4702
          %4775 = vadd.xlane.f32.xlu0 %v4774
          %v4776 = vpop.xlane.xlu0 %4775
          %v4777 = vadd.f32 %v4703, %v4704
          %4778 = vadd.xlane.f32.xlu0 %v4777
          %v4779 = vpop.xlane.xlu0 %4778
          %v4780 = vadd.f32 %v4705, %v4706
          %4781 = vadd.xlane.f32.xlu0 %v4780
          %v4782 = vpop.xlane.xlu0 %4781
          %v4783 = vadd.f32 %v4707, %v4708
          %4784 = vadd.xlane.f32.xlu0 %v4783
          %v4785 = vpop.xlane.xlu0 %4784
          %v4786 = vadd.f32 %v4709, %v4710
          %4787 = vadd.xlane.f32.xlu0 %v4786
          %v4788 = vpop.xlane.xlu0 %4787
          %v4789 = vadd.f32 %v4711, %v4712
          %4790 = vadd.xlane.f32.xlu0 %v4789
          %v4791 = vpop.xlane.xlu0 %4790
          %v4792 = vadd.f32 %v4713, %v4714
          %4793 = vadd.xlane.f32.xlu0 %v4792
          %v4794 = vpop.xlane.xlu0 %4793
          %v4795 = vadd.f32 %v4715, %v4716
          %4796 = vadd.xlane.f32.xlu0 %v4795
          %v4797 = vpop.xlane.xlu0 %4796
          %v4798 = vadd.f32 %v4717, %v4718
          %4799 = vadd.xlane.f32.xlu0 %v4798
          %v4800 = vpop.xlane.xlu0 %4799
          %v4801 = vadd.f32 %v4719, %v4720
          %4802 = vadd.xlane.f32.xlu0 %v4801
          %v4803 = vpop.xlane.xlu0 %4802
          %v4804 = vadd.f32 %v4721, %v4722
          %4805 = vadd.xlane.f32.xlu0 %v4804
          %v4806 = vpop.xlane.xlu0 %4805
          %v4807 = vadd.f32 %v4723, %v4724
          %4808 = vadd.xlane.f32.xlu0 %v4807
          %v4809 = vpop.xlane.xlu0 %4808
          %v4810 = vadd.f32 %v4725, %v4726
          %4811 = vadd.xlane.f32.xlu0 %v4810
          %v4812 = vpop.xlane.xlu0 %4811
          %v4813 = vadd.f32 %v4727, %v4728
          %4814 = vadd.xlane.f32.xlu0 %v4813
          %v4815 = vpop.xlane.xlu0 %4814
          %v4816 = vadd.f32 %v4729, %v4730
          %4817 = vadd.xlane.f32.xlu0 %v4816
          %v4818 = vpop.xlane.xlu0 %4817
          %v4819 = vadd.f32 %v4731, %v4732
          %4820 = vadd.xlane.f32.xlu0 %v4819
          %v4821 = vpop.xlane.xlu0 %4820
          %v4822 = vadd.f32 %v4733, %v4734
          %4823 = vadd.xlane.f32.xlu0 %v4822
          %v4824 = vpop.xlane.xlu0 %4823
          %v4825 = vadd.f32 %v4735, %v4736
          %4826 = vadd.xlane.f32.xlu0 %v4825
          %v4827 = vpop.xlane.xlu0 %4826
          %v4828 = vadd.f32 %v4737, %v4738
          %4829 = vadd.xlane.f32.xlu0 %v4828
          %v4830 = vpop.xlane.xlu0 %4829
          %v4831 = vadd.f32 %v4739, %v4740
          %4832 = vadd.xlane.f32.xlu0 %v4831
          %v4833 = vpop.xlane.xlu0 %4832
          %v4834 = vadd.f32 %v4741, %v4742
          %4835 = vadd.xlane.f32.xlu0 %v4834
          %v4836 = vpop.xlane.xlu0 %4835
          %v4837 = vadd.f32 %v4743, %v4744
          %4838 = vadd.xlane.f32.xlu0 %v4837
          %v4839 = vpop.xlane.xlu0 %4838
          %v4840 = vadd.f32 %v4745, %v4746
          %4841 = vadd.xlane.f32.xlu0 %v4840
          %v4842 = vpop.xlane.xlu0 %4841
          %s4843 = sld [smem:[#allocation9]]
          %v4844 = vstv %s4843
          %v4845 = vadd.f32 %v4749, %v4844
          %v4846 = vadd.f32 %v4752, %v4844
          %v4847 = vadd.f32 %v4755, %v4844
          %v4848 = vadd.f32 %v4758, %v4844
          %v4849 = vadd.f32 %v4761, %v4844
          %v4850 = vadd.f32 %v4764, %v4844
          %v4851 = vadd.f32 %v4767, %v4844
          %v4852 = vadd.f32 %v4770, %v4844
          %v4853 = vadd.f32 %v4773, %v4844
          %v4854 = vadd.f32 %v4776, %v4844
          %v4855 = vadd.f32 %v4779, %v4844
          %v4856 = vadd.f32 %v4782, %v4844
          %v4857 = vadd.f32 %v4785, %v4844
          %v4858 = vadd.f32 %v4788, %v4844
          %v4859 = vadd.f32 %v4791, %v4844
          %v4860 = vadd.f32 %v4794, %v4844
          %v4861 = vadd.f32 %v4797, %v4844
          %v4862 = vadd.f32 %v4800, %v4844
          %v4863 = vadd.f32 %v4803, %v4844
          %v4864 = vadd.f32 %v4806, %v4844
          %v4865 = vadd.f32 %v4809, %v4844
          %v4866 = vadd.f32 %v4812, %v4844
          %v4867 = vadd.f32 %v4815, %v4844
          %v4868 = vadd.f32 %v4818, %v4844
          %v4869 = vadd.f32 %v4821, %v4844
          %v4870 = vadd.f32 %v4824, %v4844
          %v4871 = vadd.f32 %v4827, %v4844
          %v4872 = vadd.f32 %v4830, %v4844
          %v4873 = vadd.f32 %v4833, %v4844
          %v4874 = vadd.f32 %v4836, %v4844
          %v4875 = vadd.f32 %v4839, %v4844
          %v4876 = vadd.f32 %v4842, %v4844
          %v4909 = vlaneseq
          %v4910 = vand.u32 %v4909, 127
          %v4911 = vlaneseq
          %v4912 = vshrl.u32 %v4911, 7
          %v4913 = vsub.s32 %v4910, %v4912
          %v4914 = vrot.slane %v4845, %v4913
          %v4915 = vadd.s32 %v4910, 4294967288
          %v4916 = vlaneseq
          %v4917 = vshrl.u32 %v4916, 7
          %v4918 = vsub.s32 %v4915, %v4917
          %v4919 = vrot.slane %v4846, %v4918
          %vm4920 = vcmask 130112
          %v4921 = vsel %vm4920, %v4919, %v4914
          %v4922 = vadd.s32 %v4910, 4294967280
          %v4923 = vlaneseq
          %v4924 = vshrl.u32 %v4923, 7
          %v4925 = vsub.s32 %v4922, %v4924
          %v4926 = vrot.slane %v4847, %v4925
          %vm4927 = vcmask 195712
          %v4928 = vsel %vm4927, %v4926, %v4921
          %v4929 = vadd.s32 %v4910, 4294967272
          %v4930 = vlaneseq
          %v4931 = vshrl.u32 %v4930, 7
          %v4932 = vsub.s32 %v4929, %v4931
          %v4933 = vrot.slane %v4848, %v4932
          %vm4934 = vcmask 261312
          %v4935 = vsel %vm4934, %v4933, %v4928
          %v4936 = vadd.s32 %v4910, 4294967264
          %v4937 = vlaneseq
          %v4938 = vshrl.u32 %v4937, 7
          %v4939 = vsub.s32 %v4936, %v4938
          %v4940 = vrot.slane %v4849, %v4939
          %vm4941 = vcmask 326912
          %v4942 = vsel %vm4941, %v4940, %v4935
          %v4943 = vadd.s32 %v4910, 4294967256
          %v4944 = vlaneseq
          %v4945 = vshrl.u32 %v4944, 7
          %v4946 = vsub.s32 %v4943, %v4945
          %v4947 = vrot.slane %v4850, %v4946
          %vm4948 = vcmask 392512
          %v4949 = vsel %vm4948, %v4947, %v4942
          %v4950 = vadd.s32 %v4910, 4294967248
          %v4951 = vlaneseq
          %v4952 = vshrl.u32 %v4951, 7
          %v4953 = vsub.s32 %v4950, %v4952
          %v4954 = vrot.slane %v4851, %v4953
          %vm4955 = vcmask 458112
          %v4956 = vsel %vm4955, %v4954, %v4949
          %v4957 = vadd.s32 %v4910, 4294967240
          %v4958 = vlaneseq
          %v4959 = vshrl.u32 %v4958, 7
          %v4960 = vsub.s32 %v4957, %v4959
          %v4961 = vrot.slane %v4852, %v4960
          %vm4962 = vcmask 523712
          %v4963 = vsel %vm4962, %v4961, %v4956
          %v4964 = vadd.s32 %v4910, 4294967232
          %v4965 = vlaneseq
          %v4966 = vshrl.u32 %v4965, 7
          %v4967 = vsub.s32 %v4964, %v4966
          %v4968 = vrot.slane %v4853, %v4967
          %vm4969 = vcmask 589312
          %v4970 = vsel %vm4969, %v4968, %v4963
          %v4971 = vadd.s32 %v4910, 4294967224
          %v4972 = vlaneseq
          %v4973 = vshrl.u32 %v4972, 7
          %v4974 = vsub.s32 %v4971, %v4973
          %v4975 = vrot.slane %v4854, %v4974
          %vm4976 = vcmask 654912
          %v4977 = vsel %vm4976, %v4975, %v4970
          %v4978 = vadd.s32 %v4910, 4294967216
          %v4979 = vlaneseq
          %v4980 = vshrl.u32 %v4979, 7
          %v4981 = vsub.s32 %v4978, %v4980
          %v4982 = vrot.slane %v4855, %v4981
          %vm4983 = vcmask 720512
          %v4984 = vsel %vm4983, %v4982, %v4977
          %v4985 = vadd.s32 %v4910, 4294967208
          %v4986 = vlaneseq
          %v4987 = vshrl.u32 %v4986, 7
          %v4988 = vsub.s32 %v4985, %v4987
          %v4989 = vrot.slane %v4856, %v4988
          %vm4990 = vcmask 786112
          %v4991 = vsel %vm4990, %v4989, %v4984
          %v4992 = vadd.s32 %v4910, 4294967200
          %v4993 = vlaneseq
          %v4994 = vshrl.u32 %v4993, 7
          %v4995 = vsub.s32 %v4992, %v4994
          %v4996 = vrot.slane %v4857, %v4995
          %vm4997 = vcmask 851712
          %v4998 = vsel %vm4997, %v4996, %v4991
          %v4999 = vadd.s32 %v4910, 4294967192
          %v5000 = vlaneseq
          %v5001 = vshrl.u32 %v5000, 7
          %v5002 = vsub.s32 %v4999, %v5001
          %v5003 = vrot.slane %v4858, %v5002
          %vm5004 = vcmask 917312
          %v5005 = vsel %vm5004, %v5003, %v4998
          %v5006 = vadd.s32 %v4910, 4294967184
          %v5007 = vlaneseq
          %v5008 = vshrl.u32 %v5007, 7
          %v5009 = vsub.s32 %v5006, %v5008
          %v5010 = vrot.slane %v4859, %v5009
          %vm5011 = vcmask 982912
          %v5012 = vsel %vm5011, %v5010, %v5005
          %v5013 = vadd.s32 %v4910, 4294967176
          %v5014 = vlaneseq
          %v5015 = vshrl.u32 %v5014, 7
          %v5016 = vsub.s32 %v5013, %v5015
          %v5017 = vrot.slane %v4860, %v5016
          %vm5018 = vcmask 1048512
          %v5019 = vsel %vm5018, %v5017, %v5012
          %v5020 = vlaneseq
          %v5021 = vshrl.u32 %v5020, 7
          %v5022 = vsub.s32 %v4910, %v5021
          %v5023 = vrot.slane %v4861, %v5022
          %v5024 = vlaneseq
          %v5025 = vshrl.u32 %v5024, 7
          %v5026 = vsub.s32 %v4915, %v5025
          %v5027 = vrot.slane %v4862, %v5026
          %v5028 = vsel %vm4920, %v5027, %v5023
          %v5029 = vlaneseq
          %v5030 = vshrl.u32 %v5029, 7
          %v5031 = vsub.s32 %v4922, %v5030
          %v5032 = vrot.slane %v4863, %v5031
          %v5033 = vsel %vm4927, %v5032, %v5028
          %v5034 = vlaneseq
          %v5035 = vshrl.u32 %v5034, 7
          %v5036 = vsub.s32 %v4929, %v5035
          %v5037 = vrot.slane %v4864, %v5036
          %v5038 = vsel %vm4934, %v5037, %v5033
          %v5039 = vlaneseq
          %v5040 = vshrl.u32 %v5039, 7
          %v5041 = vsub.s32 %v4936, %v5040
          %v5042 = vrot.slane %v4865, %v5041
          %v5043 = vsel %vm4941, %v5042, %v5038
          %v5044 = vlaneseq
          %v5045 = vshrl.u32 %v5044, 7
          %v5046 = vsub.s32 %v4943, %v5045
          %v5047 = vrot.slane %v4866, %v5046
          %v5048 = vsel %vm4948, %v5047, %v5043
          %v5049 = vlaneseq
          %v5050 = vshrl.u32 %v5049, 7
          %v5051 = vsub.s32 %v4950, %v5050
          %v5052 = vrot.slane %v4867, %v5051
          %v5053 = vsel %vm4955, %v5052, %v5048
          %v5054 = vlaneseq
          %v5055 = vshrl.u32 %v5054, 7
          %v5056 = vsub.s32 %v4957, %v5055
          %v5057 = vrot.slane %v4868, %v5056
          %v5058 = vsel %vm4962, %v5057, %v5053
          %v5059 = vlaneseq
          %v5060 = vshrl.u32 %v5059, 7
          %v5061 = vsub.s32 %v4964, %v5060
          %v5062 = vrot.slane %v4869, %v5061
          %v5063 = vsel %vm4969, %v5062, %v5058
          %v5064 = vlaneseq
          %v5065 = vshrl.u32 %v5064, 7
          %v5066 = vsub.s32 %v4971, %v5065
          %v5067 = vrot.slane %v4870, %v5066
          %v5068 = vsel %vm4976, %v5067, %v5063
          %v5069 = vlaneseq
          %v5070 = vshrl.u32 %v5069, 7
          %v5071 = vsub.s32 %v4978, %v5070
          %v5072 = vrot.slane %v4871, %v5071
          %v5073 = vsel %vm4983, %v5072, %v5068
          %v5074 = vlaneseq
          %v5075 = vshrl.u32 %v5074, 7
          %v5076 = vsub.s32 %v4985, %v5075
          %v5077 = vrot.slane %v4872, %v5076
          %v5078 = vsel %vm4990, %v5077, %v5073
          %v5079 = vlaneseq
          %v5080 = vshrl.u32 %v5079, 7
          %v5081 = vsub.s32 %v4992, %v5080
          %v5082 = vrot.slane %v4873, %v5081
          %v5083 = vsel %vm4997, %v5082, %v5078
          %v5084 = vlaneseq
          %v5085 = vshrl.u32 %v5084, 7
          %v5086 = vsub.s32 %v4999, %v5085
          %v5087 = vrot.slane %v4874, %v5086
          %v5088 = vsel %vm5004, %v5087, %v5083
          %v5089 = vlaneseq
          %v5090 = vshrl.u32 %v5089, 7
          %v5091 = vsub.s32 %v5006, %v5090
          %v5092 = vrot.slane %v4875, %v5091
          %v5093 = vsel %vm5011, %v5092, %v5088
          %v5094 = vlaneseq
          %v5095 = vshrl.u32 %v5094, 7
          %v5096 = vsub.s32 %v5013, %v5095
          %v5097 = vrot.slane %v4876, %v5096
          %v5098 = vsel %vm5018, %v5097, %v5093
          %vm5099 = vcmask 1041409
          %v5100 = vsel %vm5099, %v5098, %v5019
          %5102 = vst [vmem:[%s694] sm:$0x3] %v5100
        $region134: #{decoder_forward.1} parent=105 // pred_fallthru
          _
        %s5103 = sand.u32 %s360, 1
        %s5104 = scalar_lea.sflag [#allocation12], %s5103
        %s5105 = sand.u32 %s360, 1
        %s5106 = smul.addr %s5105, 2
        %s5107 = scalar_lea.vmem [#allocation11], %s5106
        // Predicated region
        $region135: #{decoder_forward.1} parent=105 // pred_check
          %p5108 = pneg %p370
        $region136: #{decoder_forward.1} parent=105 // pred_check_branch
          %5110 = sbr.rel (%p5108) target = $region138
        $region137: #{decoder_forward.1} parent=105 // pred_region
          %s5112 = ssub.s32 32, 32
          %5113 = vsyncadd %s5104, %s5112
          %s5114 = smul.addr %s33, 32
          %s5115 = scalar_lea.hbm %s13, %s5114
          %s5117 = sshll.u32 %s5107, 4
          %s5118 = int_to_ptr.vmem [resolvable:$true] %s5117
          %5120 = dma.vmem_to_hbm [thread:$0]  %s5118, 32, %s5115, %s5104
        $region138: #{decoder_forward.1} parent=105 // pred_fallthru
          _
      $region106: #{decoder_forward.1} parent=5 // pred_fallthru
        _
      %p5121 = scmp.le.s32.totalorder 2, %s23
      // Predicated region
      $region139: #{decoder_forward.1} parent=5 // pred_check
        %p5122 = pneg %p5121
      $region140: #{decoder_forward.1} parent=5 // pred_check_branch
        %5124 = sbr.rel (%p5122) target = $region142
      $region141: #{decoder_forward.1} parent=5 // pred_region
        %s5125 = ssub.s32 %s23, 2
        // Predicated region
        $region143: #{decoder_forward.1} parent=141 // pred_check
          %p5126 = pneg %p376
        $region144: #{decoder_forward.1} parent=141 // pred_check_branch
          %5128 = sbr.rel (%p5126) target = $region146
        $region145: #{decoder_forward.1} parent=141 // pred_region
          %s5129 = sand.u32 %s361, 1
          %s5130 = scalar_lea.sflag [#allocation12], %s5129
          %s5131 = sand.u32 %s361, 1
          %s5132 = smul.addr %s5131, 2
          %s5133 = scalar_lea.vmem [#allocation11], %s5132
          %5134 = dma.done %s5130, 32
        $region146: #{decoder_forward.1} parent=141 // pred_fallthru
          _
      $region142: #{decoder_forward.1} parent=5 // pred_fallthru
        _
    $region6: #{decoder_forward.1} parent=1 // loop_footer
      %s27 = sadd.s32 1, %s23
    $region7: #{decoder_forward.1} parent=1 // loop_footer_branch
      %22 = sbr.rel target = $region3
    $region8: #{decoder_forward.1} parent=1 // loop_exit
      _
    %5135 = vsyncpa [#allocation12], 1
    %s5136 = scalar_lea.sflag [#allocation12], 1
    %5137 = vsyncpa %s5136, 1

</llo_original>
